<compile_context>
chip_gen: v7x
topology: tpu7x:2x2x1
jax: 0.10.0
libtpu: 0.0.40
codegen_flags: <defaults>
</compile_context>

<pallas_src>
import functools

import jax
import jax.numpy as jnp
from jax.experimental import pallas as pl
from jax.experimental.pallas import tpu as pltpu

EPS = 1e-5
LANE = 128
_VMEM_LIMIT = 40 * 1024 * 1024   # leaves headroom under v7x's 64 MiB physical VMEM


def _round_up(n, m):
    return ((n + m - 1) // m) * m


def _pad_axis(a, axis, target):
    pad = target - a.shape[axis]
    if pad <= 0:
        return a
    widths = [(0, 0)] * a.ndim
    widths[axis] = (0, pad)
    return jnp.pad(a, widths)


def _pick_tile(m, target=256):
    """Largest multiple-of-8 divisor of m that is <= target (clean tiles).
    Falls back to `target` with in-kernel tail masking if nothing divides.
    256-row tiles keep per-buffer VMEM ~1 MiB even at 2048 channels; raise for
    big M on v5e/v6e, halve if channel counts get large on v7x (64 MiB VMEM)."""
    if m <= target:
        return _round_up(m, 8)
    for t in range(target, 7, -8):
        if m % t == 0:
            return t
    return target


def _cparams():
    return pltpu.CompilerParams(
        dimension_semantics=("parallel",),          # both TensorCores on v7x
        vmem_limit_bytes=_VMEM_LIMIT)


# ---------------------------------------------------------------------------
# kernels
# ---------------------------------------------------------------------------
def matmul_stats_kernel(*refs, bn_relu_in, rows_total, tile_rows):
    """(optional bn+relu on the input) -> 1x1-conv matmul -> bf16 out + BN partials."""
    if bn_relu_in:
        x_ref, a_ref, w_ref, y_ref, st_ref = refs
        v = x_ref[...].astype(jnp.float32)
        v = jnp.maximum(v * a_ref[0:1, :] + a_ref[1:2, :], 0.0)
        v = v.astype(jnp.bfloat16)
    else:
        x_ref, w_ref, y_ref, st_ref = refs
        v = x_ref[...]                                     # already bf16
    y = jnp.dot(v, w_ref[...], preferred_element_type=jnp.float32)
    y_ref[...] = y.astype(y_ref.dtype)

    ys = y
    if rows_total % tile_rows != 0:                        # static: ragged tail only
        rid = (jax.lax.broadcasted_iota(jnp.int32, (tile_rows, 1), 0)
               + pl.program_id(0) * tile_rows)
        ys = jnp.where(rid < rows_total, y, 0.0)
    s = jnp.sum(ys, axis=0, keepdims=True)
    sq = jnp.sum(ys * ys, axis=0, keepdims=True)
    st_ref[...] = jnp.concatenate([s, sq], axis=0)[None, :, :]


def conv2_kernel(y1_ref, w2_ref, a1_ref, y2_ref, st_ref, ctr_ref, *, H, W):
    """bn1+relu -> 3x3 conv (stride 1, pad 1) on one image -> bf16 + BN partials."""
    HW = H * W
    PP = y1_ref.shape[-1]
    # BN1 apply + ReLU (f32)
    v = y1_ref[...].astype(jnp.float32)
    v = jnp.maximum(v * a1_ref[0:1, :] + a1_ref[1:2, :], 0.0)
    # dx taps: roll the flat (HW, PP) slab by +-1 sublane row (XLU slot, cheap)
    # and zero the wrapped W-boundary column; no misaligned halo-buffer stores.
    w_idx = jax.lax.broadcasted_iota(jnp.int32, (HW, 1), 0) % W
    left = jnp.where(w_idx == 0, 0.0, pltpu.roll(v, shift=1, axis=0))
    right = jnp.where(w_idx == W - 1, 0.0, pltpu.roll(v, shift=HW - 1, axis=0))
    # Halo scratch (bf16): (dx, cin) packed on the lane axis; one zero image-row
    # of dy-halo above and below.  All stores are lane-aligned (and, with
    # W % 8 == 0, sublane-aligned); halo rows are re-zeroed every step so the
    # kernel never depends on stale scratch (safe under megacore splitting).
    ctr_ref[pl.ds(0, W), :] = jnp.zeros((W, 3 * PP), jnp.bfloat16)
    ctr_ref[pl.ds(W + HW, W), :] = jnp.zeros((W, 3 * PP), jnp.bfloat16)
    ctr_ref[pl.ds(W, HW), 0:PP] = left.astype(jnp.bfloat16)
    ctr_ref[pl.ds(W, HW), PP:2 * PP] = v.astype(jnp.bfloat16)
    ctr_ref[pl.ds(W, HW), 2 * PP:3 * PP] = right.astype(jnp.bfloat16)
    # One MXU matmul per dy tap (K = 3*PP), f32 accumulation.
    acc = jnp.dot(ctr_ref[pl.ds(0, HW), :], w2_ref[0],
                  preferred_element_type=jnp.float32)            # taps row h-1
    acc = acc + jnp.dot(ctr_ref[pl.ds(W, HW), :], w2_ref[1],
                        preferred_element_type=jnp.float32)      # taps row h
    acc = acc + jnp.dot(ctr_ref[pl.ds(2 * W, HW), :], w2_ref[2],
                        preferred_element_type=jnp.float32)      # taps row h+1
    y2_ref[...] = acc.astype(y2_ref.dtype)
    s = jnp.sum(acc, axis=0, keepdims=True)
    sq = jnp.sum(acc * acc, axis=0, keepdims=True)
    st_ref[...] = jnp.concatenate([s, sq], axis=0)[None, :, :]


def finalize_kernel(y3_ref, x_ref, a3_ref, out_ref):
    """bn3 + identity residual + ReLU."""
    y = y3_ref[...].astype(jnp.float32) * a3_ref[0:1, :] + a3_ref[1:2, :]
    out_ref[...] = jnp.maximum(y + x_ref[...].astype(jnp.float32),
                               0.0).astype(out_ref.dtype)


# ---------------------------------------------------------------------------
# host-side glue
# ---------------------------------------------------------------------------
def _bn_scale_shift(stats, gamma, beta, count):
    """Reduce per-tile (sum, sum_sq) to a folded BN scale/shift (var clamped >= 0)."""
    s = jnp.sum(stats, axis=0)                       # (2, C)
    mean = s[0] / count
    var = jnp.maximum(s[1] / count - mean * mean, 0.0)
    scale = gamma * jax.lax.rsqrt(var + EPS)
    shift = beta - mean * scale
    return jnp.stack([scale, shift], axis=0)         # (2, C) f32


def prepack_params(params):
    """One-time weight packing (hoisted out of the per-call jitted forward):
    zero-pad channels to 128 lanes, cast weights to bf16, and repack conv2
    weights to (dy, dx*cin, cout) so the kernel runs one matmul per dy tap."""
    Cin, P = params["w1"].shape
    Cout = params["w3"].shape[1]
    assert Cin == Cout, "identity residual requires inplanes == 4*planes"
    CP = _round_up(Cin, LANE)
    PP = _round_up(P, LANE)
    # TODO(synk): for small-planes configs on v6e/v7x, pack two independent
    # 128-wide channel groups into 256-wide matmul slabs (MXU is 2x256^2).
    w1 = _pad_axis(_pad_axis(params["w1"], 0, CP), 1, PP).astype(jnp.bfloat16)
    w2 = _pad_axis(_pad_axis(params["w2"], 2, PP), 3, PP)            # (3,3,PP,PP)
    w2 = w2.reshape(3, 3 * PP, PP).astype(jnp.bfloat16)              # (dy, dx*cin, cout)
    w3 = _pad_axis(_pad_axis(params["w3"], 0, PP), 1, CP).astype(jnp.bfloat16)

    def vec(a, c):
        return _pad_axis(a.reshape(-1).astype(jnp.float32), 0, c)

    return dict(w1=w1, w2=w2, w3=w3,
                g1=vec(params["g1"], PP), b1=vec(params["b1"], PP),
                g2=vec(params["g2"], PP), b2=vec(params["b2"], PP),
                g3=vec(params["g3"], CP), b3=vec(params["b3"], CP))


@jax.jit
def bottleneck_forward(x_nchw, packed):
    N, Cin, H, W = x_nchw.shape
    CP, PP = packed["w1"].shape
    M, HW = N * H * W, H * W
    assert HW % 8 == 0, "per-image row block must be a multiple of 8 sublanes"

    # NCHW -> lane-padded flat NHWC in bf16 (halves x's HBM traffic; the conv1
    # matmul consumes bf16 anyway).  TODO(synk): in a multi-block network keep
    # activations in this layout across blocks so these transposes happen once.
    x = jnp.transpose(x_nchw, (0, 2, 3, 1)).astype(jnp.bfloat16)
    x = _pad_axis(x, 3, CP).reshape(M, CP)

    TM = _pick_tile(M)
    T = (M + TM - 1) // TM

    # ---- kernel A: conv1 (1x1) + BN1 partial stats, tiled over M -----------
    y1, st1 = pl.pallas_call(
        functools.partial(matmul_stats_kernel, bn_relu_in=False,
                          rows_total=M, tile_rows=TM),
        grid=(T,),
        in_specs=[pl.BlockSpec((TM, CP), lambda i: (i, 0)),
                  pl.BlockSpec((CP, PP), lambda i: (0, 0))],
        out_specs=(pl.BlockSpec((TM, PP), lambda i: (i, 0)),
                   pl.BlockSpec((1, 2, PP), lambda i: (i, 0, 0))),
        out_shape=(jax.ShapeDtypeStruct((M, PP), jnp.bfloat16),
                   jax.ShapeDtypeStruct((T, 2, PP), jnp.float32)),
        compiler_params=_cparams(),
    )(x, packed["w1"])
    a1 = _bn_scale_shift(st1, packed["g1"], packed["b1"], M)

    # ---- kernel B: bn1+relu + conv2 (3x3), one image per grid step ---------
    # TODO(synk): for large spatial sizes, tile over H-row blocks with an
    # explicit halo DMA instead of one whole image per step.
    y2, st2 = pl.pallas_call(
        functools.partial(conv2_kernel, H=H, W=W),
        grid=(N,),
        in_specs=[pl.BlockSpec((HW, PP), lambda n: (n, 0)),
                  pl.BlockSpec((3, 3 * PP, PP), lambda n: (0, 0, 0)),
                  pl.BlockSpec((2, PP), lambda n: (0, 0))],
        out_specs=(pl.BlockSpec((HW, PP), lambda n: (n, 0)),
                   pl.BlockSpec((1, 2, PP), lambda n: (n, 0, 0))),
        out_shape=(jax.ShapeDtypeStruct((M, PP), jnp.bfloat16),
                   jax.ShapeDtypeStruct((N, 2, PP), jnp.float32)),
        scratch_shapes=[pltpu.VMEM(((H + 2) * W, 3 * PP), jnp.bfloat16)],
        compiler_params=_cparams(),
    )(y1, packed["w2"], a1)
    a2 = _bn_scale_shift(st2, packed["g2"], packed["b2"], M)

    # ---- kernel C: bn2+relu + conv3 (1x1) + BN3 partial stats, tiled over M
    y3, st3 = pl.pallas_call(
        functools.partial(matmul_stats_kernel, bn_relu_in=True,
                          rows_total=M, tile_rows=TM),
        grid=(T,),
        in_specs=[pl.BlockSpec((TM, PP), lambda i: (i, 0)),
                  pl.BlockSpec((2, PP), lambda i: (0, 0)),
                  pl.BlockSpec((PP, CP), lambda i: (0, 0))],
        out_specs=(pl.BlockSpec((TM, CP), lambda i: (i, 0)),
                   pl.BlockSpec((1, 2, CP), lambda i: (i, 0, 0))),
        out_shape=(jax.ShapeDtypeStruct((M, CP), jnp.bfloat16),
                   jax.ShapeDtypeStruct((T, 2, CP), jnp.float32)),
        compiler_params=_cparams(),
    )(y2, a2, packed["w3"])
    a3 = _bn_scale_shift(st3, packed["g3"], packed["b3"], M)

    # ---- kernel D: bn3 + identity residual + relu, tiled over M -------------
    out_flat = pl.pallas_call(
        finalize_kernel,
        grid=(T,),
        in_specs=[pl.BlockSpec((TM, CP), lambda i: (i, 0)),
                  pl.BlockSpec((TM, CP), lambda i: (i, 0)),
                  pl.BlockSpec((2, CP), lambda i: (0, 0))],
        out_specs=pl.BlockSpec((TM, CP), lambda i: (i, 0)),
        out_shape=jax.ShapeDtypeStruct((M, CP), jnp.float32),
        compiler_params=_cparams(),
    )(y3, x, a3)

    out = out_flat.reshape(N, H, W, CP)[:, :, :, :Cin]
    return jnp.transpose(out, (0, 3, 1, 2))              # NHWC -> NCHW


# ---------------------------------------------------------------------------
# test harness
# ---------------------------------------------------------------------------
def make_params(key, inplanes, planes):
    ks = jax.random.split(key, 9)
    w1 = jax.random.normal(ks[0], (inplanes, planes), jnp.float32) * (2.0 / inplanes) ** 0.5
    w2 = jax.random.normal(ks[1], (3, 3, planes, planes), jnp.float32) * (2.0 / (9 * planes)) ** 0.5
    w3 = jax.random.normal(ks[2], (planes, planes * 4), jnp.float32) * (2.0 / planes) ** 0.5
    g1 = 0.5 + jax.random.uniform(ks[3], (1, planes), jnp.float32)
    b1 = 0.1 * jax.random.normal(ks[4], (1, planes), jnp.float32)
    g2 = 0.5 + jax.random.uniform(ks[5], (1, planes), jnp.float32)
    b2 = 0.1 * jax.random.normal(ks[6], (1, planes), jnp.float32)
    g3 = 0.5 + jax.random.uniform(ks[7], (1, planes * 4), jnp.float32)
    b3 = 0.1 * jax.random.normal(ks[8], (1, planes * 4), jnp.float32)
    return dict(w1=w1, w2=w2, w3=w3, g1=g1, b1=b1, g2=g2, b2=b2, g3=g3, b3=b3)


def reference_forward(x_nchw, params):
    """Pure-JAX (lax.conv, f32) reference matching the PyTorch forward."""
    def bn(y, g, b):
        mean = jnp.mean(y, axis=(0, 2, 3), keepdims=True)
        var = jnp.mean((y - mean) ** 2, axis=(0, 2, 3), keepdims=True)
        return ((y - mean) * jax.lax.rsqrt(var + EPS)
                * g[None, :, None, None] + b[None, :, None, None])

    dn = ("NCHW", "OIHW", "NCHW")
    w1 = jnp.transpose(params["w1"], (1, 0))[:, :, None, None]     # (P, Cin, 1, 1)
    w2 = jnp.transpose(params["w2"], (3, 2, 0, 1))                 # (P, P, 3, 3)
    w3 = jnp.transpose(params["w3"], (1, 0))[:, :, None, None]     # (4P, P, 1, 1)

    out = jax.lax.conv_general_dilated(x_nchw, w1, (1, 1), "VALID", dimension_numbers=dn)
    out = jnp.maximum(bn(out, params["g1"][0], params["b1"][0]), 0.0)
    out = jax.lax.conv_general_dilated(out, w2, (1, 1), [(1, 1), (1, 1)], dimension_numbers=dn)
    out = jnp.maximum(bn(out, params["g2"][0], params["b2"][0]), 0.0)
    out = jax.lax.conv_general_dilated(out, w3, (1, 1), "VALID", dimension_numbers=dn)
    out = bn(out, params["g3"][0], params["b3"][0])
    return jnp.maximum(out + x_nchw, 0.0)


if __name__ == "__main__":
    planes = 8
    inplanes = planes * 4          # downsample=None => identity residual
    N, H, W = 2, 16, 16

    key = jax.random.PRNGKey(0)
    kx, kp = jax.random.split(key)
    x = jax.random.normal(kx, (N, inplanes, H, W), jnp.float32)   # NCHW like PyTorch
    params = make_params(kp, inplanes, planes)
    packed = prepack_params(params)                               # one-time pre-pack

    out = jax.block_until_ready(bottleneck_forward(x, packed))
    ref = jax.block_until_ready(reference_forward(x, params))

    assert out.shape == (N, inplanes, H, W)
    max_err = float(jnp.max(jnp.abs(out - ref)))
    # bf16 activations / matmul operands (f32 accumulation & BN statistics)
    # => a few x bf16-eps drift vs the f32 reference on O(1) activations.
    assert jnp.allclose(out, ref, rtol=3e-2, atol=6e-2), max_err

    print("KERNEL_OK")
</pallas_src>

<mosaic_0001>
module attributes {stable_mosaic.version = 11 : i64} {
  func.func @matmul_stats_kernel(%arg0: i32, %arg1: memref<256x128xbf16, #tpu.memory_space<vmem>>, %arg2: memref<128x128xbf16, #tpu.memory_space<vmem>>, %arg3: memref<256x128xbf16, #tpu.memory_space<vmem>>, %arg4: memref<1x2x128xf32, #tpu.memory_space<vmem>>) attributes {dimension_semantics = [#tpu.dimension_semantics<parallel>], iteration_bounds = array<i64: 2>, scalar_prefetch = 0 : i64, scratch_operands = 0 : i64, tpu.core_type = #tpu.core_type<tc>, window_params = [{transform_indices = @transform_0, window_bounds = array<i64: 256, 128>}, {pipeline_mode = #tpu.pipeline_mode<synchronous>, transform_indices = @transform_1, window_bounds = array<i64: 128, 128>}, {transform_indices = @transform_2, window_bounds = array<i64: 256, 128>}, {transform_indices = @transform_3, window_bounds = array<i64: 1, 2, 128>}]} {
    %c0 = arith.constant 0 : index
    %c0_0 = arith.constant 0 : index
    %0 = vector.load %arg1[%c0, %c0_0] : memref<256x128xbf16, #tpu.memory_space<vmem>>, vector<256x128xbf16>
    %c0_1 = arith.constant 0 : index
    %c0_2 = arith.constant 0 : index
    %1 = vector.load %arg2[%c0_1, %c0_2] : memref<128x128xbf16, #tpu.memory_space<vmem>>, vector<128x128xbf16>
    %cst = arith.constant dense<0.000000e+00> : vector<256x128xf32>
    %2 = tpu.matmul %0, %1, %cst {dimension_numbers = #tpu.dot_dimension_numbers<[1], [0], [0], [1], [0, 0, 1, 1], [], []>} : vector<256x128xbf16>, vector<128x128xbf16>, vector<256x128xf32> -> vector<256x128xf32>
    %3 = arith.truncf %2 : vector<256x128xf32> to vector<256x128xbf16>
    %c0_3 = arith.constant 0 : index
    %c0_4 = arith.constant 0 : index
    %4 = vector.load %arg3[%c0_3, %c0_4] : memref<256x128xbf16, #tpu.memory_space<vmem>>, vector<256x128xbf16>
    tpu.vector_store %arg3[%c0_3, %c0_4], %3 {strides = array<i32>} : memref<256x128xbf16, #tpu.memory_space<vmem>>, vector<256x128xbf16>,
    %cst_5 = arith.constant dense<0.000000e+00> : vector<128xf32>
    %5 = vector.multi_reduction <add>, %2, %cst_5 [0] : vector<256x128xf32> to vector<128xf32>
    %6 = vector.shape_cast %5 : vector<128xf32> to vector<1x128xf32>
    %7 = arith.mulf %2, %2 : vector<256x128xf32>
    %cst_6 = arith.constant dense<0.000000e+00> : vector<128xf32>
    %8 = vector.multi_reduction <add>, %7, %cst_6 [0] : vector<256x128xf32> to vector<128xf32>
    %9 = vector.shape_cast %8 : vector<128xf32> to vector<1x128xf32>
    %10 = tpu.concatenate %6, %9 in 0 : vector<1x128xf32>, vector<1x128xf32> -> vector<2x128xf32>
    %11 = vector.shape_cast %10 : vector<2x128xf32> to vector<1x2x128xf32>
    %c0_7 = arith.constant 0 : index
    %c0_8 = arith.constant 0 : index
    %c0_9 = arith.constant 0 : index
    %12 = vector.load %arg4[%c0_7, %c0_8, %c0_9] : memref<1x2x128xf32, #tpu.memory_space<vmem>>, vector<1x2x128xf32>
    tpu.vector_store %arg4[%c0_7, %c0_8, %c0_9], %11 {strides = array<i32>} : memref<1x2x128xf32, #tpu.memory_space<vmem>>, vector<1x2x128xf32>,
    return
  }
  func.func @transform_0(%arg0: i32) -> (i32, i32) {
    %c0_i32 = arith.constant 0 : i32
    %c0_i32_0 = arith.constant 0 : i32
    return %arg0, %c0_i32 : i32, i32
  }
  func.func @transform_1(%arg0: i32) -> (i32, i32) {
    %c0_i32 = arith.constant 0 : i32
    %c0_i32_0 = arith.constant 0 : i32
    %c0_i32_1 = arith.constant 0 : i32
    return %c0_i32, %c0_i32_0 : i32, i32
  }
  func.func @transform_2(%arg0: i32) -> (i32, i32) {
    %c0_i32 = arith.constant 0 : i32
    %c0_i32_0 = arith.constant 0 : i32
    return %arg0, %c0_i32 : i32, i32
  }
  func.func @transform_3(%arg0: i32) -> (i32, i32, i32) {
    %c0_i32 = arith.constant 0 : i32
    %c0_i32_0 = arith.constant 0 : i32
    %c0_i32_1 = arith.constant 0 : i32
    return %arg0, %c0_i32, %c0_i32_0 : i32, i32, i32
  }
}

module attributes {stable_mosaic.version = 11 : i64} {
  func.func @finalize_kernel(%arg0: i32, %arg1: memref<256x128xbf16, #tpu.memory_space<vmem>>, %arg2: memref<256x128xbf16, #tpu.memory_space<vmem>>, %arg3: memref<2x128xf32, #tpu.memory_space<vmem>>, %arg4: memref<256x128xf32, #tpu.memory_space<vmem>>) attributes {dimension_semantics = [#tpu.dimension_semantics<parallel>], iteration_bounds = array<i64: 2>, scalar_prefetch = 0 : i64, scratch_operands = 0 : i64, tpu.core_type = #tpu.core_type<tc>, window_params = [{transform_indices = @transform_0, window_bounds = array<i64: 256, 128>}, {transform_indices = @transform_1, window_bounds = array<i64: 256, 128>}, {pipeline_mode = #tpu.pipeline_mode<synchronous>, transform_indices = @transform_2, window_bounds = array<i64: 2, 128>}, {transform_indices = @transform_3, window_bounds = array<i64: 256, 128>}]} {
    %c0 = arith.constant 0 : index
    %c0_0 = arith.constant 0 : index
    %0 = vector.load %arg1[%c0, %c0_0] : memref<256x128xbf16, #tpu.memory_space<vmem>>, vector<256x128xbf16>
    %1 = arith.extf %0 : vector<256x128xbf16> to vector<256x128xf32>
    %c0_1 = arith.constant 0 : index
    %c0_2 = arith.constant 0 : index
    %2 = vector.load %arg3[%c0_1, %c0_2] : memref<2x128xf32, #tpu.memory_space<vmem>>, vector<1x128xf32>
    %3 = vector.broadcast %2 : vector<1x128xf32> to vector<256x128xf32>
    %4 = arith.mulf %1, %3 : vector<256x128xf32>
    %c1 = arith.constant 1 : index
    %c0_3 = arith.constant 0 : index
    %5 = vector.load %arg3[%c1, %c0_3] : memref<2x128xf32, #tpu.memory_space<vmem>>, vector<1x128xf32>
    %6 = vector.broadcast %5 : vector<1x128xf32> to vector<256x128xf32>
    %7 = arith.addf %4, %6 : vector<256x128xf32>
    %c0_4 = arith.constant 0 : index
    %c0_5 = arith.constant 0 : index
    %8 = vector.load %arg2[%c0_4, %c0_5] : memref<256x128xbf16, #tpu.memory_space<vmem>>, vector<256x128xbf16>
    %9 = arith.extf %8 : vector<256x128xbf16> to vector<256x128xf32>
    %10 = arith.addf %7, %9 : vector<256x128xf32>
    %cst = arith.constant 0.000000e+00 : f32
    %11 = vector.broadcast %cst : f32 to vector<256x128xf32>
    %12 = arith.maximumf %10, %11 : vector<256x128xf32>
    %c0_6 = arith.constant 0 : index
    %c0_7 = arith.constant 0 : index
    %13 = vector.load %arg4[%c0_6, %c0_7] : memref<256x128xf32, #tpu.memory_space<vmem>>, vector<256x128xf32>
    tpu.vector_store %arg4[%c0_6, %c0_7], %12 {strides = array<i32>} : memref<256x128xf32, #tpu.memory_space<vmem>>, vector<256x128xf32>,
    return
  }
  func.func @transform_0(%arg0: i32) -> (i32, i32) {
    %c0_i32 = arith.constant 0 : i32
    %c0_i32_0 = arith.constant 0 : i32
    return %arg0, %c0_i32 : i32, i32
  }
  func.func @transform_1(%arg0: i32) -> (i32, i32) {
    %c0_i32 = arith.constant 0 : i32
    %c0_i32_0 = arith.constant 0 : i32
    return %arg0, %c0_i32 : i32, i32
  }
  func.func @transform_2(%arg0: i32) -> (i32, i32) {
    %c0_i32 = arith.constant 0 : i32
    %c0_i32_0 = arith.constant 0 : i32
    %c0_i32_1 = arith.constant 0 : i32
    return %c0_i32, %c0_i32_0 : i32, i32
  }
  func.func @transform_3(%arg0: i32) -> (i32, i32) {
    %c0_i32 = arith.constant 0 : i32
    %c0_i32_0 = arith.constant 0 : i32
    return %arg0, %c0_i32 : i32, i32
  }
}

module attributes {stable_mosaic.version = 11 : i64} {
  func.func @conv2_kernel(%arg0: i32, %arg1: memref<256x128xbf16, #tpu.memory_space<vmem>>, %arg2: memref<3x384x128xbf16, #tpu.memory_space<vmem>>, %arg3: memref<2x128xf32, #tpu.memory_space<vmem>>, %arg4: memref<256x128xbf16, #tpu.memory_space<vmem>>, %arg5: memref<1x2x128xf32, #tpu.memory_space<vmem>>, %arg6: memref<288x384xbf16, #tpu.memory_space<vmem>>) attributes {dimension_semantics = [#tpu.dimension_semantics<parallel>], iteration_bounds = array<i64: 2>, scalar_prefetch = 0 : i64, scratch_operands = 1 : i64, tpu.core_type = #tpu.core_type<tc>, window_params = [{transform_indices = @transform_0, window_bounds = array<i64: 256, 128>}, {pipeline_mode = #tpu.pipeline_mode<synchronous>, transform_indices = @transform_1, window_bounds = array<i64: 3, 384, 128>}, {pipeline_mode = #tpu.pipeline_mode<synchronous>, transform_indices = @transform_2, window_bounds = array<i64: 2, 128>}, {transform_indices = @transform_3, window_bounds = array<i64: 256, 128>}, {transform_indices = @transform_4, window_bounds = array<i64: 1, 2, 128>}]} {
    %c0 = arith.constant 0 : index
    %c0_0 = arith.constant 0 : index
    %0 = vector.load %arg1[%c0, %c0_0] : memref<256x128xbf16, #tpu.memory_space<vmem>>, vector<256x128xbf16>
    %1 = arith.extf %0 : vector<256x128xbf16> to vector<256x128xf32>
    %c0_1 = arith.constant 0 : index
    %c0_2 = arith.constant 0 : index
    %2 = vector.load %arg3[%c0_1, %c0_2] : memref<2x128xf32, #tpu.memory_space<vmem>>, vector<1x128xf32>
    %3 = vector.broadcast %2 : vector<1x128xf32> to vector<256x128xf32>
    %4 = arith.mulf %1, %3 : vector<256x128xf32>
    %c1 = arith.constant 1 : index
    %c0_3 = arith.constant 0 : index
    %5 = vector.load %arg3[%c1, %c0_3] : memref<2x128xf32, #tpu.memory_space<vmem>>, vector<1x128xf32>
    %6 = vector.broadcast %5 : vector<1x128xf32> to vector<256x128xf32>
    %7 = arith.addf %4, %6 : vector<256x128xf32>
    %cst = arith.constant 0.000000e+00 : f32
    %8 = vector.broadcast %cst : f32 to vector<256x128xf32>
    %9 = arith.maximumf %7, %8 : vector<256x128xf32>
    %10 = tpu.iota {dimensions = array<i32: 0>} : vector<256x1xi32>
    %c16_i32 = arith.constant 16 : i32
    %c0_i32 = arith.constant 0 : i32
    %11 = arith.cmpi eq, %c16_i32, %c0_i32 : i32
    %c1_i32 = arith.constant 1 : i32
    %12 = arith.select %11, %c1_i32, %c16_i32 : i32
    %13 = vector.broadcast %12 : i32 to vector<256x1xi32>
    %14 = arith.remsi %10, %13 : vector<256x1xi32>
    %c0_i32_4 = arith.constant 0 : i32
    %15 = vector.broadcast %c0_i32_4 : i32 to vector<256x1xi32>
    %16 = arith.cmpi ne, %14, %15 : vector<256x1xi32>
    %c0_i32_5 = arith.constant 0 : i32
    %17 = vector.broadcast %c0_i32_5 : i32 to vector<256x1xi32>
    %18 = arith.cmpi slt, %14, %17 : vector<256x1xi32>
    %c0_i32_6 = arith.constant 0 : i32
    %19 = arith.cmpi slt, %12, %c0_i32_6 : i32
    %20 = vector.broadcast %19 : i1 to vector<256x1xi1>
    %21 = vector.broadcast %20 : vector<256x1xi1> to vector<256x1xi1>
    %22 = arith.xori %18, %21 : vector<256x1xi1>
    %23 = arith.andi %22, %16 : vector<256x1xi1>
    %24 = vector.broadcast %12 : i32 to vector<256x1xi32>
    %25 = arith.addi %14, %24 : vector<256x1xi32>
    %26 = arith.select %23, %25, %14 : vector<256x1xi1>, vector<256x1xi32>
    %c0_i32_7 = arith.constant 0 : i32
    %27 = vector.broadcast %c0_i32_7 : i32 to vector<256x1xi32>
    %28 = arith.cmpi eq, %26, %27 : vector<256x1xi32>
    %c1_i32_8 = arith.constant 1 : i32
    %29 = tpu.dynamic_rotate %9 by %c1_i32_8 dim 0 : vector<256x128xf32>, i32 -> vector<256x128xf32>
    %cst_9 = arith.constant 0.000000e+00 : f32
    %30 = vector.shape_cast %28 : vector<256x1xi1> to vector<256x1xi1>
    %31 = vector.broadcast %30 : vector<256x1xi1> to vector<256x128xi1>
    %32 = vector.broadcast %cst_9 : f32 to vector<256x128xf32>
    %33 = arith.select %31, %32, %29 : vector<256x128xi1>, vector<256x128xf32>
    %c15_i32 = arith.constant 15 : i32
    %34 = vector.broadcast %c15_i32 : i32 to vector<256x1xi32>
    %35 = arith.cmpi eq, %26, %34 : vector<256x1xi32>
    %c255_i32 = arith.constant 255 : i32
    %36 = tpu.dynamic_rotate %9 by %c255_i32 dim 0 : vector<256x128xf32>, i32 -> vector<256x128xf32>
    %cst_10 = arith.constant 0.000000e+00 : f32
    %37 = vector.shape_cast %35 : vector<256x1xi1> to vector<256x1xi1>
    %38 = vector.broadcast %37 : vector<256x1xi1> to vector<256x128xi1>
    %39 = vector.broadcast %cst_10 : f32 to vector<256x128xf32>
    %40 = arith.select %38, %39, %36 : vector<256x128xi1>, vector<256x128xf32>
    %cst_11 = arith.constant 0.000000e+00 : bf16
    %41 = vector.broadcast %cst_11 : bf16 to vector<16x384xbf16>
    %c0_12 = arith.constant 0 : index
    %c0_13 = arith.constant 0 : index
    %42 = vector.load %arg6[%c0_12, %c0_13] : memref<288x384xbf16, #tpu.memory_space<vmem>>, vector<16x384xbf16>
    tpu.vector_store %arg6[%c0_12, %c0_13], %41 {strides = array<i32>} : memref<288x384xbf16, #tpu.memory_space<vmem>>, vector<16x384xbf16>,
    %cst_14 = arith.constant 0.000000e+00 : bf16
    %43 = vector.broadcast %cst_14 : bf16 to vector<16x384xbf16>
    %c272 = arith.constant 272 : index
    %c0_15 = arith.constant 0 : index
    %44 = vector.load %arg6[%c272, %c0_15] : memref<288x384xbf16, #tpu.memory_space<vmem>>, vector<16x384xbf16>
    tpu.vector_store %arg6[%c272, %c0_15], %43 {strides = array<i32>} : memref<288x384xbf16, #tpu.memory_space<vmem>>, vector<16x384xbf16>,
    %45 = arith.truncf %33 : vector<256x128xf32> to vector<256x128xbf16>
    %c16 = arith.constant 16 : index
    %c0_16 = arith.constant 0 : index
    %46 = vector.load %arg6[%c16, %c0_16] : memref<288x384xbf16, #tpu.memory_space<vmem>>, vector<256x128xbf16>
    tpu.vector_store %arg6[%c16, %c0_16], %45 {strides = array<i32>} : memref<288x384xbf16, #tpu.memory_space<vmem>>, vector<256x128xbf16>,
    %47 = arith.truncf %9 : vector<256x128xf32> to vector<256x128xbf16>
    %c16_17 = arith.constant 16 : index
    %c128 = arith.constant 128 : index
    %48 = vector.load %arg6[%c16_17, %c128] : memref<288x384xbf16, #tpu.memory_space<vmem>>, vector<256x128xbf16>
    tpu.vector_store %arg6[%c16_17, %c128], %47 {strides = array<i32>} : memref<288x384xbf16, #tpu.memory_space<vmem>>, vector<256x128xbf16>,
    %49 = arith.truncf %40 : vector<256x128xf32> to vector<256x128xbf16>
    %c16_18 = arith.constant 16 : index
    %c256 = arith.constant 256 : index
    %50 = vector.load %arg6[%c16_18, %c256] : memref<288x384xbf16, #tpu.memory_space<vmem>>, vector<256x128xbf16>
    tpu.vector_store %arg6[%c16_18, %c256], %49 {strides = array<i32>} : memref<288x384xbf16, #tpu.memory_space<vmem>>, vector<256x128xbf16>,
    %c0_19 = arith.constant 0 : index
    %c0_20 = arith.constant 0 : index
    %51 = vector.load %arg6[%c0_19, %c0_20] : memref<288x384xbf16, #tpu.memory_space<vmem>>, vector<256x384xbf16>
    %c0_21 = arith.constant 0 : index
    %c0_22 = arith.constant 0 : index
    %c0_23 = arith.constant 0 : index
    %52 = vector.load %arg2[%c0_21, %c0_22, %c0_23] : memref<3x384x128xbf16, #tpu.memory_space<vmem>>, vector<1x384x128xbf16>
    %53 = vector.shape_cast %52 : vector<1x384x128xbf16> to vector<384x128xbf16>
    %cst_24 = arith.constant dense<0.000000e+00> : vector<256x128xf32>
    %54 = tpu.matmul %51, %53, %cst_24 {dimension_numbers = #tpu.dot_dimension_numbers<[1], [0], [0], [1], [0, 0, 1, 1], [], []>} : vector<256x384xbf16>, vector<384x128xbf16>, vector<256x128xf32> -> vector<256x128xf32>
    %c16_25 = arith.constant 16 : index
    %c0_26 = arith.constant 0 : index
    %55 = vector.load %arg6[%c16_25, %c0_26] : memref<288x384xbf16, #tpu.memory_space<vmem>>, vector<256x384xbf16>
    %c1_27 = arith.constant 1 : index
    %c0_28 = arith.constant 0 : index
    %c0_29 = arith.constant 0 : index
    %56 = vector.load %arg2[%c1_27, %c0_28, %c0_29] : memref<3x384x128xbf16, #tpu.memory_space<vmem>>, vector<1x384x128xbf16>
    %57 = vector.shape_cast %56 : vector<1x384x128xbf16> to vector<384x128xbf16>
    %cst_30 = arith.constant dense<0.000000e+00> : vector<256x128xf32>
    %58 = tpu.matmul %55, %57, %cst_30 {dimension_numbers = #tpu.dot_dimension_numbers<[1], [0], [0], [1], [0, 0, 1, 1], [], []>} : vector<256x384xbf16>, vector<384x128xbf16>, vector<256x128xf32> -> vector<256x128xf32>
    %59 = arith.addf %54, %58 : vector<256x128xf32>
    %c32 = arith.constant 32 : index
    %c0_31 = arith.constant 0 : index
    %60 = vector.load %arg6[%c32, %c0_31] : memref<288x384xbf16, #tpu.memory_space<vmem>>, vector<256x384xbf16>
    %c2 = arith.constant 2 : index
    %c0_32 = arith.constant 0 : index
    %c0_33 = arith.constant 0 : index
    %61 = vector.load %arg2[%c2, %c0_32, %c0_33] : memref<3x384x128xbf16, #tpu.memory_space<vmem>>, vector<1x384x128xbf16>
    %62 = vector.shape_cast %61 : vector<1x384x128xbf16> to vector<384x128xbf16>
    %cst_34 = arith.constant dense<0.000000e+00> : vector<256x128xf32>
    %63 = tpu.matmul %60, %62, %cst_34 {dimension_numbers = #tpu.dot_dimension_numbers<[1], [0], [0], [1], [0, 0, 1, 1], [], []>} : vector<256x384xbf16>, vector<384x128xbf16>, vector<256x128xf32> -> vector<256x128xf32>
    %64 = arith.addf %59, %63 : vector<256x128xf32>
    %65 = arith.truncf %64 : vector<256x128xf32> to vector<256x128xbf16>
    %c0_35 = arith.constant 0 : index
    %c0_36 = arith.constant 0 : index
    %66 = vector.load %arg4[%c0_35, %c0_36] : memref<256x128xbf16, #tpu.memory_space<vmem>>, vector<256x128xbf16>
    tpu.vector_store %arg4[%c0_35, %c0_36], %65 {strides = array<i32>} : memref<256x128xbf16, #tpu.memory_space<vmem>>, vector<256x128xbf16>,
    %cst_37 = arith.constant dense<0.000000e+00> : vector<128xf32>
    %67 = vector.multi_reduction <add>, %64, %cst_37 [0] : vector<256x128xf32> to vector<128xf32>
    %68 = vector.shape_cast %67 : vector<128xf32> to vector<1x128xf32>
    %69 = arith.mulf %64, %64 : vector<256x128xf32>
    %cst_38 = arith.constant dense<0.000000e+00> : vector<128xf32>
    %70 = vector.multi_reduction <add>, %69, %cst_38 [0] : vector<256x128xf32> to vector<128xf32>
    %71 = vector.shape_cast %70 : vector<128xf32> to vector<1x128xf32>
    %72 = tpu.concatenate %68, %71 in 0 : vector<1x128xf32>, vector<1x128xf32> -> vector<2x128xf32>
    %73 = vector.shape_cast %72 : vector<2x128xf32> to vector<1x2x128xf32>
    %c0_39 = arith.constant 0 : index
    %c0_40 = arith.constant 0 : index
    %c0_41 = arith.constant 0 : index
    %74 = vector.load %arg5[%c0_39, %c0_40, %c0_41] : memref<1x2x128xf32, #tpu.memory_space<vmem>>, vector<1x2x128xf32>
    tpu.vector_store %arg5[%c0_39, %c0_40, %c0_41], %73 {strides = array<i32>} : memref<1x2x128xf32, #tpu.memory_space<vmem>>, vector<1x2x128xf32>,
    return
  }
  func.func @transform_0(%arg0: i32) -> (i32, i32) {
    %c0_i32 = arith.constant 0 : i32
    %c0_i32_0 = arith.constant 0 : i32
    return %arg0, %c0_i32 : i32, i32
  }
  func.func @transform_1(%arg0: i32) -> (i32, i32, i32) {
    %c0_i32 = arith.constant 0 : i32
    %c0_i32_0 = arith.constant 0 : i32
    %c0_i32_1 = arith.constant 0 : i32
    %c0_i32_2 = arith.constant 0 : i32
    return %c0_i32, %c0_i32_0, %c0_i32_1 : i32, i32, i32
  }
  func.func @transform_2(%arg0: i32) -> (i32, i32) {
    %c0_i32 = arith.constant 0 : i32
    %c0_i32_0 = arith.constant 0 : i32
    %c0_i32_1 = arith.constant 0 : i32
    return %c0_i32, %c0_i32_0 : i32, i32
  }
  func.func @transform_3(%arg0: i32) -> (i32, i32) {
    %c0_i32 = arith.constant 0 : i32
    %c0_i32_0 = arith.constant 0 : i32
    return %arg0, %c0_i32 : i32, i32
  }
  func.func @transform_4(%arg0: i32) -> (i32, i32, i32) {
    %c0_i32 = arith.constant 0 : i32
    %c0_i32_0 = arith.constant 0 : i32
    %c0_i32_1 = arith.constant 0 : i32
    return %arg0, %c0_i32, %c0_i32_0 : i32, i32, i32
  }
}

module attributes {stable_mosaic.version = 11 : i64} {
  func.func @matmul_stats_kernel(%arg0: i32, %arg1: memref<256x128xbf16, #tpu.memory_space<vmem>>, %arg2: memref<2x128xf32, #tpu.memory_space<vmem>>, %arg3: memref<128x128xbf16, #tpu.memory_space<vmem>>, %arg4: memref<256x128xbf16, #tpu.memory_space<vmem>>, %arg5: memref<1x2x128xf32, #tpu.memory_space<vmem>>) attributes {dimension_semantics = [#tpu.dimension_semantics<parallel>], iteration_bounds = array<i64: 2>, scalar_prefetch = 0 : i64, scratch_operands = 0 : i64, tpu.core_type = #tpu.core_type<tc>, window_params = [{transform_indices = @transform_0, window_bounds = array<i64: 256, 128>}, {pipeline_mode = #tpu.pipeline_mode<synchronous>, transform_indices = @transform_1, window_bounds = array<i64: 2, 128>}, {pipeline_mode = #tpu.pipeline_mode<synchronous>, transform_indices = @transform_2, window_bounds = array<i64: 128, 128>}, {transform_indices = @transform_3, window_bounds = array<i64: 256, 128>}, {transform_indices = @transform_4, window_bounds = array<i64: 1, 2, 128>}]} {
    %c0 = arith.constant 0 : index
    %c0_0 = arith.constant 0 : index
    %0 = vector.load %arg1[%c0, %c0_0] : memref<256x128xbf16, #tpu.memory_space<vmem>>, vector<256x128xbf16>
    %1 = arith.extf %0 : vector<256x128xbf16> to vector<256x128xf32>
    %c0_1 = arith.constant 0 : index
    %c0_2 = arith.constant 0 : index
    %2 = vector.load %arg2[%c0_1, %c0_2] : memref<2x128xf32, #tpu.memory_space<vmem>>, vector<1x128xf32>
    %3 = vector.broadcast %2 : vector<1x128xf32> to vector<256x128xf32>
    %4 = arith.mulf %1, %3 : vector<256x128xf32>
    %c1 = arith.constant 1 : index
    %c0_3 = arith.constant 0 : index
    %5 = vector.load %arg2[%c1, %c0_3] : memref<2x128xf32, #tpu.memory_space<vmem>>, vector<1x128xf32>
    %6 = vector.broadcast %5 : vector<1x128xf32> to vector<256x128xf32>
    %7 = arith.addf %4, %6 : vector<256x128xf32>
    %cst = arith.constant 0.000000e+00 : f32
    %8 = vector.broadcast %cst : f32 to vector<256x128xf32>
    %9 = arith.maximumf %7, %8 : vector<256x128xf32>
    %10 = arith.truncf %9 : vector<256x128xf32> to vector<256x128xbf16>
    %c0_4 = arith.constant 0 : index
    %c0_5 = arith.constant 0 : index
    %11 = vector.load %arg3[%c0_4, %c0_5] : memref<128x128xbf16, #tpu.memory_space<vmem>>, vector<128x128xbf16>
    %cst_6 = arith.constant dense<0.000000e+00> : vector<256x128xf32>
    %12 = tpu.matmul %10, %11, %cst_6 {dimension_numbers = #tpu.dot_dimension_numbers<[1], [0], [0], [1], [0, 0, 1, 1], [], []>} : vector<256x128xbf16>, vector<128x128xbf16>, vector<256x128xf32> -> vector<256x128xf32>
    %13 = arith.truncf %12 : vector<256x128xf32> to vector<256x128xbf16>
    %c0_7 = arith.constant 0 : index
    %c0_8 = arith.constant 0 : index
    %14 = vector.load %arg4[%c0_7, %c0_8] : memref<256x128xbf16, #tpu.memory_space<vmem>>, vector<256x128xbf16>
    tpu.vector_store %arg4[%c0_7, %c0_8], %13 {strides = array<i32>} : memref<256x128xbf16, #tpu.memory_space<vmem>>, vector<256x128xbf16>,
    %cst_9 = arith.constant dense<0.000000e+00> : vector<128xf32>
    %15 = vector.multi_reduction <add>, %12, %cst_9 [0] : vector<256x128xf32> to vector<128xf32>
    %16 = vector.shape_cast %15 : vector<128xf32> to vector<1x128xf32>
    %17 = arith.mulf %12, %12 : vector<256x128xf32>
    %cst_10 = arith.constant dense<0.000000e+00> : vector<128xf32>
    %18 = vector.multi_reduction <add>, %17, %cst_10 [0] : vector<256x128xf32> to vector<128xf32>
    %19 = vector.shape_cast %18 : vector<128xf32> to vector<1x128xf32>
    %20 = tpu.concatenate %16, %19 in 0 : vector<1x128xf32>, vector<1x128xf32> -> vector<2x128xf32>
    %21 = vector.shape_cast %20 : vector<2x128xf32> to vector<1x2x128xf32>
    %c0_11 = arith.constant 0 : index
    %c0_12 = arith.constant 0 : index
    %c0_13 = arith.constant 0 : index
    %22 = vector.load %arg5[%c0_11, %c0_12, %c0_13] : memref<1x2x128xf32, #tpu.memory_space<vmem>>, vector<1x2x128xf32>
    tpu.vector_store %arg5[%c0_11, %c0_12, %c0_13], %21 {strides = array<i32>} : memref<1x2x128xf32, #tpu.memory_space<vmem>>, vector<1x2x128xf32>,
    return
  }
  func.func @transform_0(%arg0: i32) -> (i32, i32) {
    %c0_i32 = arith.constant 0 : i32
    %c0_i32_0 = arith.constant 0 : i32
    return %arg0, %c0_i32 : i32, i32
  }
  func.func @transform_1(%arg0: i32) -> (i32, i32) {
    %c0_i32 = arith.constant 0 : i32
    %c0_i32_0 = arith.constant 0 : i32
    %c0_i32_1 = arith.constant 0 : i32
    return %c0_i32, %c0_i32_0 : i32, i32
  }
  func.func @transform_2(%arg0: i32) -> (i32, i32) {
    %c0_i32 = arith.constant 0 : i32
    %c0_i32_0 = arith.constant 0 : i32
    %c0_i32_1 = arith.constant 0 : i32
    return %c0_i32, %c0_i32_0 : i32, i32
  }
  func.func @transform_3(%arg0: i32) -> (i32, i32) {
    %c0_i32 = arith.constant 0 : i32
    %c0_i32_0 = arith.constant 0 : i32
    return %arg0, %c0_i32 : i32, i32
  }
  func.func @transform_4(%arg0: i32) -> (i32, i32, i32) {
    %c0_i32 = arith.constant 0 : i32
    %c0_i32_0 = arith.constant 0 : i32
    %c0_i32_1 = arith.constant 0 : i32
    return %arg0, %c0_i32, %c0_i32_0 : i32, i32, i32
  }
}

</mosaic_0001>

<llo_original>
// kernel: bottleneck_forward.7
$region0: #{bottleneck_forward.7}
  #allocation0 [shape = 'u32[]', space=smem, size = 0x4, offset = 0x4, fixed_abs, tag = 'smem constant byte address 0x4 - core index']
  #allocation1 [shape = 'u32[144,128]{1,0:T(1,128)}', space=vmem, size = 0x12000, scoped, tag = 'internal scratch']
  %s0 = inlined_call_operand.vmem [shape: bf16[512,128], index: 0, kind: input, shape index: {}]
  %s1 = inlined_call_operand.vmem [shape: bf16[512,128], index: 1, kind: input, shape index: {}]
  %s2 = inlined_call_operand.vmem [shape: f32[2,128], index: 2, kind: input, shape index: {}]
  %s3 = inlined_call_operand.vmem [shape: f32[512,128], index: 3, kind: output, shape index: {}]
  %s4 = sld [smem:[#allocation0]]
  $region45: #{bottleneck_forward.7} parent=0
    _
  %s6 = ssub.s32 1, %s4
  %s7 = scalar_select 0, %s6, %s4
  loop: start=0, step=1, limit=4
  $region2: #{bottleneck_forward.7} parent=0 // loop_pre_header
    _
  $region3: #{bottleneck_forward.7} parent=0 // loop_header
    %s9 = sphi 0, %s13
    %p10 = scmp.ge.s32.totalorder %s9, 4
    %s19 = sphi 0, %s21
    %s22 = sphi 0, %s19
    %s23 = sphi 0, %s22
    %s39 = sphi 0, %s23
    %s45 = sphi 0, %s47
    %s48 = sphi 0, %s45
    %s49 = sphi 0, %s48
    %s65 = sphi 0, %s49
    %s69 = sphi 0, %s69
    %s71 = sphi 0, %s69
    %s72 = sphi 0, %s71
    %s86 = sphi 0, %s72
    %s92 = sphi 0, %s94
    %s95 = sphi 0, %s92
    %s96 = sphi 0, %s95
    %s112 = sphi 0, %s96
  $region4: #{bottleneck_forward.7} parent=0 // loop_header_branch
    %12 = sbr.rel (%p10) target = $region8
  $region5: #{bottleneck_forward.7} parent=0 // loop_body
    %s14 = ssub.s32 %s9, 1
    %s15 = ssub.s32 %s9, 2
    %s16 = sadd.s32 %s9, 1
    %s17 = ssub.s32 %s9, %s16
    %p18 = scmp.eq.s32.totalorder %s17, 0
    %s20 = sadd.s32 %s19, 1
    %s21 = scalar_select %p18, %s19, %s20
    %p24 = pneg %p18
    %p25 = scmp.eq.s32.totalorder %s9, 1
    %p26 = por %p24, %p25
    %p27 = scmp.ne.s32.totalorder %s19, %s22
    %p28 = scmp.eq.s32.totalorder %s9, 0
    %p29 = por %p27, %p28
    %p30 = scmp.ne.s32.totalorder %s19, %s22
    %p31 = scmp.eq.s32.totalorder %s14, 1
    %p32 = por %p30, %p31
    %p33 = scmp.ne.s32.totalorder %s22, %s23
    %p34 = scmp.eq.s32.totalorder %s14, 0
    %p35 = por %p33, %p34
    %p36 = scmp.ne.s32.totalorder %s22, %s23
    %p37 = scmp.eq.s32.totalorder %s15, 1
    %p38 = por %p36, %p37
    %p40 = scmp.ne.s32.totalorder %s23, %s39
    %p41 = scmp.eq.s32.totalorder %s15, 0
    %p42 = por %p40, %p41
    %s43 = ssub.s32 %s9, %s16
    %p44 = scmp.eq.s32.totalorder %s43, 0
    %s46 = sadd.s32 %s45, 1
    %s47 = scalar_select %p44, %s45, %s46
    %p50 = pneg %p44
    %p51 = scmp.eq.s32.totalorder %s9, 1
    %p52 = por %p50, %p51
    %p53 = scmp.ne.s32.totalorder %s45, %s48
    %p54 = scmp.eq.s32.totalorder %s9, 0
    %p55 = por %p53, %p54
    %p56 = scmp.ne.s32.totalorder %s45, %s48
    %p57 = scmp.eq.s32.totalorder %s14, 1
    %p58 = por %p56, %p57
    %p59 = scmp.ne.s32.totalorder %s48, %s49
    %p60 = scmp.eq.s32.totalorder %s14, 0
    %p61 = por %p59, %p60
    %p62 = scmp.ne.s32.totalorder %s48, %s49
    %p63 = scmp.eq.s32.totalorder %s15, 1
    %p64 = por %p62, %p63
    %p66 = scmp.ne.s32.totalorder %s49, %s65
    %p67 = scmp.eq.s32.totalorder %s15, 0
    %p68 = por %p66, %p67
    %s70 = sadd.s32 %s69, 1
    %p73 = scmp.eq.s32.totalorder %s9, 1
    %p74 = scmp.ne.s32.totalorder %s69, %s71
    %p75 = scmp.eq.s32.totalorder %s9, 0
    %p76 = por %p74, %p75
    %p77 = scmp.ne.s32.totalorder %s69, %s71
    %p78 = scmp.eq.s32.totalorder %s14, 1
    %p79 = por %p77, %p78
    %p80 = scmp.ne.s32.totalorder %s71, %s72
    %p81 = scmp.eq.s32.totalorder %s14, 0
    %p82 = por %p80, %p81
    %p83 = scmp.ne.s32.totalorder %s71, %s72
    %p84 = scmp.eq.s32.totalorder %s15, 1
    %p85 = por %p83, %p84
    %p87 = scmp.ne.s32.totalorder %s72, %s86
    %p88 = scmp.eq.s32.totalorder %s15, 0
    %p89 = por %p87, %p88
    %s90 = ssub.s32 %s9, %s16
    %p91 = scmp.eq.s32.totalorder %s90, 0
    %s93 = sadd.s32 %s92, 1
    %s94 = scalar_select %p91, %s92, %s93
    %p97 = pneg %p91
    %p98 = scmp.eq.s32.totalorder %s9, 1
    %p99 = por %p97, %p98
    %p100 = scmp.ne.s32.totalorder %s92, %s95
    %p101 = scmp.eq.s32.totalorder %s9, 0
    %p102 = por %p100, %p101
    %p103 = scmp.ne.s32.totalorder %s92, %s95
    %p104 = scmp.eq.s32.totalorder %s14, 1
    %p105 = por %p103, %p104
    %p106 = scmp.ne.s32.totalorder %s95, %s96
    %p107 = scmp.eq.s32.totalorder %s14, 0
    %p108 = por %p106, %p107
    %p109 = scmp.ne.s32.totalorder %s95, %s96
    %p110 = scmp.eq.s32.totalorder %s15, 1
    %p111 = por %p109, %p110
    %p113 = scmp.ne.s32.totalorder %s96, %s112
    %p114 = scmp.eq.s32.totalorder %s15, 0
    %p115 = por %p113, %p114
    %p116 = scmp.le.s32.totalorder 1, %s9
    %p117 = scmp.lt.s32.totalorder %s9, 3
    %p118 = pnand %p116, %p117
    %p119 = pneg %p118
    // Predicated region
    $region9: #{bottleneck_forward.7} parent=5 // pred_check
      _
    $region10: #{bottleneck_forward.7} parent=5 // pred_check_branch
      %121 = sbr.rel (%p118) target = $region12
    $region11: #{bottleneck_forward.7} parent=5 // pred_region
      %s122 = ssub.s32 %s9, 1
      // Predicated region
      $region13: #{bottleneck_forward.7} parent=11 // pred_check
        %p123 = pneg %p82
      $region14: #{bottleneck_forward.7} parent=11 // pred_check_branch
        %125 = sbr.rel (%p123) target = $region16
      $region15: #{bottleneck_forward.7} parent=11 // pred_region
        _
      $region16: #{bottleneck_forward.7} parent=11 // pred_fallthru
        _
    $region12: #{bottleneck_forward.7} parent=5 // pred_fallthru
      _
    %p126 = scmp.lt.s32.totalorder %s9, 2
    // Predicated region
    $region17: #{bottleneck_forward.7} parent=5 // pred_check
      %p127 = pneg %p126
    $region18: #{bottleneck_forward.7} parent=5 // pred_check_branch
      %129 = sbr.rel (%p127) target = $region20
    $region19: #{bottleneck_forward.7} parent=5 // pred_region
      // Predicated region
      $region21: #{bottleneck_forward.7} parent=19 // pred_check
        %p130 = pneg %p29
      $region22: #{bottleneck_forward.7} parent=19 // pred_check_branch
        %132 = sbr.rel (%p130) target = $region24
      $region23: #{bottleneck_forward.7} parent=19 // pred_region
        %s133 = smul.u32 32, %s9
        %p134 = scmp.lt.s32.totalorder %s133, 63
        %s135 = scalar_select %p134, %s133, 63
        %s136 = smul.addr %s135, 4
        %s137 = scalar_lea.vmem %s0, %s136
        %s138 = smul.u32 32, %s9
      $region24: #{bottleneck_forward.7} parent=19 // pred_fallthru
        _
      // Predicated region
      $region25: #{bottleneck_forward.7} parent=19 // pred_check
        %p139 = pneg %p55
      $region26: #{bottleneck_forward.7} parent=19 // pred_check_branch
        %141 = sbr.rel (%p139) target = $region28
      $region27: #{bottleneck_forward.7} parent=19 // pred_region
        %s142 = smul.u32 32, %s9
        %p143 = scmp.lt.s32.totalorder %s142, 63
        %s144 = scalar_select %p143, %s142, 63
        %s145 = smul.addr %s144, 4
        %s146 = scalar_lea.vmem %s1, %s145
        %s147 = smul.u32 32, %s9
      $region28: #{bottleneck_forward.7} parent=19 // pred_fallthru
        _
    $region20: #{bottleneck_forward.7} parent=5 // pred_fallthru
      _
    %p148 = scmp.le.s32.totalorder 1, %s9
    %p149 = scmp.lt.s32.totalorder %s9, 3
    %p150 = pnand %p148, %p149
    %p151 = pneg %p150
    // Predicated region
    $region29: #{bottleneck_forward.7} parent=5 // pred_check
      _
    $region30: #{bottleneck_forward.7} parent=5 // pred_check_branch
      %153 = sbr.rel (%p150) target = $region32
    $region31: #{bottleneck_forward.7} parent=5 // pred_region
      %s154 = ssub.s32 %s9, 1
      %s155 = smul.u32 32, %s14
      %p156 = scmp.lt.s32.totalorder %s155, 63
      %s157 = scalar_select %p156, %s155, 63
      %s158 = smul.addr %s157, 4
      %s159 = scalar_lea.vmem %s0, %s158
      %p160 = pneg %p35
      %p161 = pneg %p32
      %s162 = smul.u32 32, %s14
      %p163 = scmp.lt.s32.totalorder %s162, 63
      %s164 = scalar_select %p163, %s162, 63
      %s165 = smul.addr %s164, 4
      %s166 = scalar_lea.vmem %s1, %s165
      %p167 = pneg %p61
      %p168 = pneg %p58
      %p169 = pneg %p82
      %p170 = pneg %p79
      %p171 = pneg %p108
      %p172 = pneg %p105
      %s173 = smul.u32 32, %s14
      %p174 = scmp.lt.s32.totalorder %s173, 63
      %s175 = scalar_select %p174, %s173, 63
      %s176 = smul.addr %s175, 8
      %s177 = scalar_lea.vmem %s3, %s176
      %s178 = smul.u32 32, %s14
      %p179 = scmp.lt.s32.totalorder %s178, 63
      %s180 = scalar_select %p179, %s178, 63
      %s181 = smul.addr %s180, 4
      %s182 = scalar_lea.vmem %s0, %s181
      %s183 = smul.u32 32, %s14
      %s184 = smul.u32 32, %s14
      %p185 = scmp.lt.s32.totalorder %s184, 63
      %s186 = scalar_select %p185, %s184, 63
      %s187 = smul.addr %s186, 4
      %s188 = scalar_lea.vmem %s1, %s187
      %s189 = smul.u32 32, %s14
      %s190 = smul.u32 32, %s14
      %p191 = scmp.lt.s32.totalorder %s190, 63
      %s192 = scalar_select %p191, %s190, 63
      %s193 = smul.addr %s192, 8
      %s194 = scalar_lea.vmem %s3, %s193
      %s195 = smul.u32 32, %s14
      %v196 = vld [vmem:[%s182] sm:$0xf]
      %v197 = vld [vmem:[%s182 + $0x4] sm:$0xf]
      %v198 = vld [vmem:[%s182 + $0x8] sm:$0xf]
      %v199 = vld [vmem:[%s182 + $0xc] sm:$0xf]
      %v200 = vld [vmem:[%s182 + $0x10] sm:$0xf]
      %v201 = vld [vmem:[%s182 + $0x14] sm:$0xf]
      %v202 = vld [vmem:[%s182 + $0x18] sm:$0xf]
      %v203 = vld [vmem:[%s182 + $0x1c] sm:$0xf]
      %v204 = vld [vmem:[%s182 + $0x20] sm:$0xf]
      %v205 = vld [vmem:[%s182 + $0x24] sm:$0xf]
      %v206 = vld [vmem:[%s182 + $0x28] sm:$0xf]
      %v207 = vld [vmem:[%s182 + $0x2c] sm:$0xf]
      %v208 = vld [vmem:[%s182 + $0x30] sm:$0xf]
      %v209 = vld [vmem:[%s182 + $0x34] sm:$0xf]
      %v210 = vld [vmem:[%s182 + $0x38] sm:$0xf]
      %v211 = vld [vmem:[%s182 + $0x3c] sm:$0xf]
      %v212 = vld [vmem:[%s182 + $0x40] sm:$0xf]
      %v213 = vld [vmem:[%s182 + $0x44] sm:$0xf]
      %v214 = vld [vmem:[%s182 + $0x48] sm:$0xf]
      %v215 = vld [vmem:[%s182 + $0x4c] sm:$0xf]
      %v216 = vld [vmem:[%s182 + $0x50] sm:$0xf]
      %v217 = vld [vmem:[%s182 + $0x54] sm:$0xf]
      %v218 = vld [vmem:[%s182 + $0x58] sm:$0xf]
      %v219 = vld [vmem:[%s182 + $0x5c] sm:$0xf]
      %v220 = vld [vmem:[%s182 + $0x60] sm:$0xf]
      %v221 = vld [vmem:[%s182 + $0x64] sm:$0xf]
      %v222 = vld [vmem:[%s182 + $0x68] sm:$0xf]
      %v223 = vld [vmem:[%s182 + $0x6c] sm:$0xf]
      %v224 = vld [vmem:[%s182 + $0x70] sm:$0xf]
      %v225 = vld [vmem:[%s182 + $0x74] sm:$0xf]
      %v226 = vld [vmem:[%s182 + $0x78] sm:$0xf]
      %v227 = vld [vmem:[%s182 + $0x7c] sm:$0xf]
      %v228 = vunpack.c.l.bf16 %v196
      %v229 = vunpack.c.l.bf16 %v197
      %v230 = vunpack.c.l.bf16 %v198
      %v231 = vunpack.c.l.bf16 %v199
      %v232 = vunpack.c.l.bf16 %v200
      %v233 = vunpack.c.l.bf16 %v201
      %v234 = vunpack.c.l.bf16 %v202
      %v235 = vunpack.c.l.bf16 %v203
      %v236 = vunpack.c.l.bf16 %v204
      %v237 = vunpack.c.l.bf16 %v205
      %v238 = vunpack.c.l.bf16 %v206
      %v239 = vunpack.c.l.bf16 %v207
      %v240 = vunpack.c.l.bf16 %v208
      %v241 = vunpack.c.l.bf16 %v209
      %v242 = vunpack.c.l.bf16 %v210
      %v243 = vunpack.c.l.bf16 %v211
      %v244 = vunpack.c.l.bf16 %v212
      %v245 = vunpack.c.l.bf16 %v213
      %v246 = vunpack.c.l.bf16 %v214
      %v247 = vunpack.c.l.bf16 %v215
      %v248 = vunpack.c.l.bf16 %v216
      %v249 = vunpack.c.l.bf16 %v217
      %v250 = vunpack.c.l.bf16 %v218
      %v251 = vunpack.c.l.bf16 %v219
      %v252 = vunpack.c.l.bf16 %v220
      %v253 = vunpack.c.l.bf16 %v221
      %v254 = vunpack.c.l.bf16 %v222
      %v255 = vunpack.c.l.bf16 %v223
      %v256 = vunpack.c.l.bf16 %v224
      %v257 = vunpack.c.l.bf16 %v225
      %v258 = vunpack.c.l.bf16 %v226
      %v259 = vunpack.c.l.bf16 %v227
      %v260 = vld [vmem:[%s2] sm:$0x1]
      %v261 = vlaneseq
      %v262 = vshrl.u32 %v261, 7
      %v263 = vsub.s32 0, %v262
      %v264 = vrot.slane %v260, %v263
      %v265 = vmul.f32 %v228, %v264
      %v266 = vmul.f32 %v229, %v264
      %v267 = vmul.f32 %v230, %v264
      %v268 = vmul.f32 %v231, %v264
      %v269 = vmul.f32 %v232, %v264
      %v270 = vmul.f32 %v233, %v264
      %v271 = vmul.f32 %v234, %v264
      %v272 = vmul.f32 %v235, %v264
      %v273 = vmul.f32 %v236, %v264
      %v274 = vmul.f32 %v237, %v264
      %v275 = vmul.f32 %v238, %v264
      %v276 = vmul.f32 %v239, %v264
      %v277 = vmul.f32 %v240, %v264
      %v278 = vmul.f32 %v241, %v264
      %v279 = vmul.f32 %v242, %v264
      %v280 = vmul.f32 %v243, %v264
      %v281 = vmul.f32 %v244, %v264
      %v282 = vmul.f32 %v245, %v264
      %v283 = vmul.f32 %v246, %v264
      %v284 = vmul.f32 %v247, %v264
      %v285 = vmul.f32 %v248, %v264
      %v286 = vmul.f32 %v249, %v264
      %v287 = vmul.f32 %v250, %v264
      %v288 = vmul.f32 %v251, %v264
      %v289 = vmul.f32 %v252, %v264
      %v290 = vmul.f32 %v253, %v264
      %v291 = vmul.f32 %v254, %v264
      %v292 = vmul.f32 %v255, %v264
      %v293 = vmul.f32 %v256, %v264
      %v294 = vmul.f32 %v257, %v264
      %v295 = vmul.f32 %v258, %v264
      %v296 = vmul.f32 %v259, %v264
      %v297 = vld [vmem:[%s2 + $0x1] sm:$0x1]
      %v298 = vlaneseq
      %v299 = vshrl.u32 %v298, 7
      %v300 = vsub.s32 0, %v299
      %v301 = vrot.slane %v297, %v300
      %v302 = vadd.f32 %v265, %v301
      %v303 = vadd.f32 %v266, %v301
      %v304 = vadd.f32 %v267, %v301
      %v305 = vadd.f32 %v268, %v301
      %v306 = vadd.f32 %v269, %v301
      %v307 = vadd.f32 %v270, %v301
      %v308 = vadd.f32 %v271, %v301
      %v309 = vadd.f32 %v272, %v301
      %v310 = vadd.f32 %v273, %v301
      %v311 = vadd.f32 %v274, %v301
      %v312 = vadd.f32 %v275, %v301
      %v313 = vadd.f32 %v276, %v301
      %v314 = vadd.f32 %v277, %v301
      %v315 = vadd.f32 %v278, %v301
      %v316 = vadd.f32 %v279, %v301
      %v317 = vadd.f32 %v280, %v301
      %v318 = vadd.f32 %v281, %v301
      %v319 = vadd.f32 %v282, %v301
      %v320 = vadd.f32 %v283, %v301
      %v321 = vadd.f32 %v284, %v301
      %v322 = vadd.f32 %v285, %v301
      %v323 = vadd.f32 %v286, %v301
      %v324 = vadd.f32 %v287, %v301
      %v325 = vadd.f32 %v288, %v301
      %v326 = vadd.f32 %v289, %v301
      %v327 = vadd.f32 %v290, %v301
      %v328 = vadd.f32 %v291, %v301
      %v329 = vadd.f32 %v292, %v301
      %v330 = vadd.f32 %v293, %v301
      %v331 = vadd.f32 %v294, %v301
      %v332 = vadd.f32 %v295, %v301
      %v333 = vadd.f32 %v296, %v301
      %v334 = vld [vmem:[%s188] sm:$0xf]
      %v335 = vld [vmem:[%s188 + $0x4] sm:$0xf]
      %v336 = vld [vmem:[%s188 + $0x8] sm:$0xf]
      %v337 = vld [vmem:[%s188 + $0xc] sm:$0xf]
      %v338 = vld [vmem:[%s188 + $0x10] sm:$0xf]
      %v339 = vld [vmem:[%s188 + $0x14] sm:$0xf]
      %v340 = vld [vmem:[%s188 + $0x18] sm:$0xf]
      %v341 = vld [vmem:[%s188 + $0x1c] sm:$0xf]
      %v342 = vld [vmem:[%s188 + $0x20] sm:$0xf]
      %v343 = vld [vmem:[%s188 + $0x24] sm:$0xf]
      %v344 = vld [vmem:[%s188 + $0x28] sm:$0xf]
      %v345 = vld [vmem:[%s188 + $0x2c] sm:$0xf]
      %v346 = vld [vmem:[%s188 + $0x30] sm:$0xf]
      %v347 = vld [vmem:[%s188 + $0x34] sm:$0xf]
      %v348 = vld [vmem:[%s188 + $0x38] sm:$0xf]
      %v349 = vld [vmem:[%s188 + $0x3c] sm:$0xf]
      %v350 = vld [vmem:[%s188 + $0x40] sm:$0xf]
      %v351 = vld [vmem:[%s188 + $0x44] sm:$0xf]
      %v352 = vld [vmem:[%s188 + $0x48] sm:$0xf]
      %v353 = vld [vmem:[%s188 + $0x4c] sm:$0xf]
      %v354 = vld [vmem:[%s188 + $0x50] sm:$0xf]
      %v355 = vld [vmem:[%s188 + $0x54] sm:$0xf]
      %v356 = vld [vmem:[%s188 + $0x58] sm:$0xf]
      %v357 = vld [vmem:[%s188 + $0x5c] sm:$0xf]
      %v358 = vld [vmem:[%s188 + $0x60] sm:$0xf]
      %v359 = vld [vmem:[%s188 + $0x64] sm:$0xf]
      %v360 = vld [vmem:[%s188 + $0x68] sm:$0xf]
      %v361 = vld [vmem:[%s188 + $0x6c] sm:$0xf]
      %v362 = vld [vmem:[%s188 + $0x70] sm:$0xf]
      %v363 = vld [vmem:[%s188 + $0x74] sm:$0xf]
      %v364 = vld [vmem:[%s188 + $0x78] sm:$0xf]
      %v365 = vld [vmem:[%s188 + $0x7c] sm:$0xf]
      %v366 = vunpack.c.l.bf16 %v334
      %v367 = vunpack.c.l.bf16 %v335
      %v368 = vunpack.c.l.bf16 %v336
      %v369 = vunpack.c.l.bf16 %v337
      %v370 = vunpack.c.l.bf16 %v338
      %v371 = vunpack.c.l.bf16 %v339
      %v372 = vunpack.c.l.bf16 %v340
      %v373 = vunpack.c.l.bf16 %v341
      %v374 = vunpack.c.l.bf16 %v342
      %v375 = vunpack.c.l.bf16 %v343
      %v376 = vunpack.c.l.bf16 %v344
      %v377 = vunpack.c.l.bf16 %v345
      %v378 = vunpack.c.l.bf16 %v346
      %v379 = vunpack.c.l.bf16 %v347
      %v380 = vunpack.c.l.bf16 %v348
      %v381 = vunpack.c.l.bf16 %v349
      %v382 = vunpack.c.l.bf16 %v350
      %v383 = vunpack.c.l.bf16 %v351
      %v384 = vunpack.c.l.bf16 %v352
      %v385 = vunpack.c.l.bf16 %v353
      %v386 = vunpack.c.l.bf16 %v354
      %v387 = vunpack.c.l.bf16 %v355
      %v388 = vunpack.c.l.bf16 %v356
      %v389 = vunpack.c.l.bf16 %v357
      %v390 = vunpack.c.l.bf16 %v358
      %v391 = vunpack.c.l.bf16 %v359
      %v392 = vunpack.c.l.bf16 %v360
      %v393 = vunpack.c.l.bf16 %v361
      %v394 = vunpack.c.l.bf16 %v362
      %v395 = vunpack.c.l.bf16 %v363
      %v396 = vunpack.c.l.bf16 %v364
      %v397 = vunpack.c.l.bf16 %v365
      %v398 = vadd.f32 %v302, %v366
      %v399 = vadd.f32 %v303, %v367
      %v400 = vadd.f32 %v304, %v368
      %v401 = vadd.f32 %v305, %v369
      %v402 = vadd.f32 %v306, %v370
      %v403 = vadd.f32 %v307, %v371
      %v404 = vadd.f32 %v308, %v372
      %v405 = vadd.f32 %v309, %v373
      %v406 = vadd.f32 %v310, %v374
      %v407 = vadd.f32 %v311, %v375
      %v408 = vadd.f32 %v312, %v376
      %v409 = vadd.f32 %v313, %v377
      %v410 = vadd.f32 %v314, %v378
      %v411 = vadd.f32 %v315, %v379
      %v412 = vadd.f32 %v316, %v380
      %v413 = vadd.f32 %v317, %v381
      %v414 = vadd.f32 %v318, %v382
      %v415 = vadd.f32 %v319, %v383
      %v416 = vadd.f32 %v320, %v384
      %v417 = vadd.f32 %v321, %v385
      %v418 = vadd.f32 %v322, %v386
      %v419 = vadd.f32 %v323, %v387
      %v420 = vadd.f32 %v324, %v388
      %v421 = vadd.f32 %v325, %v389
      %v422 = vadd.f32 %v326, %v390
      %v423 = vadd.f32 %v327, %v391
      %v424 = vadd.f32 %v328, %v392
      %v425 = vadd.f32 %v329, %v393
      %v426 = vadd.f32 %v330, %v394
      %v427 = vadd.f32 %v331, %v395
      %v428 = vadd.f32 %v332, %v396
      %v429 = vadd.f32 %v333, %v397
      %v430 = vmax.f32 %v398, 0.0
      %v431 = vmax.f32 %v399, 0.0
      %v432 = vmax.f32 %v400, 0.0
      %v433 = vmax.f32 %v401, 0.0
      %v434 = vmax.f32 %v402, 0.0
      %v435 = vmax.f32 %v403, 0.0
      %v436 = vmax.f32 %v404, 0.0
      %v437 = vmax.f32 %v405, 0.0
      %v438 = vmax.f32 %v406, 0.0
      %v439 = vmax.f32 %v407, 0.0
      %v440 = vmax.f32 %v408, 0.0
      %v441 = vmax.f32 %v409, 0.0
      %v442 = vmax.f32 %v410, 0.0
      %v443 = vmax.f32 %v411, 0.0
      %v444 = vmax.f32 %v412, 0.0
      %v445 = vmax.f32 %v413, 0.0
      %v446 = vmax.f32 %v414, 0.0
      %v447 = vmax.f32 %v415, 0.0
      %v448 = vmax.f32 %v416, 0.0
      %v449 = vmax.f32 %v417, 0.0
      %v450 = vmax.f32 %v418, 0.0
      %v451 = vmax.f32 %v419, 0.0
      %v452 = vmax.f32 %v420, 0.0
      %v453 = vmax.f32 %v421, 0.0
      %v454 = vmax.f32 %v422, 0.0
      %v455 = vmax.f32 %v423, 0.0
      %v456 = vmax.f32 %v424, 0.0
      %v457 = vmax.f32 %v425, 0.0
      %v458 = vmax.f32 %v426, 0.0
      %v459 = vmax.f32 %v427, 0.0
      %v460 = vmax.f32 %v428, 0.0
      %v461 = vmax.f32 %v429, 0.0
      %462 = vst [vmem:[%s194] sm:$0xff] %v430
      %463 = vst [vmem:[%s194 + $0x8] sm:$0xff] %v431
      %464 = vst [vmem:[%s194 + $0x10] sm:$0xff] %v432
      %465 = vst [vmem:[%s194 + $0x18] sm:$0xff] %v433
      %466 = vst [vmem:[%s194 + $0x20] sm:$0xff] %v434
      %467 = vst [vmem:[%s194 + $0x28] sm:$0xff] %v435
      %468 = vst [vmem:[%s194 + $0x30] sm:$0xff] %v436
      %469 = vst [vmem:[%s194 + $0x38] sm:$0xff] %v437
      %470 = vst [vmem:[%s194 + $0x40] sm:$0xff] %v438
      %471 = vst [vmem:[%s194 + $0x48] sm:$0xff] %v439
      %472 = vst [vmem:[%s194 + $0x50] sm:$0xff] %v440
      %473 = vst [vmem:[%s194 + $0x58] sm:$0xff] %v441
      %474 = vst [vmem:[%s194 + $0x60] sm:$0xff] %v442
      %475 = vst [vmem:[%s194 + $0x68] sm:$0xff] %v443
      %476 = vst [vmem:[%s194 + $0x70] sm:$0xff] %v444
      %477 = vst [vmem:[%s194 + $0x78] sm:$0xff] %v445
      %478 = vst [vmem:[%s194 + $0x80] sm:$0xff] %v446
      %479 = vst [vmem:[%s194 + $0x88] sm:$0xff] %v447
      %480 = vst [vmem:[%s194 + $0x90] sm:$0xff] %v448
      %481 = vst [vmem:[%s194 + $0x98] sm:$0xff] %v449
      %482 = vst [vmem:[%s194 + $0xa0] sm:$0xff] %v450
      %483 = vst [vmem:[%s194 + $0xa8] sm:$0xff] %v451
      %484 = vst [vmem:[%s194 + $0xb0] sm:$0xff] %v452
      %485 = vst [vmem:[%s194 + $0xb8] sm:$0xff] %v453
      %486 = vst [vmem:[%s194 + $0xc0] sm:$0xff] %v454
      %487 = vst [vmem:[%s194 + $0xc8] sm:$0xff] %v455
      %488 = vst [vmem:[%s194 + $0xd0] sm:$0xff] %v456
      %489 = vst [vmem:[%s194 + $0xd8] sm:$0xff] %v457
      %490 = vst [vmem:[%s194 + $0xe0] sm:$0xff] %v458
      %491 = vst [vmem:[%s194 + $0xe8] sm:$0xff] %v459
      %492 = vst [vmem:[%s194 + $0xf0] sm:$0xff] %v460
      %493 = vst [vmem:[%s194 + $0xf8] sm:$0xff] %v461
      %s494 = smul.u32 32, %s14
      %p495 = scmp.lt.s32.totalorder %s494, 63
      %s496 = scalar_select %p495, %s494, 63
      %s497 = smul.addr %s496, 8
      %s498 = scalar_lea.vmem %s3, %s497
      // Predicated region
      $region33: #{bottleneck_forward.7} parent=31 // pred_check
        %p499 = pneg %p105
      $region34: #{bottleneck_forward.7} parent=31 // pred_check_branch
        %501 = sbr.rel (%p499) target = $region36
      $region35: #{bottleneck_forward.7} parent=31 // pred_region
        %s502 = smul.u32 32, %s14
      $region36: #{bottleneck_forward.7} parent=31 // pred_fallthru
        _
    $region32: #{bottleneck_forward.7} parent=5 // pred_fallthru
      _
    %p503 = scmp.le.s32.totalorder 2, %s9
    // Predicated region
    $region37: #{bottleneck_forward.7} parent=5 // pred_check
      %p504 = pneg %p503
    $region38: #{bottleneck_forward.7} parent=5 // pred_check_branch
      %506 = sbr.rel (%p504) target = $region40
    $region39: #{bottleneck_forward.7} parent=5 // pred_region
      %s507 = ssub.s32 %s9, 2
      // Predicated region
      $region41: #{bottleneck_forward.7} parent=39 // pred_check
        %p508 = pneg %p111
      $region42: #{bottleneck_forward.7} parent=39 // pred_check_branch
        %510 = sbr.rel (%p508) target = $region44
      $region43: #{bottleneck_forward.7} parent=39 // pred_region
        %s511 = smul.u32 32, %s15
        %p512 = scmp.lt.s32.totalorder %s511, 63
        %s513 = scalar_select %p512, %s511, 63
        %s514 = smul.addr %s513, 8
        %s515 = scalar_lea.vmem %s3, %s514
      $region44: #{bottleneck_forward.7} parent=39 // pred_fallthru
        _
    $region40: #{bottleneck_forward.7} parent=5 // pred_fallthru
      _
  $region6: #{bottleneck_forward.7} parent=0 // loop_footer
    %s13 = sadd.s32 1, %s9
  $region7: #{bottleneck_forward.7} parent=0 // loop_footer_branch
    %8 = sbr.rel target = $region3
  $region8: #{bottleneck_forward.7} parent=0 // loop_exit
    _

// kernel: bottleneck_forward.4
$region0: #{bottleneck_forward.4}
  #allocation0 [shape = 'u32[]', space=smem, size = 0x4, offset = 0x4, fixed_abs, tag = 'smem constant byte address 0x4 - core index']
  #allocation1 [shape = 'u32[144,128]{1,0:T(1,128)}', space=vmem, size = 0x12000, scoped, tag = 'internal scratch']
  %s0 = inlined_call_operand.vmem [shape: bf16[512,128], index: 0, kind: input, shape index: {}]
  %s1 = inlined_call_operand.vmem [shape: bf16[128,128], index: 1, kind: input, shape index: {}]
  %s2 = inlined_call_operand.vmem [shape: bf16[512,128], index: 2, kind: output, shape index: {0}]
  %s3 = inlined_call_operand.vmem [shape: f32[2,2,128], index: 3, kind: output, shape index: {1}]
  %4 = xla_tuple %s2, %s3
  %s5 = sld [smem:[#allocation0]]
  $region49: #{bottleneck_forward.4} parent=0
    _
  %s7 = ssub.s32 1, %s5
  %s8 = scalar_select 0, %s7, %s5
  loop: start=0, step=1, limit=4
  $region2: #{bottleneck_forward.4} parent=0 // loop_pre_header
    _
  $region3: #{bottleneck_forward.4} parent=0 // loop_header
    %s10 = sphi 0, %s14
    %p11 = scmp.ge.s32.totalorder %s10, 4
    %s20 = sphi 0, %s22
    %s23 = sphi 0, %s20
    %s24 = sphi 0, %s23
    %s40 = sphi 0, %s24
    %s44 = sphi 0, %s44
    %s46 = sphi 0, %s44
    %s47 = sphi 0, %s46
    %s61 = sphi 0, %s47
    %s67 = sphi 0, %s69
    %s70 = sphi 0, %s67
    %s71 = sphi 0, %s70
    %s87 = sphi 0, %s71
    %s93 = sphi 0, %s95
    %s96 = sphi 0, %s93
    %s97 = sphi 0, %s96
    %s113 = sphi 0, %s97
  $region4: #{bottleneck_forward.4} parent=0 // loop_header_branch
    %13 = sbr.rel (%p11) target = $region8
  $region5: #{bottleneck_forward.4} parent=0 // loop_body
    %s15 = ssub.s32 %s10, 1
    %s16 = ssub.s32 %s10, 2
    %s17 = sadd.s32 %s10, 1
    %s18 = ssub.s32 %s10, %s17
    %p19 = scmp.eq.s32.totalorder %s18, 0
    %s21 = sadd.s32 %s20, 1
    %s22 = scalar_select %p19, %s20, %s21
    %p25 = pneg %p19
    %p26 = scmp.eq.s32.totalorder %s10, 1
    %p27 = por %p25, %p26
    %p28 = scmp.ne.s32.totalorder %s20, %s23
    %p29 = scmp.eq.s32.totalorder %s10, 0
    %p30 = por %p28, %p29
    %p31 = scmp.ne.s32.totalorder %s20, %s23
    %p32 = scmp.eq.s32.totalorder %s15, 1
    %p33 = por %p31, %p32
    %p34 = scmp.ne.s32.totalorder %s23, %s24
    %p35 = scmp.eq.s32.totalorder %s15, 0
    %p36 = por %p34, %p35
    %p37 = scmp.ne.s32.totalorder %s23, %s24
    %p38 = scmp.eq.s32.totalorder %s16, 1
    %p39 = por %p37, %p38
    %p41 = scmp.ne.s32.totalorder %s24, %s40
    %p42 = scmp.eq.s32.totalorder %s16, 0
    %p43 = por %p41, %p42
    %s45 = sadd.s32 %s44, 1
    %p48 = scmp.eq.s32.totalorder %s10, 1
    %p49 = scmp.ne.s32.totalorder %s44, %s46
    %p50 = scmp.eq.s32.totalorder %s10, 0
    %p51 = por %p49, %p50
    %p52 = scmp.ne.s32.totalorder %s44, %s46
    %p53 = scmp.eq.s32.totalorder %s15, 1
    %p54 = por %p52, %p53
    %p55 = scmp.ne.s32.totalorder %s46, %s47
    %p56 = scmp.eq.s32.totalorder %s15, 0
    %p57 = por %p55, %p56
    %p58 = scmp.ne.s32.totalorder %s46, %s47
    %p59 = scmp.eq.s32.totalorder %s16, 1
    %p60 = por %p58, %p59
    %p62 = scmp.ne.s32.totalorder %s47, %s61
    %p63 = scmp.eq.s32.totalorder %s16, 0
    %p64 = por %p62, %p63
    %s65 = ssub.s32 %s10, %s17
    %p66 = scmp.eq.s32.totalorder %s65, 0
    %s68 = sadd.s32 %s67, 1
    %s69 = scalar_select %p66, %s67, %s68
    %p72 = pneg %p66
    %p73 = scmp.eq.s32.totalorder %s10, 1
    %p74 = por %p72, %p73
    %p75 = scmp.ne.s32.totalorder %s67, %s70
    %p76 = scmp.eq.s32.totalorder %s10, 0
    %p77 = por %p75, %p76
    %p78 = scmp.ne.s32.totalorder %s67, %s70
    %p79 = scmp.eq.s32.totalorder %s15, 1
    %p80 = por %p78, %p79
    %p81 = scmp.ne.s32.totalorder %s70, %s71
    %p82 = scmp.eq.s32.totalorder %s15, 0
    %p83 = por %p81, %p82
    %p84 = scmp.ne.s32.totalorder %s70, %s71
    %p85 = scmp.eq.s32.totalorder %s16, 1
    %p86 = por %p84, %p85
    %p88 = scmp.ne.s32.totalorder %s71, %s87
    %p89 = scmp.eq.s32.totalorder %s16, 0
    %p90 = por %p88, %p89
    %s91 = ssub.s32 %s10, %s17
    %p92 = scmp.eq.s32.totalorder %s91, 0
    %s94 = sadd.s32 %s93, 1
    %s95 = scalar_select %p92, %s93, %s94
    %p98 = pneg %p92
    %p99 = scmp.eq.s32.totalorder %s10, 1
    %p100 = por %p98, %p99
    %p101 = scmp.ne.s32.totalorder %s93, %s96
    %p102 = scmp.eq.s32.totalorder %s10, 0
    %p103 = por %p101, %p102
    %p104 = scmp.ne.s32.totalorder %s93, %s96
    %p105 = scmp.eq.s32.totalorder %s15, 1
    %p106 = por %p104, %p105
    %p107 = scmp.ne.s32.totalorder %s96, %s97
    %p108 = scmp.eq.s32.totalorder %s15, 0
    %p109 = por %p107, %p108
    %p110 = scmp.ne.s32.totalorder %s96, %s97
    %p111 = scmp.eq.s32.totalorder %s16, 1
    %p112 = por %p110, %p111
    %p114 = scmp.ne.s32.totalorder %s97, %s113
    %p115 = scmp.eq.s32.totalorder %s16, 0
    %p116 = por %p114, %p115
    %p117 = scmp.le.s32.totalorder 1, %s10
    %p118 = scmp.lt.s32.totalorder %s10, 3
    %p119 = pnand %p117, %p118
    %p120 = pneg %p119
    // Predicated region
    $region9: #{bottleneck_forward.4} parent=5 // pred_check
      _
    $region10: #{bottleneck_forward.4} parent=5 // pred_check_branch
      %122 = sbr.rel (%p119) target = $region12
    $region11: #{bottleneck_forward.4} parent=5 // pred_region
      %s123 = ssub.s32 %s10, 1
      // Predicated region
      $region13: #{bottleneck_forward.4} parent=11 // pred_check
        %p124 = pneg %p57
      $region14: #{bottleneck_forward.4} parent=11 // pred_check_branch
        %126 = sbr.rel (%p124) target = $region16
      $region15: #{bottleneck_forward.4} parent=11 // pred_region
        _
      $region16: #{bottleneck_forward.4} parent=11 // pred_fallthru
        _
    $region12: #{bottleneck_forward.4} parent=5 // pred_fallthru
      _
    %p127 = scmp.lt.s32.totalorder %s10, 2
    // Predicated region
    $region17: #{bottleneck_forward.4} parent=5 // pred_check
      %p128 = pneg %p127
    $region18: #{bottleneck_forward.4} parent=5 // pred_check_branch
      %130 = sbr.rel (%p128) target = $region20
    $region19: #{bottleneck_forward.4} parent=5 // pred_region
      // Predicated region
      $region21: #{bottleneck_forward.4} parent=19 // pred_check
        %p131 = pneg %p30
      $region22: #{bottleneck_forward.4} parent=19 // pred_check_branch
        %133 = sbr.rel (%p131) target = $region24
      $region23: #{bottleneck_forward.4} parent=19 // pred_region
        %s134 = smul.u32 32, %s10
        %p135 = scmp.lt.s32.totalorder %s134, 63
        %s136 = scalar_select %p135, %s134, 63
        %s137 = smul.addr %s136, 4
        %s138 = scalar_lea.vmem %s0, %s137
        %s139 = smul.u32 32, %s10
      $region24: #{bottleneck_forward.4} parent=19 // pred_fallthru
        _
    $region20: #{bottleneck_forward.4} parent=5 // pred_fallthru
      _
    %p140 = scmp.le.s32.totalorder 1, %s10
    %p141 = scmp.lt.s32.totalorder %s10, 3
    %p142 = pnand %p140, %p141
    %p143 = pneg %p142
    // Predicated region
    $region25: #{bottleneck_forward.4} parent=5 // pred_check
      _
    $region26: #{bottleneck_forward.4} parent=5 // pred_check_branch
      %145 = sbr.rel (%p142) target = $region28
    $region27: #{bottleneck_forward.4} parent=5 // pred_region
      %s146 = ssub.s32 %s10, 1
      %s147 = smul.u32 32, %s15
      %p148 = scmp.lt.s32.totalorder %s147, 63
      %s149 = scalar_select %p148, %s147, 63
      %s150 = smul.addr %s149, 4
      %s151 = scalar_lea.vmem %s0, %s150
      %p152 = pneg %p36
      %p153 = pneg %p33
      %p154 = pneg %p57
      %p155 = pneg %p54
      %p156 = pneg %p83
      %p157 = pneg %p80
      %s158 = smul.u32 32, %s15
      %p159 = scmp.lt.s32.totalorder %s158, 63
      %s160 = scalar_select %p159, %s158, 63
      %s161 = smul.addr %s160, 4
      %s162 = scalar_lea.vmem %s2, %s161
      %p163 = pneg %p109
      %p164 = pneg %p106
      %p165 = scmp.lt.s32.totalorder %s15, 1
      %s166 = scalar_select %p165, %s15, 1
      %s167 = smul.addr %s166, 2
      %s168 = scalar_lea.vmem %s3, %s167
      %s169 = smul.u32 32, %s15
      %p170 = scmp.lt.s32.totalorder %s169, 63
      %s171 = scalar_select %p170, %s169, 63
      %s172 = smul.addr %s171, 4
      %s173 = scalar_lea.vmem %s0, %s172
      %s174 = smul.u32 32, %s15
      %s175 = smul.u32 32, %s15
      %p176 = scmp.lt.s32.totalorder %s175, 63
      %s177 = scalar_select %p176, %s175, 63
      %s178 = smul.addr %s177, 4
      %s179 = scalar_lea.vmem %s2, %s178
      %s180 = smul.u32 32, %s15
      %p181 = scmp.lt.s32.totalorder %s15, 1
      %s182 = scalar_select %p181, %s15, 1
      %s183 = smul.addr %s182, 2
      %s184 = scalar_lea.vmem %s3, %s183
      %v186 = vld [vmem:[%s173] sm:$0xf]
      %v187 = vld [vmem:[%s173 + $0x4] sm:$0xf]
      %v188 = vld [vmem:[%s173 + $0x8] sm:$0xf]
      %v189 = vld [vmem:[%s173 + $0xc] sm:$0xf]
      %v190 = vld [vmem:[%s173 + $0x10] sm:$0xf]
      %v191 = vld [vmem:[%s173 + $0x14] sm:$0xf]
      %v192 = vld [vmem:[%s173 + $0x18] sm:$0xf]
      %v193 = vld [vmem:[%s173 + $0x1c] sm:$0xf]
      %v194 = vld [vmem:[%s173 + $0x20] sm:$0xf]
      %v195 = vld [vmem:[%s173 + $0x24] sm:$0xf]
      %v196 = vld [vmem:[%s173 + $0x28] sm:$0xf]
      %v197 = vld [vmem:[%s173 + $0x2c] sm:$0xf]
      %v198 = vld [vmem:[%s173 + $0x30] sm:$0xf]
      %v199 = vld [vmem:[%s173 + $0x34] sm:$0xf]
      %v200 = vld [vmem:[%s173 + $0x38] sm:$0xf]
      %v201 = vld [vmem:[%s173 + $0x3c] sm:$0xf]
      %v202 = vld [vmem:[%s173 + $0x40] sm:$0xf]
      %v203 = vld [vmem:[%s173 + $0x44] sm:$0xf]
      %v204 = vld [vmem:[%s173 + $0x48] sm:$0xf]
      %v205 = vld [vmem:[%s173 + $0x4c] sm:$0xf]
      %v206 = vld [vmem:[%s173 + $0x50] sm:$0xf]
      %v207 = vld [vmem:[%s173 + $0x54] sm:$0xf]
      %v208 = vld [vmem:[%s173 + $0x58] sm:$0xf]
      %v209 = vld [vmem:[%s173 + $0x5c] sm:$0xf]
      %v210 = vld [vmem:[%s173 + $0x60] sm:$0xf]
      %v211 = vld [vmem:[%s173 + $0x64] sm:$0xf]
      %v212 = vld [vmem:[%s173 + $0x68] sm:$0xf]
      %v213 = vld [vmem:[%s173 + $0x6c] sm:$0xf]
      %v214 = vld [vmem:[%s173 + $0x70] sm:$0xf]
      %v215 = vld [vmem:[%s173 + $0x74] sm:$0xf]
      %v216 = vld [vmem:[%s173 + $0x78] sm:$0xf]
      %v217 = vld [vmem:[%s173 + $0x7c] sm:$0xf]
      %v218 = vld [vmem:[%s1] sm:$0xf]
      %v219 = vld [vmem:[%s1 + $0x4] sm:$0xf]
      %v220 = vld [vmem:[%s1 + $0x8] sm:$0xf]
      %v221 = vld [vmem:[%s1 + $0xc] sm:$0xf]
      %v222 = vld [vmem:[%s1 + $0x10] sm:$0xf]
      %v223 = vld [vmem:[%s1 + $0x14] sm:$0xf]
      %v224 = vld [vmem:[%s1 + $0x18] sm:$0xf]
      %v225 = vld [vmem:[%s1 + $0x1c] sm:$0xf]
      %v226 = vld [vmem:[%s1 + $0x20] sm:$0xf]
      %v227 = vld [vmem:[%s1 + $0x24] sm:$0xf]
      %v228 = vld [vmem:[%s1 + $0x28] sm:$0xf]
      %v229 = vld [vmem:[%s1 + $0x2c] sm:$0xf]
      %v230 = vld [vmem:[%s1 + $0x30] sm:$0xf]
      %v231 = vld [vmem:[%s1 + $0x34] sm:$0xf]
      %v232 = vld [vmem:[%s1 + $0x38] sm:$0xf]
      %v233 = vld [vmem:[%s1 + $0x3c] sm:$0xf]
      %v266 = vunpack.c.l.b16 %v186
      %v267 = vunpack.c.l.b16 %v187
      %v268 = vunpack.c.l.b16 %v188
      %v269 = vunpack.c.l.b16 %v189
      %v270 = vunpack.c.l.b16 %v190
      %v271 = vunpack.c.l.b16 %v191
      %v272 = vunpack.c.l.b16 %v192
      %v273 = vunpack.c.l.b16 %v193
      %v274 = vunpack.c.l.b16 %v194
      %v275 = vunpack.c.l.b16 %v195
      %v276 = vunpack.c.l.b16 %v196
      %v277 = vunpack.c.l.b16 %v197
      %v278 = vunpack.c.l.b16 %v198
      %v279 = vunpack.c.l.b16 %v199
      %v280 = vunpack.c.l.b16 %v200
      %v281 = vunpack.c.l.b16 %v201
      %v282 = vunpack.c.l.b16 %v202
      %v283 = vunpack.c.l.b16 %v203
      %v284 = vunpack.c.l.b16 %v204
      %v285 = vunpack.c.l.b16 %v205
      %v286 = vunpack.c.l.b16 %v206
      %v287 = vunpack.c.l.b16 %v207
      %v288 = vunpack.c.l.b16 %v208
      %v289 = vunpack.c.l.b16 %v209
      %v290 = vunpack.c.l.b16 %v210
      %v291 = vunpack.c.l.b16 %v211
      %v292 = vunpack.c.l.b16 %v212
      %v293 = vunpack.c.l.b16 %v213
      %v294 = vunpack.c.l.b16 %v214
      %v295 = vunpack.c.l.b16 %v215
      %v296 = vunpack.c.l.b16 %v216
      %v297 = vunpack.c.l.b16 %v217
      %v298 = vpack.c.b16 %v267, %v266
      %v299 = vpack.c.b16 %v269, %v268
      %v300 = vpack.c.b16 %v271, %v270
      %v301 = vpack.c.b16 %v273, %v272
      %v302 = vpack.c.b16 %v275, %v274
      %v303 = vpack.c.b16 %v277, %v276
      %v304 = vpack.c.b16 %v279, %v278
      %v305 = vpack.c.b16 %v281, %v280
      %v306 = vpack.c.b16 %v283, %v282
      %v307 = vpack.c.b16 %v285, %v284
      %v308 = vpack.c.b16 %v287, %v286
      %v309 = vpack.c.b16 %v289, %v288
      %v310 = vpack.c.b16 %v291, %v290
      %v311 = vpack.c.b16 %v293, %v292
      %v312 = vpack.c.b16 %v295, %v294
      %v313 = vpack.c.b16 %v297, %v296
      %v346 = vunpack.c.l.b16 %v218
      %v347 = vunpack.c.l.b16 %v219
      %v348 = vunpack.c.l.b16 %v220
      %v349 = vunpack.c.l.b16 %v221
      %v350 = vunpack.c.l.b16 %v222
      %v351 = vunpack.c.l.b16 %v223
      %v352 = vunpack.c.l.b16 %v224
      %v353 = vunpack.c.l.b16 %v225
      %v354 = vunpack.c.l.b16 %v226
      %v355 = vunpack.c.l.b16 %v227
      %v356 = vunpack.c.l.b16 %v228
      %v357 = vunpack.c.l.b16 %v229
      %v358 = vunpack.c.l.b16 %v230
      %v359 = vunpack.c.l.b16 %v231
      %v360 = vunpack.c.l.b16 %v232
      %v361 = vunpack.c.l.b16 %v233
      %v362 = vpack.c.b16 %v347, %v346
      %v363 = vpack.c.b16 %v349, %v348
      %v364 = vpack.c.b16 %v351, %v350
      %v365 = vpack.c.b16 %v353, %v352
      %v366 = vpack.c.b16 %v355, %v354
      %v367 = vpack.c.b16 %v357, %v356
      %v368 = vpack.c.b16 %v359, %v358
      %v369 = vpack.c.b16 %v361, %v360
      %378 = vmatprep.subr.bf16.mxu0 0
      %379 = vmatpush1.bf16.msra.mxu0 %v362
      %380 = vmatprep.subr.bf16.mxu0 0
      %381 = vmatpush1.bf16.msra.mxu0 %v363
      %382 = vmatprep.subr.bf16.mxu0 0
      %383 = vmatpush1.bf16.msra.mxu0 %v364
      %384 = vmatprep.subr.bf16.mxu0 0
      %385 = vmatpush1.bf16.msra.mxu0 %v365
      %386 = vmatprep.subr.bf16.mxu0 0
      %387 = vmatpush1.bf16.msra.mxu0 %v366
      %388 = vmatprep.subr.bf16.mxu0 0
      %389 = vmatpush1.bf16.msra.mxu0 %v367
      %390 = vmatprep.subr.bf16.mxu0 0
      %391 = vmatpush1.bf16.msra.mxu0 %v368
      %392 = vmatprep.subr.bf16.mxu0 0
      %393 = vmatpush1.bf16.msra.mxu0 %v369
      %394 = vmatprep.subr.bf16.mxu0 0
      %395 = vmatpush1.bf16.msra.mxu0 0
      %396 = vmatprep.subr.bf16.mxu0 0
      %397 = vmatpush1.bf16.msra.mxu0 0
      %398 = vmatprep.subr.bf16.mxu0 0
      %399 = vmatpush1.bf16.msra.mxu0 0
      %400 = vmatprep.subr.bf16.mxu0 0
      %401 = vmatpush1.bf16.msra.mxu0 0
      %402 = vmatprep.subr.bf16.mxu0 0
      %403 = vmatpush1.bf16.msra.mxu0 0
      %404 = vmatprep.subr.bf16.mxu0 0
      %405 = vmatpush1.bf16.msra.mxu0 0
      %406 = vmatprep.subr.bf16.mxu0 0
      %407 = vmatpush1.bf16.msra.mxu0 0
      %408 = vmatprep.subr.bf16.mxu0 0
      %409 = vmatpush1.bf16.msra.mxu0 0
      %410 = vmatprep.mubr.bf16.mxu0 0
      %411 = vmatmul.mubr.bf16.gmra.mrb[0].mxu0 %v298
      %v412 = vpop.f32.mrb[0].mxu0
      %v413 = vadd.f32 0.0, %v412
      %v414 = vpop.f32.mrb[0].mxu0
      %v415 = vpop.f32.mrb[0].mxu0
      %v416 = vadd.f32 0.0, %v415
      %v417 = vpop.f32.mrb[0].mxu0
      %418 = vmatprep.mubr.bf16.mxu0 0
      %419 = vmatmul.mubr.bf16.gmra.mrb[0].mxu0 %v299
      %v420 = vpop.f32.mrb[0].mxu0
      %v421 = vadd.f32 0.0, %v420
      %v422 = vpop.f32.mrb[0].mxu0
      %v423 = vpop.f32.mrb[0].mxu0
      %v424 = vadd.f32 0.0, %v423
      %v425 = vpop.f32.mrb[0].mxu0
      %426 = vmatprep.mubr.bf16.mxu0 0
      %427 = vmatmul.mubr.bf16.gmra.mrb[0].mxu0 %v300
      %v428 = vpop.f32.mrb[0].mxu0
      %v429 = vadd.f32 0.0, %v428
      %v430 = vpop.f32.mrb[0].mxu0
      %v431 = vpop.f32.mrb[0].mxu0
      %v432 = vadd.f32 0.0, %v431
      %v433 = vpop.f32.mrb[0].mxu0
      %434 = vmatprep.mubr.bf16.mxu0 0
      %435 = vmatmul.mubr.bf16.gmra.mrb[0].mxu0 %v301
      %v436 = vpop.f32.mrb[0].mxu0
      %v437 = vadd.f32 0.0, %v436
      %v438 = vpop.f32.mrb[0].mxu0
      %v439 = vpop.f32.mrb[0].mxu0
      %v440 = vadd.f32 0.0, %v439
      %v441 = vpop.f32.mrb[0].mxu0
      %442 = vmatprep.mubr.bf16.mxu0 0
      %443 = vmatmul.mubr.bf16.gmra.mrb[0].mxu0 %v302
      %v444 = vpop.f32.mrb[0].mxu0
      %v445 = vadd.f32 0.0, %v444
      %v446 = vpop.f32.mrb[0].mxu0
      %v447 = vpop.f32.mrb[0].mxu0
      %v448 = vadd.f32 0.0, %v447
      %v449 = vpop.f32.mrb[0].mxu0
      %450 = vmatprep.mubr.bf16.mxu0 0
      %451 = vmatmul.mubr.bf16.gmra.mrb[0].mxu0 %v303
      %v452 = vpop.f32.mrb[0].mxu0
      %v453 = vadd.f32 0.0, %v452
      %v454 = vpop.f32.mrb[0].mxu0
      %v455 = vpop.f32.mrb[0].mxu0
      %v456 = vadd.f32 0.0, %v455
      %v457 = vpop.f32.mrb[0].mxu0
      %458 = vmatprep.mubr.bf16.mxu0 0
      %459 = vmatmul.mubr.bf16.gmra.mrb[0].mxu0 %v304
      %v460 = vpop.f32.mrb[0].mxu0
      %v461 = vadd.f32 0.0, %v460
      %v462 = vpop.f32.mrb[0].mxu0
      %v463 = vpop.f32.mrb[0].mxu0
      %v464 = vadd.f32 0.0, %v463
      %v465 = vpop.f32.mrb[0].mxu0
      %466 = vmatprep.mubr.bf16.mxu0 0
      %467 = vmatmul.mubr.bf16.gmra.mrb[0].mxu0 %v305
      %v468 = vpop.f32.mrb[0].mxu0
      %v469 = vadd.f32 0.0, %v468
      %v470 = vpop.f32.mrb[0].mxu0
      %v471 = vpop.f32.mrb[0].mxu0
      %v472 = vadd.f32 0.0, %v471
      %v473 = vpop.f32.mrb[0].mxu0
      %474 = vmatprep.mubr.bf16.mxu0 0
      %475 = vmatmul.mubr.bf16.gmra.mrb[0].mxu0 %v306
      %v476 = vpop.f32.mrb[0].mxu0
      %v477 = vadd.f32 0.0, %v476
      %v478 = vpop.f32.mrb[0].mxu0
      %v479 = vpop.f32.mrb[0].mxu0
      %v480 = vadd.f32 0.0, %v479
      %v481 = vpop.f32.mrb[0].mxu0
      %482 = vmatprep.mubr.bf16.mxu0 0
      %483 = vmatmul.mubr.bf16.gmra.mrb[0].mxu0 %v307
      %v484 = vpop.f32.mrb[0].mxu0
      %v485 = vadd.f32 0.0, %v484
      %v486 = vpop.f32.mrb[0].mxu0
      %v487 = vpop.f32.mrb[0].mxu0
      %v488 = vadd.f32 0.0, %v487
      %v489 = vpop.f32.mrb[0].mxu0
      %490 = vmatprep.mubr.bf16.mxu0 0
      %491 = vmatmul.mubr.bf16.gmra.mrb[0].mxu0 %v308
      %v492 = vpop.f32.mrb[0].mxu0
      %v493 = vadd.f32 0.0, %v492
      %v494 = vpop.f32.mrb[0].mxu0
      %v495 = vpop.f32.mrb[0].mxu0
      %v496 = vadd.f32 0.0, %v495
      %v497 = vpop.f32.mrb[0].mxu0
      %498 = vmatprep.mubr.bf16.mxu0 0
      %499 = vmatmul.mubr.bf16.gmra.mrb[0].mxu0 %v309
      %v500 = vpop.f32.mrb[0].mxu0
      %v501 = vadd.f32 0.0, %v500
      %v502 = vpop.f32.mrb[0].mxu0
      %v503 = vpop.f32.mrb[0].mxu0
      %v504 = vadd.f32 0.0, %v503
      %v505 = vpop.f32.mrb[0].mxu0
      %506 = vmatprep.mubr.bf16.mxu0 0
      %507 = vmatmul.mubr.bf16.gmra.mrb[0].mxu0 %v310
      %v508 = vpop.f32.mrb[0].mxu0
      %v509 = vadd.f32 0.0, %v508
      %v510 = vpop.f32.mrb[0].mxu0
      %v511 = vpop.f32.mrb[0].mxu0
      %v512 = vadd.f32 0.0, %v511
      %v513 = vpop.f32.mrb[0].mxu0
      %514 = vmatprep.mubr.bf16.mxu0 0
      %515 = vmatmul.mubr.bf16.gmra.mrb[0].mxu0 %v311
      %v516 = vpop.f32.mrb[0].mxu0
      %v517 = vadd.f32 0.0, %v516
      %v518 = vpop.f32.mrb[0].mxu0
      %v519 = vpop.f32.mrb[0].mxu0
      %v520 = vadd.f32 0.0, %v519
      %v521 = vpop.f32.mrb[0].mxu0
      %522 = vmatprep.mubr.bf16.mxu0 0
      %523 = vmatmul.mubr.bf16.gmra.mrb[0].mxu0 %v312
      %v524 = vpop.f32.mrb[0].mxu0
      %v525 = vadd.f32 0.0, %v524
      %v526 = vpop.f32.mrb[0].mxu0
      %v527 = vpop.f32.mrb[0].mxu0
      %v528 = vadd.f32 0.0, %v527
      %v529 = vpop.f32.mrb[0].mxu0
      %530 = vmatprep.mubr.bf16.mxu0 0
      %531 = vmatmul.mubr.bf16.gmra.mrb[0].mxu0 %v313
      %v532 = vpop.f32.mrb[0].mxu0
      %v533 = vadd.f32 0.0, %v532
      %v534 = vpop.f32.mrb[0].mxu0
      %v535 = vpop.f32.mrb[0].mxu0
      %v536 = vadd.f32 0.0, %v535
      %v537 = vpop.f32.mrb[0].mxu0
      %538 = vdwg.mxu0
      %v539 = vpack.c.bf16 %v416, %v413
      %v540 = vpack.c.bf16 %v424, %v421
      %v541 = vpack.c.bf16 %v432, %v429
      %v542 = vpack.c.bf16 %v440, %v437
      %v543 = vpack.c.bf16 %v448, %v445
      %v544 = vpack.c.bf16 %v456, %v453
      %v545 = vpack.c.bf16 %v464, %v461
      %v546 = vpack.c.bf16 %v472, %v469
      %v547 = vpack.c.bf16 %v480, %v477
      %v548 = vpack.c.bf16 %v488, %v485
      %v549 = vpack.c.bf16 %v496, %v493
      %v550 = vpack.c.bf16 %v504, %v501
      %v551 = vpack.c.bf16 %v512, %v509
      %v552 = vpack.c.bf16 %v520, %v517
      %v553 = vpack.c.bf16 %v528, %v525
      %v554 = vpack.c.bf16 %v536, %v533
      %v571 = vunpack.c.l.b16 %v539
      %v572 = vunpack.c.h.b16 %v539
      %v573 = vunpack.c.l.b16 %v540
      %v574 = vunpack.c.h.b16 %v540
      %v575 = vunpack.c.l.b16 %v541
      %v576 = vunpack.c.h.b16 %v541
      %v577 = vunpack.c.l.b16 %v542
      %v578 = vunpack.c.h.b16 %v542
      %v579 = vunpack.c.l.b16 %v543
      %v580 = vunpack.c.h.b16 %v543
      %v581 = vunpack.c.l.b16 %v544
      %v582 = vunpack.c.h.b16 %v544
      %v583 = vunpack.c.l.b16 %v545
      %v584 = vunpack.c.h.b16 %v545
      %v585 = vunpack.c.l.b16 %v546
      %v586 = vunpack.c.h.b16 %v546
      %v587 = vunpack.c.l.b16 %v547
      %v588 = vunpack.c.h.b16 %v547
      %v589 = vunpack.c.l.b16 %v548
      %v590 = vunpack.c.h.b16 %v548
      %v591 = vunpack.c.l.b16 %v549
      %v592 = vunpack.c.h.b16 %v549
      %v593 = vunpack.c.l.b16 %v550
      %v594 = vunpack.c.h.b16 %v550
      %v595 = vunpack.c.l.b16 %v551
      %v596 = vunpack.c.h.b16 %v551
      %v597 = vunpack.c.l.b16 %v552
      %v598 = vunpack.c.h.b16 %v552
      %v599 = vunpack.c.l.b16 %v553
      %v600 = vunpack.c.h.b16 %v553
      %v601 = vunpack.c.l.b16 %v554
      %v602 = vunpack.c.h.b16 %v554
      %v603 = vpack.c.b16 %v571, %v571
      %v604 = vpack.c.b16 %v572, %v572
      %v605 = vpack.c.b16 %v573, %v573
      %v606 = vpack.c.b16 %v574, %v574
      %v607 = vpack.c.b16 %v575, %v575
      %v608 = vpack.c.b16 %v576, %v576
      %v609 = vpack.c.b16 %v577, %v577
      %v610 = vpack.c.b16 %v578, %v578
      %v611 = vpack.c.b16 %v579, %v579
      %v612 = vpack.c.b16 %v580, %v580
      %v613 = vpack.c.b16 %v581, %v581
      %v614 = vpack.c.b16 %v582, %v582
      %v615 = vpack.c.b16 %v583, %v583
      %v616 = vpack.c.b16 %v584, %v584
      %v617 = vpack.c.b16 %v585, %v585
      %v618 = vpack.c.b16 %v586, %v586
      %v619 = vpack.c.b16 %v587, %v587
      %v620 = vpack.c.b16 %v588, %v588
      %v621 = vpack.c.b16 %v589, %v589
      %v622 = vpack.c.b16 %v590, %v590
      %v623 = vpack.c.b16 %v591, %v591
      %v624 = vpack.c.b16 %v592, %v592
      %v625 = vpack.c.b16 %v593, %v593
      %v626 = vpack.c.b16 %v594, %v594
      %v627 = vpack.c.b16 %v595, %v595
      %v628 = vpack.c.b16 %v596, %v596
      %v629 = vpack.c.b16 %v597, %v597
      %v630 = vpack.c.b16 %v598, %v598
      %v631 = vpack.c.b16 %v599, %v599
      %v632 = vpack.c.b16 %v600, %v600
      %v633 = vpack.c.b16 %v601, %v601
      %v634 = vpack.c.b16 %v602, %v602
      %667 = vst [vmem:[%s179] sm:$0xf] %v603
      %668 = vst [vmem:[%s179 + $0x4] sm:$0xf] %v604
      %669 = vst [vmem:[%s179 + $0x8] sm:$0xf] %v605
      %670 = vst [vmem:[%s179 + $0xc] sm:$0xf] %v606
      %671 = vst [vmem:[%s179 + $0x10] sm:$0xf] %v607
      %672 = vst [vmem:[%s179 + $0x14] sm:$0xf] %v608
      %673 = vst [vmem:[%s179 + $0x18] sm:$0xf] %v609
      %674 = vst [vmem:[%s179 + $0x1c] sm:$0xf] %v610
      %675 = vst [vmem:[%s179 + $0x20] sm:$0xf] %v611
      %676 = vst [vmem:[%s179 + $0x24] sm:$0xf] %v612
      %677 = vst [vmem:[%s179 + $0x28] sm:$0xf] %v613
      %678 = vst [vmem:[%s179 + $0x2c] sm:$0xf] %v614
      %679 = vst [vmem:[%s179 + $0x30] sm:$0xf] %v615
      %680 = vst [vmem:[%s179 + $0x34] sm:$0xf] %v616
      %681 = vst [vmem:[%s179 + $0x38] sm:$0xf] %v617
      %682 = vst [vmem:[%s179 + $0x3c] sm:$0xf] %v618
      %683 = vst [vmem:[%s179 + $0x40] sm:$0xf] %v619
      %684 = vst [vmem:[%s179 + $0x44] sm:$0xf] %v620
      %685 = vst [vmem:[%s179 + $0x48] sm:$0xf] %v621
      %686 = vst [vmem:[%s179 + $0x4c] sm:$0xf] %v622
      %687 = vst [vmem:[%s179 + $0x50] sm:$0xf] %v623
      %688 = vst [vmem:[%s179 + $0x54] sm:$0xf] %v624
      %689 = vst [vmem:[%s179 + $0x58] sm:$0xf] %v625
      %690 = vst [vmem:[%s179 + $0x5c] sm:$0xf] %v626
      %691 = vst [vmem:[%s179 + $0x60] sm:$0xf] %v627
      %692 = vst [vmem:[%s179 + $0x64] sm:$0xf] %v628
      %693 = vst [vmem:[%s179 + $0x68] sm:$0xf] %v629
      %694 = vst [vmem:[%s179 + $0x6c] sm:$0xf] %v630
      %695 = vst [vmem:[%s179 + $0x70] sm:$0xf] %v631
      %696 = vst [vmem:[%s179 + $0x74] sm:$0xf] %v632
      %697 = vst [vmem:[%s179 + $0x78] sm:$0xf] %v633
      %698 = vst [vmem:[%s179 + $0x7c] sm:$0xf] %v634
      %v699 = vadd.f32 %v413, %v416
      %v700 = vadd.f32 %v699, %v421
      %v701 = vadd.f32 %v700, %v424
      %v702 = vadd.f32 %v701, %v429
      %v703 = vadd.f32 %v702, %v432
      %v704 = vadd.f32 %v703, %v437
      %v705 = vadd.f32 %v704, %v440
      %v706 = vadd.f32 %v705, %v445
      %v707 = vadd.f32 %v706, %v448
      %v708 = vadd.f32 %v707, %v453
      %v709 = vadd.f32 %v708, %v456
      %v710 = vadd.f32 %v709, %v461
      %v711 = vadd.f32 %v710, %v464
      %v712 = vadd.f32 %v711, %v469
      %v713 = vadd.f32 %v712, %v472
      %v714 = vadd.f32 %v713, %v477
      %v715 = vadd.f32 %v714, %v480
      %v716 = vadd.f32 %v715, %v485
      %v717 = vadd.f32 %v716, %v488
      %v718 = vadd.f32 %v717, %v493
      %v719 = vadd.f32 %v718, %v496
      %v720 = vadd.f32 %v719, %v501
      %v721 = vadd.f32 %v720, %v504
      %v722 = vadd.f32 %v721, %v509
      %v723 = vadd.f32 %v722, %v512
      %v724 = vadd.f32 %v723, %v517
      %v725 = vadd.f32 %v724, %v520
      %v726 = vadd.f32 %v725, %v525
      %v727 = vadd.f32 %v726, %v528
      %v728 = vadd.f32 %v727, %v533
      %v729 = vadd.f32 %v728, %v536
      %v730 = vrot.slane %v729, 4
      %v731 = vadd.f32 %v729, %v730
      %v732 = vrot.slane %v731, 2
      %v733 = vadd.f32 %v731, %v732
      %v734 = vrot.slane %v733, 1
      %v735 = vadd.f32 %v733, %v734
      %v736 = vmul.f32 %v413, %v413
      %v737 = vmul.f32 %v416, %v416
      %v738 = vmul.f32 %v421, %v421
      %v739 = vmul.f32 %v424, %v424
      %v740 = vmul.f32 %v429, %v429
      %v741 = vmul.f32 %v432, %v432
      %v742 = vmul.f32 %v437, %v437
      %v743 = vmul.f32 %v440, %v440
      %v744 = vmul.f32 %v445, %v445
      %v745 = vmul.f32 %v448, %v448
      %v746 = vmul.f32 %v453, %v453
      %v747 = vmul.f32 %v456, %v456
      %v748 = vmul.f32 %v461, %v461
      %v749 = vmul.f32 %v464, %v464
      %v750 = vmul.f32 %v469, %v469
      %v751 = vmul.f32 %v472, %v472
      %v752 = vmul.f32 %v477, %v477
      %v753 = vmul.f32 %v480, %v480
      %v754 = vmul.f32 %v485, %v485
      %v755 = vmul.f32 %v488, %v488
      %v756 = vmul.f32 %v493, %v493
      %v757 = vmul.f32 %v496, %v496
      %v758 = vmul.f32 %v501, %v501
      %v759 = vmul.f32 %v504, %v504
      %v760 = vmul.f32 %v509, %v509
      %v761 = vmul.f32 %v512, %v512
      %v762 = vmul.f32 %v517, %v517
      %v763 = vmul.f32 %v520, %v520
      %v764 = vmul.f32 %v525, %v525
      %v765 = vmul.f32 %v528, %v528
      %v766 = vmul.f32 %v533, %v533
      %v767 = vmul.f32 %v536, %v536
      %v768 = vadd.f32 %v736, %v737
      %v769 = vadd.f32 %v768, %v738
      %v770 = vadd.f32 %v769, %v739
      %v771 = vadd.f32 %v770, %v740
      %v772 = vadd.f32 %v771, %v741
      %v773 = vadd.f32 %v772, %v742
      %v774 = vadd.f32 %v773, %v743
      %v775 = vadd.f32 %v774, %v744
      %v776 = vadd.f32 %v775, %v745
      %v777 = vadd.f32 %v776, %v746
      %v778 = vadd.f32 %v777, %v747
      %v779 = vadd.f32 %v778, %v748
      %v780 = vadd.f32 %v779, %v749
      %v781 = vadd.f32 %v780, %v750
      %v782 = vadd.f32 %v781, %v751
      %v783 = vadd.f32 %v782, %v752
      %v784 = vadd.f32 %v783, %v753
      %v785 = vadd.f32 %v784, %v754
      %v786 = vadd.f32 %v785, %v755
      %v787 = vadd.f32 %v786, %v756
      %v788 = vadd.f32 %v787, %v757
      %v789 = vadd.f32 %v788, %v758
      %v790 = vadd.f32 %v789, %v759
      %v791 = vadd.f32 %v790, %v760
      %v792 = vadd.f32 %v791, %v761
      %v793 = vadd.f32 %v792, %v762
      %v794 = vadd.f32 %v793, %v763
      %v795 = vadd.f32 %v794, %v764
      %v796 = vadd.f32 %v795, %v765
      %v797 = vadd.f32 %v796, %v766
      %v798 = vadd.f32 %v797, %v767
      %v799 = vrot.slane %v798, 4
      %v800 = vadd.f32 %v798, %v799
      %v801 = vrot.slane %v800, 2
      %v802 = vadd.f32 %v800, %v801
      %v803 = vrot.slane %v802, 1
      %v804 = vadd.f32 %v802, %v803
      %vm805 = vcmask 1040384
      %v806 = vsel %vm805, %v735, %v804
      %807 = vst [vmem:[%s184] sm:$0x3] %v806
      %s808 = smul.u32 32, %s15
      %p809 = scmp.lt.s32.totalorder %s808, 63
      %s810 = scalar_select %p809, %s808, 63
      %s811 = smul.addr %s810, 4
      %s812 = scalar_lea.vmem %s2, %s811
      %p813 = scmp.lt.s32.totalorder %s15, 1
      %s814 = scalar_select %p813, %s15, 1
      %s815 = smul.addr %s814, 2
      %s816 = scalar_lea.vmem %s3, %s815
      // Predicated region
      $region29: #{bottleneck_forward.4} parent=27 // pred_check
        %p817 = pneg %p80
      $region30: #{bottleneck_forward.4} parent=27 // pred_check_branch
        %819 = sbr.rel (%p817) target = $region32
      $region31: #{bottleneck_forward.4} parent=27 // pred_region
        %s820 = smul.u32 32, %s15
      $region32: #{bottleneck_forward.4} parent=27 // pred_fallthru
        _
      // Predicated region
      $region33: #{bottleneck_forward.4} parent=27 // pred_check
        %p821 = pneg %p106
      $region34: #{bottleneck_forward.4} parent=27 // pred_check_branch
        %823 = sbr.rel (%p821) target = $region36
      $region35: #{bottleneck_forward.4} parent=27 // pred_region
        _
      $region36: #{bottleneck_forward.4} parent=27 // pred_fallthru
        _
    $region28: #{bottleneck_forward.4} parent=5 // pred_fallthru
      _
    %p824 = scmp.le.s32.totalorder 2, %s10
    // Predicated region
    $region37: #{bottleneck_forward.4} parent=5 // pred_check
      %p825 = pneg %p824
    $region38: #{bottleneck_forward.4} parent=5 // pred_check_branch
      %827 = sbr.rel (%p825) target = $region40
    $region39: #{bottleneck_forward.4} parent=5 // pred_region
      %s828 = ssub.s32 %s10, 2
      // Predicated region
      $region41: #{bottleneck_forward.4} parent=39 // pred_check
        %p829 = pneg %p86
      $region42: #{bottleneck_forward.4} parent=39 // pred_check_branch
        %831 = sbr.rel (%p829) target = $region44
      $region43: #{bottleneck_forward.4} parent=39 // pred_region
        %s832 = smul.u32 32, %s16
        %p833 = scmp.lt.s32.totalorder %s832, 63
        %s834 = scalar_select %p833, %s832, 63
        %s835 = smul.addr %s834, 4
        %s836 = scalar_lea.vmem %s2, %s835
      $region44: #{bottleneck_forward.4} parent=39 // pred_fallthru
        _
      // Predicated region
      $region45: #{bottleneck_forward.4} parent=39 // pred_check
        %p837 = pneg %p112
      $region46: #{bottleneck_forward.4} parent=39 // pred_check_branch
        %839 = sbr.rel (%p837) target = $region48
      $region47: #{bottleneck_forward.4} parent=39 // pred_region
        %p840 = scmp.lt.s32.totalorder %s16, 1
        %s841 = scalar_select %p840, %s16, 1
        %s842 = smul.addr %s841, 2
        %s843 = scalar_lea.vmem %s3, %s842
      $region48: #{bottleneck_forward.4} parent=39 // pred_fallthru
        _
    $region40: #{bottleneck_forward.4} parent=5 // pred_fallthru
      _
  $region6: #{bottleneck_forward.4} parent=0 // loop_footer
    %s14 = sadd.s32 1, %s10
  $region7: #{bottleneck_forward.4} parent=0 // loop_footer_branch
    %9 = sbr.rel target = $region3
  $region8: #{bottleneck_forward.4} parent=0 // loop_exit
    _

// kernel: bottleneck_forward.6
$region0: #{bottleneck_forward.6}
  #allocation0 [shape = 'u32[]', space=smem, size = 0x4, offset = 0x4, fixed_abs, tag = 'smem constant byte address 0x4 - core index']
  #allocation1 [shape = 'u32[144,128]{1,0:T(1,128)}', space=vmem, size = 0x12000, scoped, tag = 'internal scratch']
  %s0 = inlined_call_operand.vmem [shape: bf16[512,128], index: 0, kind: input, shape index: {}]
  %s1 = inlined_call_operand.vmem [shape: f32[2,128], index: 1, kind: input, shape index: {}]
  %s2 = inlined_call_operand.vmem [shape: bf16[128,128], index: 2, kind: input, shape index: {}]
  %s3 = inlined_call_operand.vmem [shape: bf16[512,128], index: 3, kind: output, shape index: {0}]
  %s4 = inlined_call_operand.vmem [shape: f32[2,2,128], index: 4, kind: output, shape index: {1}]
  %5 = xla_tuple %s3, %s4
  %s6 = sld [smem:[#allocation0]]
  $region53: #{bottleneck_forward.6} parent=0
    _
  %s8 = ssub.s32 1, %s6
  %s9 = scalar_select 0, %s8, %s6
  loop: start=0, step=1, limit=4
  $region2: #{bottleneck_forward.6} parent=0 // loop_pre_header
    _
  $region3: #{bottleneck_forward.6} parent=0 // loop_header
    %s11 = sphi 0, %s15
    %p12 = scmp.ge.s32.totalorder %s11, 4
    %s21 = sphi 0, %s23
    %s24 = sphi 0, %s21
    %s25 = sphi 0, %s24
    %s41 = sphi 0, %s25
    %s45 = sphi 0, %s45
    %s47 = sphi 0, %s45
    %s48 = sphi 0, %s47
    %s62 = sphi 0, %s48
    %s66 = sphi 0, %s66
    %s68 = sphi 0, %s66
    %s69 = sphi 0, %s68
    %s83 = sphi 0, %s69
    %s89 = sphi 0, %s91
    %s92 = sphi 0, %s89
    %s93 = sphi 0, %s92
    %s109 = sphi 0, %s93
    %s115 = sphi 0, %s117
    %s118 = sphi 0, %s115
    %s119 = sphi 0, %s118
    %s135 = sphi 0, %s119
  $region4: #{bottleneck_forward.6} parent=0 // loop_header_branch
    %14 = sbr.rel (%p12) target = $region8
  $region5: #{bottleneck_forward.6} parent=0 // loop_body
    %s16 = ssub.s32 %s11, 1
    %s17 = ssub.s32 %s11, 2
    %s18 = sadd.s32 %s11, 1
    %s19 = ssub.s32 %s11, %s18
    %p20 = scmp.eq.s32.totalorder %s19, 0
    %s22 = sadd.s32 %s21, 1
    %s23 = scalar_select %p20, %s21, %s22
    %p26 = pneg %p20
    %p27 = scmp.eq.s32.totalorder %s11, 1
    %p28 = por %p26, %p27
    %p29 = scmp.ne.s32.totalorder %s21, %s24
    %p30 = scmp.eq.s32.totalorder %s11, 0
    %p31 = por %p29, %p30
    %p32 = scmp.ne.s32.totalorder %s21, %s24
    %p33 = scmp.eq.s32.totalorder %s16, 1
    %p34 = por %p32, %p33
    %p35 = scmp.ne.s32.totalorder %s24, %s25
    %p36 = scmp.eq.s32.totalorder %s16, 0
    %p37 = por %p35, %p36
    %p38 = scmp.ne.s32.totalorder %s24, %s25
    %p39 = scmp.eq.s32.totalorder %s17, 1
    %p40 = por %p38, %p39
    %p42 = scmp.ne.s32.totalorder %s25, %s41
    %p43 = scmp.eq.s32.totalorder %s17, 0
    %p44 = por %p42, %p43
    %s46 = sadd.s32 %s45, 1
    %p49 = scmp.eq.s32.totalorder %s11, 1
    %p50 = scmp.ne.s32.totalorder %s45, %s47
    %p51 = scmp.eq.s32.totalorder %s11, 0
    %p52 = por %p50, %p51
    %p53 = scmp.ne.s32.totalorder %s45, %s47
    %p54 = scmp.eq.s32.totalorder %s16, 1
    %p55 = por %p53, %p54
    %p56 = scmp.ne.s32.totalorder %s47, %s48
    %p57 = scmp.eq.s32.totalorder %s16, 0
    %p58 = por %p56, %p57
    %p59 = scmp.ne.s32.totalorder %s47, %s48
    %p60 = scmp.eq.s32.totalorder %s17, 1
    %p61 = por %p59, %p60
    %p63 = scmp.ne.s32.totalorder %s48, %s62
    %p64 = scmp.eq.s32.totalorder %s17, 0
    %p65 = por %p63, %p64
    %s67 = sadd.s32 %s66, 1
    %p70 = scmp.eq.s32.totalorder %s11, 1
    %p71 = scmp.ne.s32.totalorder %s66, %s68
    %p72 = scmp.eq.s32.totalorder %s11, 0
    %p73 = por %p71, %p72
    %p74 = scmp.ne.s32.totalorder %s66, %s68
    %p75 = scmp.eq.s32.totalorder %s16, 1
    %p76 = por %p74, %p75
    %p77 = scmp.ne.s32.totalorder %s68, %s69
    %p78 = scmp.eq.s32.totalorder %s16, 0
    %p79 = por %p77, %p78
    %p80 = scmp.ne.s32.totalorder %s68, %s69
    %p81 = scmp.eq.s32.totalorder %s17, 1
    %p82 = por %p80, %p81
    %p84 = scmp.ne.s32.totalorder %s69, %s83
    %p85 = scmp.eq.s32.totalorder %s17, 0
    %p86 = por %p84, %p85
    %s87 = ssub.s32 %s11, %s18
    %p88 = scmp.eq.s32.totalorder %s87, 0
    %s90 = sadd.s32 %s89, 1
    %s91 = scalar_select %p88, %s89, %s90
    %p94 = pneg %p88
    %p95 = scmp.eq.s32.totalorder %s11, 1
    %p96 = por %p94, %p95
    %p97 = scmp.ne.s32.totalorder %s89, %s92
    %p98 = scmp.eq.s32.totalorder %s11, 0
    %p99 = por %p97, %p98
    %p100 = scmp.ne.s32.totalorder %s89, %s92
    %p101 = scmp.eq.s32.totalorder %s16, 1
    %p102 = por %p100, %p101
    %p103 = scmp.ne.s32.totalorder %s92, %s93
    %p104 = scmp.eq.s32.totalorder %s16, 0
    %p105 = por %p103, %p104
    %p106 = scmp.ne.s32.totalorder %s92, %s93
    %p107 = scmp.eq.s32.totalorder %s17, 1
    %p108 = por %p106, %p107
    %p110 = scmp.ne.s32.totalorder %s93, %s109
    %p111 = scmp.eq.s32.totalorder %s17, 0
    %p112 = por %p110, %p111
    %s113 = ssub.s32 %s11, %s18
    %p114 = scmp.eq.s32.totalorder %s113, 0
    %s116 = sadd.s32 %s115, 1
    %s117 = scalar_select %p114, %s115, %s116
    %p120 = pneg %p114
    %p121 = scmp.eq.s32.totalorder %s11, 1
    %p122 = por %p120, %p121
    %p123 = scmp.ne.s32.totalorder %s115, %s118
    %p124 = scmp.eq.s32.totalorder %s11, 0
    %p125 = por %p123, %p124
    %p126 = scmp.ne.s32.totalorder %s115, %s118
    %p127 = scmp.eq.s32.totalorder %s16, 1
    %p128 = por %p126, %p127
    %p129 = scmp.ne.s32.totalorder %s118, %s119
    %p130 = scmp.eq.s32.totalorder %s16, 0
    %p131 = por %p129, %p130
    %p132 = scmp.ne.s32.totalorder %s118, %s119
    %p133 = scmp.eq.s32.totalorder %s17, 1
    %p134 = por %p132, %p133
    %p136 = scmp.ne.s32.totalorder %s119, %s135
    %p137 = scmp.eq.s32.totalorder %s17, 0
    %p138 = por %p136, %p137
    %p139 = scmp.le.s32.totalorder 1, %s11
    %p140 = scmp.lt.s32.totalorder %s11, 3
    %p141 = pnand %p139, %p140
    %p142 = pneg %p141
    // Predicated region
    $region9: #{bottleneck_forward.6} parent=5 // pred_check
      _
    $region10: #{bottleneck_forward.6} parent=5 // pred_check_branch
      %144 = sbr.rel (%p141) target = $region12
    $region11: #{bottleneck_forward.6} parent=5 // pred_region
      %s145 = ssub.s32 %s11, 1
      // Predicated region
      $region13: #{bottleneck_forward.6} parent=11 // pred_check
        %p146 = pneg %p58
      $region14: #{bottleneck_forward.6} parent=11 // pred_check_branch
        %148 = sbr.rel (%p146) target = $region16
      $region15: #{bottleneck_forward.6} parent=11 // pred_region
        _
      $region16: #{bottleneck_forward.6} parent=11 // pred_fallthru
        _
      // Predicated region
      $region17: #{bottleneck_forward.6} parent=11 // pred_check
        %p149 = pneg %p79
      $region18: #{bottleneck_forward.6} parent=11 // pred_check_branch
        %151 = sbr.rel (%p149) target = $region20
      $region19: #{bottleneck_forward.6} parent=11 // pred_region
        _
      $region20: #{bottleneck_forward.6} parent=11 // pred_fallthru
        _
    $region12: #{bottleneck_forward.6} parent=5 // pred_fallthru
      _
    %p152 = scmp.lt.s32.totalorder %s11, 2
    // Predicated region
    $region21: #{bottleneck_forward.6} parent=5 // pred_check
      %p153 = pneg %p152
    $region22: #{bottleneck_forward.6} parent=5 // pred_check_branch
      %155 = sbr.rel (%p153) target = $region24
    $region23: #{bottleneck_forward.6} parent=5 // pred_region
      // Predicated region
      $region25: #{bottleneck_forward.6} parent=23 // pred_check
        %p156 = pneg %p31
      $region26: #{bottleneck_forward.6} parent=23 // pred_check_branch
        %158 = sbr.rel (%p156) target = $region28
      $region27: #{bottleneck_forward.6} parent=23 // pred_region
        %s159 = smul.u32 32, %s11
        %p160 = scmp.lt.s32.totalorder %s159, 63
        %s161 = scalar_select %p160, %s159, 63
        %s162 = smul.addr %s161, 4
        %s163 = scalar_lea.vmem %s0, %s162
        %s164 = smul.u32 32, %s11
      $region28: #{bottleneck_forward.6} parent=23 // pred_fallthru
        _
    $region24: #{bottleneck_forward.6} parent=5 // pred_fallthru
      _
    %p165 = scmp.le.s32.totalorder 1, %s11
    %p166 = scmp.lt.s32.totalorder %s11, 3
    %p167 = pnand %p165, %p166
    %p168 = pneg %p167
    // Predicated region
    $region29: #{bottleneck_forward.6} parent=5 // pred_check
      _
    $region30: #{bottleneck_forward.6} parent=5 // pred_check_branch
      %170 = sbr.rel (%p167) target = $region32
    $region31: #{bottleneck_forward.6} parent=5 // pred_region
      %s171 = ssub.s32 %s11, 1
      %s172 = smul.u32 32, %s16
      %p173 = scmp.lt.s32.totalorder %s172, 63
      %s174 = scalar_select %p173, %s172, 63
      %s175 = smul.addr %s174, 4
      %s176 = scalar_lea.vmem %s0, %s175
      %p177 = pneg %p37
      %p178 = pneg %p34
      %p179 = pneg %p58
      %p180 = pneg %p55
      %p181 = pneg %p79
      %p182 = pneg %p76
      %p183 = pneg %p105
      %p184 = pneg %p102
      %s185 = smul.u32 32, %s16
      %p186 = scmp.lt.s32.totalorder %s185, 63
      %s187 = scalar_select %p186, %s185, 63
      %s188 = smul.addr %s187, 4
      %s189 = scalar_lea.vmem %s3, %s188
      %p190 = pneg %p131
      %p191 = pneg %p128
      %p192 = scmp.lt.s32.totalorder %s16, 1
      %s193 = scalar_select %p192, %s16, 1
      %s194 = smul.addr %s193, 2
      %s195 = scalar_lea.vmem %s4, %s194
      %s196 = smul.u32 32, %s16
      %p197 = scmp.lt.s32.totalorder %s196, 63
      %s198 = scalar_select %p197, %s196, 63
      %s199 = smul.addr %s198, 4
      %s200 = scalar_lea.vmem %s0, %s199
      %s201 = smul.u32 32, %s16
      %s202 = smul.u32 32, %s16
      %p203 = scmp.lt.s32.totalorder %s202, 63
      %s204 = scalar_select %p203, %s202, 63
      %s205 = smul.addr %s204, 4
      %s206 = scalar_lea.vmem %s3, %s205
      %s207 = smul.u32 32, %s16
      %p208 = scmp.lt.s32.totalorder %s16, 1
      %s209 = scalar_select %p208, %s16, 1
      %s210 = smul.addr %s209, 2
      %s211 = scalar_lea.vmem %s4, %s210
      %v213 = vld [vmem:[%s200] sm:$0xf]
      %v214 = vld [vmem:[%s200 + $0x4] sm:$0xf]
      %v215 = vld [vmem:[%s200 + $0x8] sm:$0xf]
      %v216 = vld [vmem:[%s200 + $0xc] sm:$0xf]
      %v217 = vld [vmem:[%s200 + $0x10] sm:$0xf]
      %v218 = vld [vmem:[%s200 + $0x14] sm:$0xf]
      %v219 = vld [vmem:[%s200 + $0x18] sm:$0xf]
      %v220 = vld [vmem:[%s200 + $0x1c] sm:$0xf]
      %v221 = vld [vmem:[%s200 + $0x20] sm:$0xf]
      %v222 = vld [vmem:[%s200 + $0x24] sm:$0xf]
      %v223 = vld [vmem:[%s200 + $0x28] sm:$0xf]
      %v224 = vld [vmem:[%s200 + $0x2c] sm:$0xf]
      %v225 = vld [vmem:[%s200 + $0x30] sm:$0xf]
      %v226 = vld [vmem:[%s200 + $0x34] sm:$0xf]
      %v227 = vld [vmem:[%s200 + $0x38] sm:$0xf]
      %v228 = vld [vmem:[%s200 + $0x3c] sm:$0xf]
      %v229 = vld [vmem:[%s200 + $0x40] sm:$0xf]
      %v230 = vld [vmem:[%s200 + $0x44] sm:$0xf]
      %v231 = vld [vmem:[%s200 + $0x48] sm:$0xf]
      %v232 = vld [vmem:[%s200 + $0x4c] sm:$0xf]
      %v233 = vld [vmem:[%s200 + $0x50] sm:$0xf]
      %v234 = vld [vmem:[%s200 + $0x54] sm:$0xf]
      %v235 = vld [vmem:[%s200 + $0x58] sm:$0xf]
      %v236 = vld [vmem:[%s200 + $0x5c] sm:$0xf]
      %v237 = vld [vmem:[%s200 + $0x60] sm:$0xf]
      %v238 = vld [vmem:[%s200 + $0x64] sm:$0xf]
      %v239 = vld [vmem:[%s200 + $0x68] sm:$0xf]
      %v240 = vld [vmem:[%s200 + $0x6c] sm:$0xf]
      %v241 = vld [vmem:[%s200 + $0x70] sm:$0xf]
      %v242 = vld [vmem:[%s200 + $0x74] sm:$0xf]
      %v243 = vld [vmem:[%s200 + $0x78] sm:$0xf]
      %v244 = vld [vmem:[%s200 + $0x7c] sm:$0xf]
      %v245 = vunpack.c.l.bf16 %v213
      %v246 = vunpack.c.l.bf16 %v214
      %v247 = vunpack.c.l.bf16 %v215
      %v248 = vunpack.c.l.bf16 %v216
      %v249 = vunpack.c.l.bf16 %v217
      %v250 = vunpack.c.l.bf16 %v218
      %v251 = vunpack.c.l.bf16 %v219
      %v252 = vunpack.c.l.bf16 %v220
      %v253 = vunpack.c.l.bf16 %v221
      %v254 = vunpack.c.l.bf16 %v222
      %v255 = vunpack.c.l.bf16 %v223
      %v256 = vunpack.c.l.bf16 %v224
      %v257 = vunpack.c.l.bf16 %v225
      %v258 = vunpack.c.l.bf16 %v226
      %v259 = vunpack.c.l.bf16 %v227
      %v260 = vunpack.c.l.bf16 %v228
      %v261 = vunpack.c.l.bf16 %v229
      %v262 = vunpack.c.l.bf16 %v230
      %v263 = vunpack.c.l.bf16 %v231
      %v264 = vunpack.c.l.bf16 %v232
      %v265 = vunpack.c.l.bf16 %v233
      %v266 = vunpack.c.l.bf16 %v234
      %v267 = vunpack.c.l.bf16 %v235
      %v268 = vunpack.c.l.bf16 %v236
      %v269 = vunpack.c.l.bf16 %v237
      %v270 = vunpack.c.l.bf16 %v238
      %v271 = vunpack.c.l.bf16 %v239
      %v272 = vunpack.c.l.bf16 %v240
      %v273 = vunpack.c.l.bf16 %v241
      %v274 = vunpack.c.l.bf16 %v242
      %v275 = vunpack.c.l.bf16 %v243
      %v276 = vunpack.c.l.bf16 %v244
      %v277 = vld [vmem:[%s1] sm:$0x1]
      %v278 = vlaneseq
      %v279 = vshrl.u32 %v278, 7
      %v280 = vsub.s32 0, %v279
      %v281 = vrot.slane %v277, %v280
      %v282 = vmul.f32 %v245, %v281
      %v283 = vmul.f32 %v246, %v281
      %v284 = vmul.f32 %v247, %v281
      %v285 = vmul.f32 %v248, %v281
      %v286 = vmul.f32 %v249, %v281
      %v287 = vmul.f32 %v250, %v281
      %v288 = vmul.f32 %v251, %v281
      %v289 = vmul.f32 %v252, %v281
      %v290 = vmul.f32 %v253, %v281
      %v291 = vmul.f32 %v254, %v281
      %v292 = vmul.f32 %v255, %v281
      %v293 = vmul.f32 %v256, %v281
      %v294 = vmul.f32 %v257, %v281
      %v295 = vmul.f32 %v258, %v281
      %v296 = vmul.f32 %v259, %v281
      %v297 = vmul.f32 %v260, %v281
      %v298 = vmul.f32 %v261, %v281
      %v299 = vmul.f32 %v262, %v281
      %v300 = vmul.f32 %v263, %v281
      %v301 = vmul.f32 %v264, %v281
      %v302 = vmul.f32 %v265, %v281
      %v303 = vmul.f32 %v266, %v281
      %v304 = vmul.f32 %v267, %v281
      %v305 = vmul.f32 %v268, %v281
      %v306 = vmul.f32 %v269, %v281
      %v307 = vmul.f32 %v270, %v281
      %v308 = vmul.f32 %v271, %v281
      %v309 = vmul.f32 %v272, %v281
      %v310 = vmul.f32 %v273, %v281
      %v311 = vmul.f32 %v274, %v281
      %v312 = vmul.f32 %v275, %v281
      %v313 = vmul.f32 %v276, %v281
      %v314 = vld [vmem:[%s1 + $0x1] sm:$0x1]
      %v315 = vlaneseq
      %v316 = vshrl.u32 %v315, 7
      %v317 = vsub.s32 0, %v316
      %v318 = vrot.slane %v314, %v317
      %v319 = vadd.f32 %v282, %v318
      %v320 = vadd.f32 %v283, %v318
      %v321 = vadd.f32 %v284, %v318
      %v322 = vadd.f32 %v285, %v318
      %v323 = vadd.f32 %v286, %v318
      %v324 = vadd.f32 %v287, %v318
      %v325 = vadd.f32 %v288, %v318
      %v326 = vadd.f32 %v289, %v318
      %v327 = vadd.f32 %v290, %v318
      %v328 = vadd.f32 %v291, %v318
      %v329 = vadd.f32 %v292, %v318
      %v330 = vadd.f32 %v293, %v318
      %v331 = vadd.f32 %v294, %v318
      %v332 = vadd.f32 %v295, %v318
      %v333 = vadd.f32 %v296, %v318
      %v334 = vadd.f32 %v297, %v318
      %v335 = vadd.f32 %v298, %v318
      %v336 = vadd.f32 %v299, %v318
      %v337 = vadd.f32 %v300, %v318
      %v338 = vadd.f32 %v301, %v318
      %v339 = vadd.f32 %v302, %v318
      %v340 = vadd.f32 %v303, %v318
      %v341 = vadd.f32 %v304, %v318
      %v342 = vadd.f32 %v305, %v318
      %v343 = vadd.f32 %v306, %v318
      %v344 = vadd.f32 %v307, %v318
      %v345 = vadd.f32 %v308, %v318
      %v346 = vadd.f32 %v309, %v318
      %v347 = vadd.f32 %v310, %v318
      %v348 = vadd.f32 %v311, %v318
      %v349 = vadd.f32 %v312, %v318
      %v350 = vadd.f32 %v313, %v318
      %v351 = vmax.f32 %v319, 0.0
      %v352 = vmax.f32 %v320, 0.0
      %v353 = vmax.f32 %v321, 0.0
      %v354 = vmax.f32 %v322, 0.0
      %v355 = vmax.f32 %v323, 0.0
      %v356 = vmax.f32 %v324, 0.0
      %v357 = vmax.f32 %v325, 0.0
      %v358 = vmax.f32 %v326, 0.0
      %v359 = vmax.f32 %v327, 0.0
      %v360 = vmax.f32 %v328, 0.0
      %v361 = vmax.f32 %v329, 0.0
      %v362 = vmax.f32 %v330, 0.0
      %v363 = vmax.f32 %v331, 0.0
      %v364 = vmax.f32 %v332, 0.0
      %v365 = vmax.f32 %v333, 0.0
      %v366 = vmax.f32 %v334, 0.0
      %v367 = vmax.f32 %v335, 0.0
      %v368 = vmax.f32 %v336, 0.0
      %v369 = vmax.f32 %v337, 0.0
      %v370 = vmax.f32 %v338, 0.0
      %v371 = vmax.f32 %v339, 0.0
      %v372 = vmax.f32 %v340, 0.0
      %v373 = vmax.f32 %v341, 0.0
      %v374 = vmax.f32 %v342, 0.0
      %v375 = vmax.f32 %v343, 0.0
      %v376 = vmax.f32 %v344, 0.0
      %v377 = vmax.f32 %v345, 0.0
      %v378 = vmax.f32 %v346, 0.0
      %v379 = vmax.f32 %v347, 0.0
      %v380 = vmax.f32 %v348, 0.0
      %v381 = vmax.f32 %v349, 0.0
      %v382 = vmax.f32 %v350, 0.0
      %v383 = vpack.c.bf16 %v352, %v351
      %v384 = vpack.c.bf16 %v354, %v353
      %v385 = vpack.c.bf16 %v356, %v355
      %v386 = vpack.c.bf16 %v358, %v357
      %v387 = vpack.c.bf16 %v360, %v359
      %v388 = vpack.c.bf16 %v362, %v361
      %v389 = vpack.c.bf16 %v364, %v363
      %v390 = vpack.c.bf16 %v366, %v365
      %v391 = vpack.c.bf16 %v368, %v367
      %v392 = vpack.c.bf16 %v370, %v369
      %v393 = vpack.c.bf16 %v372, %v371
      %v394 = vpack.c.bf16 %v374, %v373
      %v395 = vpack.c.bf16 %v376, %v375
      %v396 = vpack.c.bf16 %v378, %v377
      %v397 = vpack.c.bf16 %v380, %v379
      %v398 = vpack.c.bf16 %v382, %v381
      %v399 = vld [vmem:[%s2] sm:$0xf]
      %v400 = vld [vmem:[%s2 + $0x4] sm:$0xf]
      %v401 = vld [vmem:[%s2 + $0x8] sm:$0xf]
      %v402 = vld [vmem:[%s2 + $0xc] sm:$0xf]
      %v403 = vld [vmem:[%s2 + $0x10] sm:$0xf]
      %v404 = vld [vmem:[%s2 + $0x14] sm:$0xf]
      %v405 = vld [vmem:[%s2 + $0x18] sm:$0xf]
      %v406 = vld [vmem:[%s2 + $0x1c] sm:$0xf]
      %v407 = vld [vmem:[%s2 + $0x20] sm:$0xf]
      %v408 = vld [vmem:[%s2 + $0x24] sm:$0xf]
      %v409 = vld [vmem:[%s2 + $0x28] sm:$0xf]
      %v410 = vld [vmem:[%s2 + $0x2c] sm:$0xf]
      %v411 = vld [vmem:[%s2 + $0x30] sm:$0xf]
      %v412 = vld [vmem:[%s2 + $0x34] sm:$0xf]
      %v413 = vld [vmem:[%s2 + $0x38] sm:$0xf]
      %v414 = vld [vmem:[%s2 + $0x3c] sm:$0xf]
      %v431 = vunpack.c.l.b16 %v399
      %v432 = vunpack.c.l.b16 %v400
      %v433 = vunpack.c.l.b16 %v401
      %v434 = vunpack.c.l.b16 %v402
      %v435 = vunpack.c.l.b16 %v403
      %v436 = vunpack.c.l.b16 %v404
      %v437 = vunpack.c.l.b16 %v405
      %v438 = vunpack.c.l.b16 %v406
      %v439 = vunpack.c.l.b16 %v407
      %v440 = vunpack.c.l.b16 %v408
      %v441 = vunpack.c.l.b16 %v409
      %v442 = vunpack.c.l.b16 %v410
      %v443 = vunpack.c.l.b16 %v411
      %v444 = vunpack.c.l.b16 %v412
      %v445 = vunpack.c.l.b16 %v413
      %v446 = vunpack.c.l.b16 %v414
      %v447 = vpack.c.b16 %v432, %v431
      %v448 = vpack.c.b16 %v434, %v433
      %v449 = vpack.c.b16 %v436, %v435
      %v450 = vpack.c.b16 %v438, %v437
      %v451 = vpack.c.b16 %v440, %v439
      %v452 = vpack.c.b16 %v442, %v441
      %v453 = vpack.c.b16 %v444, %v443
      %v454 = vpack.c.b16 %v446, %v445
      %463 = vmatprep.subr.bf16.mxu0 0
      %464 = vmatpush1.bf16.msra.mxu0 %v447
      %465 = vmatprep.subr.bf16.mxu0 0
      %466 = vmatpush1.bf16.msra.mxu0 %v448
      %467 = vmatprep.subr.bf16.mxu0 0
      %468 = vmatpush1.bf16.msra.mxu0 %v449
      %469 = vmatprep.subr.bf16.mxu0 0
      %470 = vmatpush1.bf16.msra.mxu0 %v450
      %471 = vmatprep.subr.bf16.mxu0 0
      %472 = vmatpush1.bf16.msra.mxu0 %v451
      %473 = vmatprep.subr.bf16.mxu0 0
      %474 = vmatpush1.bf16.msra.mxu0 %v452
      %475 = vmatprep.subr.bf16.mxu0 0
      %476 = vmatpush1.bf16.msra.mxu0 %v453
      %477 = vmatprep.subr.bf16.mxu0 0
      %478 = vmatpush1.bf16.msra.mxu0 %v454
      %479 = vmatprep.subr.bf16.mxu0 0
      %480 = vmatpush1.bf16.msra.mxu0 0
      %481 = vmatprep.subr.bf16.mxu0 0
      %482 = vmatpush1.bf16.msra.mxu0 0
      %483 = vmatprep.subr.bf16.mxu0 0
      %484 = vmatpush1.bf16.msra.mxu0 0
      %485 = vmatprep.subr.bf16.mxu0 0
      %486 = vmatpush1.bf16.msra.mxu0 0
      %487 = vmatprep.subr.bf16.mxu0 0
      %488 = vmatpush1.bf16.msra.mxu0 0
      %489 = vmatprep.subr.bf16.mxu0 0
      %490 = vmatpush1.bf16.msra.mxu0 0
      %491 = vmatprep.subr.bf16.mxu0 0
      %492 = vmatpush1.bf16.msra.mxu0 0
      %493 = vmatprep.subr.bf16.mxu0 0
      %494 = vmatpush1.bf16.msra.mxu0 0
      %495 = vmatprep.mubr.bf16.mxu0 0
      %496 = vmatmul.mubr.bf16.gmra.mrb[0].mxu0 %v383
      %v497 = vpop.f32.mrb[0].mxu0
      %v498 = vadd.f32 0.0, %v497
      %v499 = vpop.f32.mrb[0].mxu0
      %v500 = vpop.f32.mrb[0].mxu0
      %v501 = vadd.f32 0.0, %v500
      %v502 = vpop.f32.mrb[0].mxu0
      %503 = vmatprep.mubr.bf16.mxu0 0
      %504 = vmatmul.mubr.bf16.gmra.mrb[0].mxu0 %v384
      %v505 = vpop.f32.mrb[0].mxu0
      %v506 = vadd.f32 0.0, %v505
      %v507 = vpop.f32.mrb[0].mxu0
      %v508 = vpop.f32.mrb[0].mxu0
      %v509 = vadd.f32 0.0, %v508
      %v510 = vpop.f32.mrb[0].mxu0
      %511 = vmatprep.mubr.bf16.mxu0 0
      %512 = vmatmul.mubr.bf16.gmra.mrb[0].mxu0 %v385
      %v513 = vpop.f32.mrb[0].mxu0
      %v514 = vadd.f32 0.0, %v513
      %v515 = vpop.f32.mrb[0].mxu0
      %v516 = vpop.f32.mrb[0].mxu0
      %v517 = vadd.f32 0.0, %v516
      %v518 = vpop.f32.mrb[0].mxu0
      %519 = vmatprep.mubr.bf16.mxu0 0
      %520 = vmatmul.mubr.bf16.gmra.mrb[0].mxu0 %v386
      %v521 = vpop.f32.mrb[0].mxu0
      %v522 = vadd.f32 0.0, %v521
      %v523 = vpop.f32.mrb[0].mxu0
      %v524 = vpop.f32.mrb[0].mxu0
      %v525 = vadd.f32 0.0, %v524
      %v526 = vpop.f32.mrb[0].mxu0
      %527 = vmatprep.mubr.bf16.mxu0 0
      %528 = vmatmul.mubr.bf16.gmra.mrb[0].mxu0 %v387
      %v529 = vpop.f32.mrb[0].mxu0
      %v530 = vadd.f32 0.0, %v529
      %v531 = vpop.f32.mrb[0].mxu0
      %v532 = vpop.f32.mrb[0].mxu0
      %v533 = vadd.f32 0.0, %v532
      %v534 = vpop.f32.mrb[0].mxu0
      %535 = vmatprep.mubr.bf16.mxu0 0
      %536 = vmatmul.mubr.bf16.gmra.mrb[0].mxu0 %v388
      %v537 = vpop.f32.mrb[0].mxu0
      %v538 = vadd.f32 0.0, %v537
      %v539 = vpop.f32.mrb[0].mxu0
      %v540 = vpop.f32.mrb[0].mxu0
      %v541 = vadd.f32 0.0, %v540
      %v542 = vpop.f32.mrb[0].mxu0
      %543 = vmatprep.mubr.bf16.mxu0 0
      %544 = vmatmul.mubr.bf16.gmra.mrb[0].mxu0 %v389
      %v545 = vpop.f32.mrb[0].mxu0
      %v546 = vadd.f32 0.0, %v545
      %v547 = vpop.f32.mrb[0].mxu0
      %v548 = vpop.f32.mrb[0].mxu0
      %v549 = vadd.f32 0.0, %v548
      %v550 = vpop.f32.mrb[0].mxu0
      %551 = vmatprep.mubr.bf16.mxu0 0
      %552 = vmatmul.mubr.bf16.gmra.mrb[0].mxu0 %v390
      %v553 = vpop.f32.mrb[0].mxu0
      %v554 = vadd.f32 0.0, %v553
      %v555 = vpop.f32.mrb[0].mxu0
      %v556 = vpop.f32.mrb[0].mxu0
      %v557 = vadd.f32 0.0, %v556
      %v558 = vpop.f32.mrb[0].mxu0
      %559 = vmatprep.mubr.bf16.mxu0 0
      %560 = vmatmul.mubr.bf16.gmra.mrb[0].mxu0 %v391
      %v561 = vpop.f32.mrb[0].mxu0
      %v562 = vadd.f32 0.0, %v561
      %v563 = vpop.f32.mrb[0].mxu0
      %v564 = vpop.f32.mrb[0].mxu0
      %v565 = vadd.f32 0.0, %v564
      %v566 = vpop.f32.mrb[0].mxu0
      %567 = vmatprep.mubr.bf16.mxu0 0
      %568 = vmatmul.mubr.bf16.gmra.mrb[0].mxu0 %v392
      %v569 = vpop.f32.mrb[0].mxu0
      %v570 = vadd.f32 0.0, %v569
      %v571 = vpop.f32.mrb[0].mxu0
      %v572 = vpop.f32.mrb[0].mxu0
      %v573 = vadd.f32 0.0, %v572
      %v574 = vpop.f32.mrb[0].mxu0
      %575 = vmatprep.mubr.bf16.mxu0 0
      %576 = vmatmul.mubr.bf16.gmra.mrb[0].mxu0 %v393
      %v577 = vpop.f32.mrb[0].mxu0
      %v578 = vadd.f32 0.0, %v577
      %v579 = vpop.f32.mrb[0].mxu0
      %v580 = vpop.f32.mrb[0].mxu0
      %v581 = vadd.f32 0.0, %v580
      %v582 = vpop.f32.mrb[0].mxu0
      %583 = vmatprep.mubr.bf16.mxu0 0
      %584 = vmatmul.mubr.bf16.gmra.mrb[0].mxu0 %v394
      %v585 = vpop.f32.mrb[0].mxu0
      %v586 = vadd.f32 0.0, %v585
      %v587 = vpop.f32.mrb[0].mxu0
      %v588 = vpop.f32.mrb[0].mxu0
      %v589 = vadd.f32 0.0, %v588
      %v590 = vpop.f32.mrb[0].mxu0
      %591 = vmatprep.mubr.bf16.mxu0 0
      %592 = vmatmul.mubr.bf16.gmra.mrb[0].mxu0 %v395
      %v593 = vpop.f32.mrb[0].mxu0
      %v594 = vadd.f32 0.0, %v593
      %v595 = vpop.f32.mrb[0].mxu0
      %v596 = vpop.f32.mrb[0].mxu0
      %v597 = vadd.f32 0.0, %v596
      %v598 = vpop.f32.mrb[0].mxu0
      %599 = vmatprep.mubr.bf16.mxu0 0
      %600 = vmatmul.mubr.bf16.gmra.mrb[0].mxu0 %v396
      %v601 = vpop.f32.mrb[0].mxu0
      %v602 = vadd.f32 0.0, %v601
      %v603 = vpop.f32.mrb[0].mxu0
      %v604 = vpop.f32.mrb[0].mxu0
      %v605 = vadd.f32 0.0, %v604
      %v606 = vpop.f32.mrb[0].mxu0
      %607 = vmatprep.mubr.bf16.mxu0 0
      %608 = vmatmul.mubr.bf16.gmra.mrb[0].mxu0 %v397
      %v609 = vpop.f32.mrb[0].mxu0
      %v610 = vadd.f32 0.0, %v609
      %v611 = vpop.f32.mrb[0].mxu0
      %v612 = vpop.f32.mrb[0].mxu0
      %v613 = vadd.f32 0.0, %v612
      %v614 = vpop.f32.mrb[0].mxu0
      %615 = vmatprep.mubr.bf16.mxu0 0
      %616 = vmatmul.mubr.bf16.gmra.mrb[0].mxu0 %v398
      %v617 = vpop.f32.mrb[0].mxu0
      %v618 = vadd.f32 0.0, %v617
      %v619 = vpop.f32.mrb[0].mxu0
      %v620 = vpop.f32.mrb[0].mxu0
      %v621 = vadd.f32 0.0, %v620
      %v622 = vpop.f32.mrb[0].mxu0
      %623 = vdwg.mxu0
      %v624 = vpack.c.bf16 %v501, %v498
      %v625 = vpack.c.bf16 %v509, %v506
      %v626 = vpack.c.bf16 %v517, %v514
      %v627 = vpack.c.bf16 %v525, %v522
      %v628 = vpack.c.bf16 %v533, %v530
      %v629 = vpack.c.bf16 %v541, %v538
      %v630 = vpack.c.bf16 %v549, %v546
      %v631 = vpack.c.bf16 %v557, %v554
      %v632 = vpack.c.bf16 %v565, %v562
      %v633 = vpack.c.bf16 %v573, %v570
      %v634 = vpack.c.bf16 %v581, %v578
      %v635 = vpack.c.bf16 %v589, %v586
      %v636 = vpack.c.bf16 %v597, %v594
      %v637 = vpack.c.bf16 %v605, %v602
      %v638 = vpack.c.bf16 %v613, %v610
      %v639 = vpack.c.bf16 %v621, %v618
      %v656 = vunpack.c.l.b16 %v624
      %v657 = vunpack.c.h.b16 %v624
      %v658 = vunpack.c.l.b16 %v625
      %v659 = vunpack.c.h.b16 %v625
      %v660 = vunpack.c.l.b16 %v626
      %v661 = vunpack.c.h.b16 %v626
      %v662 = vunpack.c.l.b16 %v627
      %v663 = vunpack.c.h.b16 %v627
      %v664 = vunpack.c.l.b16 %v628
      %v665 = vunpack.c.h.b16 %v628
      %v666 = vunpack.c.l.b16 %v629
      %v667 = vunpack.c.h.b16 %v629
      %v668 = vunpack.c.l.b16 %v630
      %v669 = vunpack.c.h.b16 %v630
      %v670 = vunpack.c.l.b16 %v631
      %v671 = vunpack.c.h.b16 %v631
      %v672 = vunpack.c.l.b16 %v632
      %v673 = vunpack.c.h.b16 %v632
      %v674 = vunpack.c.l.b16 %v633
      %v675 = vunpack.c.h.b16 %v633
      %v676 = vunpack.c.l.b16 %v634
      %v677 = vunpack.c.h.b16 %v634
      %v678 = vunpack.c.l.b16 %v635
      %v679 = vunpack.c.h.b16 %v635
      %v680 = vunpack.c.l.b16 %v636
      %v681 = vunpack.c.h.b16 %v636
      %v682 = vunpack.c.l.b16 %v637
      %v683 = vunpack.c.h.b16 %v637
      %v684 = vunpack.c.l.b16 %v638
      %v685 = vunpack.c.h.b16 %v638
      %v686 = vunpack.c.l.b16 %v639
      %v687 = vunpack.c.h.b16 %v639
      %v688 = vpack.c.b16 %v656, %v656
      %v689 = vpack.c.b16 %v657, %v657
      %v690 = vpack.c.b16 %v658, %v658
      %v691 = vpack.c.b16 %v659, %v659
      %v692 = vpack.c.b16 %v660, %v660
      %v693 = vpack.c.b16 %v661, %v661
      %v694 = vpack.c.b16 %v662, %v662
      %v695 = vpack.c.b16 %v663, %v663
      %v696 = vpack.c.b16 %v664, %v664
      %v697 = vpack.c.b16 %v665, %v665
      %v698 = vpack.c.b16 %v666, %v666
      %v699 = vpack.c.b16 %v667, %v667
      %v700 = vpack.c.b16 %v668, %v668
      %v701 = vpack.c.b16 %v669, %v669
      %v702 = vpack.c.b16 %v670, %v670
      %v703 = vpack.c.b16 %v671, %v671
      %v704 = vpack.c.b16 %v672, %v672
      %v705 = vpack.c.b16 %v673, %v673
      %v706 = vpack.c.b16 %v674, %v674
      %v707 = vpack.c.b16 %v675, %v675
      %v708 = vpack.c.b16 %v676, %v676
      %v709 = vpack.c.b16 %v677, %v677
      %v710 = vpack.c.b16 %v678, %v678
      %v711 = vpack.c.b16 %v679, %v679
      %v712 = vpack.c.b16 %v680, %v680
      %v713 = vpack.c.b16 %v681, %v681
      %v714 = vpack.c.b16 %v682, %v682
      %v715 = vpack.c.b16 %v683, %v683
      %v716 = vpack.c.b16 %v684, %v684
      %v717 = vpack.c.b16 %v685, %v685
      %v718 = vpack.c.b16 %v686, %v686
      %v719 = vpack.c.b16 %v687, %v687
      %752 = vst [vmem:[%s206] sm:$0xf] %v688
      %753 = vst [vmem:[%s206 + $0x4] sm:$0xf] %v689
      %754 = vst [vmem:[%s206 + $0x8] sm:$0xf] %v690
      %755 = vst [vmem:[%s206 + $0xc] sm:$0xf] %v691
      %756 = vst [vmem:[%s206 + $0x10] sm:$0xf] %v692
      %757 = vst [vmem:[%s206 + $0x14] sm:$0xf] %v693
      %758 = vst [vmem:[%s206 + $0x18] sm:$0xf] %v694
      %759 = vst [vmem:[%s206 + $0x1c] sm:$0xf] %v695
      %760 = vst [vmem:[%s206 + $0x20] sm:$0xf] %v696
      %761 = vst [vmem:[%s206 + $0x24] sm:$0xf] %v697
      %762 = vst [vmem:[%s206 + $0x28] sm:$0xf] %v698
      %763 = vst [vmem:[%s206 + $0x2c] sm:$0xf] %v699
      %764 = vst [vmem:[%s206 + $0x30] sm:$0xf] %v700
      %765 = vst [vmem:[%s206 + $0x34] sm:$0xf] %v701
      %766 = vst [vmem:[%s206 + $0x38] sm:$0xf] %v702
      %767 = vst [vmem:[%s206 + $0x3c] sm:$0xf] %v703
      %768 = vst [vmem:[%s206 + $0x40] sm:$0xf] %v704
      %769 = vst [vmem:[%s206 + $0x44] sm:$0xf] %v705
      %770 = vst [vmem:[%s206 + $0x48] sm:$0xf] %v706
      %771 = vst [vmem:[%s206 + $0x4c] sm:$0xf] %v707
      %772 = vst [vmem:[%s206 + $0x50] sm:$0xf] %v708
      %773 = vst [vmem:[%s206 + $0x54] sm:$0xf] %v709
      %774 = vst [vmem:[%s206 + $0x58] sm:$0xf] %v710
      %775 = vst [vmem:[%s206 + $0x5c] sm:$0xf] %v711
      %776 = vst [vmem:[%s206 + $0x60] sm:$0xf] %v712
      %777 = vst [vmem:[%s206 + $0x64] sm:$0xf] %v713
      %778 = vst [vmem:[%s206 + $0x68] sm:$0xf] %v714
      %779 = vst [vmem:[%s206 + $0x6c] sm:$0xf] %v715
      %780 = vst [vmem:[%s206 + $0x70] sm:$0xf] %v716
      %781 = vst [vmem:[%s206 + $0x74] sm:$0xf] %v717
      %782 = vst [vmem:[%s206 + $0x78] sm:$0xf] %v718
      %783 = vst [vmem:[%s206 + $0x7c] sm:$0xf] %v719
      %v784 = vadd.f32 %v498, %v501
      %v785 = vadd.f32 %v784, %v506
      %v786 = vadd.f32 %v785, %v509
      %v787 = vadd.f32 %v786, %v514
      %v788 = vadd.f32 %v787, %v517
      %v789 = vadd.f32 %v788, %v522
      %v790 = vadd.f32 %v789, %v525
      %v791 = vadd.f32 %v790, %v530
      %v792 = vadd.f32 %v791, %v533
      %v793 = vadd.f32 %v792, %v538
      %v794 = vadd.f32 %v793, %v541
      %v795 = vadd.f32 %v794, %v546
      %v796 = vadd.f32 %v795, %v549
      %v797 = vadd.f32 %v796, %v554
      %v798 = vadd.f32 %v797, %v557
      %v799 = vadd.f32 %v798, %v562
      %v800 = vadd.f32 %v799, %v565
      %v801 = vadd.f32 %v800, %v570
      %v802 = vadd.f32 %v801, %v573
      %v803 = vadd.f32 %v802, %v578
      %v804 = vadd.f32 %v803, %v581
      %v805 = vadd.f32 %v804, %v586
      %v806 = vadd.f32 %v805, %v589
      %v807 = vadd.f32 %v806, %v594
      %v808 = vadd.f32 %v807, %v597
      %v809 = vadd.f32 %v808, %v602
      %v810 = vadd.f32 %v809, %v605
      %v811 = vadd.f32 %v810, %v610
      %v812 = vadd.f32 %v811, %v613
      %v813 = vadd.f32 %v812, %v618
      %v814 = vadd.f32 %v813, %v621
      %v815 = vrot.slane %v814, 4
      %v816 = vadd.f32 %v814, %v815
      %v817 = vrot.slane %v816, 2
      %v818 = vadd.f32 %v816, %v817
      %v819 = vrot.slane %v818, 1
      %v820 = vadd.f32 %v818, %v819
      %v821 = vmul.f32 %v498, %v498
      %v822 = vmul.f32 %v501, %v501
      %v823 = vmul.f32 %v506, %v506
      %v824 = vmul.f32 %v509, %v509
      %v825 = vmul.f32 %v514, %v514
      %v826 = vmul.f32 %v517, %v517
      %v827 = vmul.f32 %v522, %v522
      %v828 = vmul.f32 %v525, %v525
      %v829 = vmul.f32 %v530, %v530
      %v830 = vmul.f32 %v533, %v533
      %v831 = vmul.f32 %v538, %v538
      %v832 = vmul.f32 %v541, %v541
      %v833 = vmul.f32 %v546, %v546
      %v834 = vmul.f32 %v549, %v549
      %v835 = vmul.f32 %v554, %v554
      %v836 = vmul.f32 %v557, %v557
      %v837 = vmul.f32 %v562, %v562
      %v838 = vmul.f32 %v565, %v565
      %v839 = vmul.f32 %v570, %v570
      %v840 = vmul.f32 %v573, %v573
      %v841 = vmul.f32 %v578, %v578
      %v842 = vmul.f32 %v581, %v581
      %v843 = vmul.f32 %v586, %v586
      %v844 = vmul.f32 %v589, %v589
      %v845 = vmul.f32 %v594, %v594
      %v846 = vmul.f32 %v597, %v597
      %v847 = vmul.f32 %v602, %v602
      %v848 = vmul.f32 %v605, %v605
      %v849 = vmul.f32 %v610, %v610
      %v850 = vmul.f32 %v613, %v613
      %v851 = vmul.f32 %v618, %v618
      %v852 = vmul.f32 %v621, %v621
      %v853 = vadd.f32 %v821, %v822
      %v854 = vadd.f32 %v853, %v823
      %v855 = vadd.f32 %v854, %v824
      %v856 = vadd.f32 %v855, %v825
      %v857 = vadd.f32 %v856, %v826
      %v858 = vadd.f32 %v857, %v827
      %v859 = vadd.f32 %v858, %v828
      %v860 = vadd.f32 %v859, %v829
      %v861 = vadd.f32 %v860, %v830
      %v862 = vadd.f32 %v861, %v831
      %v863 = vadd.f32 %v862, %v832
      %v864 = vadd.f32 %v863, %v833
      %v865 = vadd.f32 %v864, %v834
      %v866 = vadd.f32 %v865, %v835
      %v867 = vadd.f32 %v866, %v836
      %v868 = vadd.f32 %v867, %v837
      %v869 = vadd.f32 %v868, %v838
      %v870 = vadd.f32 %v869, %v839
      %v871 = vadd.f32 %v870, %v840
      %v872 = vadd.f32 %v871, %v841
      %v873 = vadd.f32 %v872, %v842
      %v874 = vadd.f32 %v873, %v843
      %v875 = vadd.f32 %v874, %v844
      %v876 = vadd.f32 %v875, %v845
      %v877 = vadd.f32 %v876, %v846
      %v878 = vadd.f32 %v877, %v847
      %v879 = vadd.f32 %v878, %v848
      %v880 = vadd.f32 %v879, %v849
      %v881 = vadd.f32 %v880, %v850
      %v882 = vadd.f32 %v881, %v851
      %v883 = vadd.f32 %v882, %v852
      %v884 = vrot.slane %v883, 4
      %v885 = vadd.f32 %v883, %v884
      %v886 = vrot.slane %v885, 2
      %v887 = vadd.f32 %v885, %v886
      %v888 = vrot.slane %v887, 1
      %v889 = vadd.f32 %v887, %v888
      %vm890 = vcmask 1040384
      %v891 = vsel %vm890, %v820, %v889
      %892 = vst [vmem:[%s211] sm:$0x3] %v891
      %s893 = smul.u32 32, %s16
      %p894 = scmp.lt.s32.totalorder %s893, 63
      %s895 = scalar_select %p894, %s893, 63
      %s896 = smul.addr %s895, 4
      %s897 = scalar_lea.vmem %s3, %s896
      %p898 = scmp.lt.s32.totalorder %s16, 1
      %s899 = scalar_select %p898, %s16, 1
      %s900 = smul.addr %s899, 2
      %s901 = scalar_lea.vmem %s4, %s900
      // Predicated region
      $region33: #{bottleneck_forward.6} parent=31 // pred_check
        %p902 = pneg %p102
      $region34: #{bottleneck_forward.6} parent=31 // pred_check_branch
        %904 = sbr.rel (%p902) target = $region36
      $region35: #{bottleneck_forward.6} parent=31 // pred_region
        %s905 = smul.u32 32, %s16
      $region36: #{bottleneck_forward.6} parent=31 // pred_fallthru
        _
      // Predicated region
      $region37: #{bottleneck_forward.6} parent=31 // pred_check
        %p906 = pneg %p128
      $region38: #{bottleneck_forward.6} parent=31 // pred_check_branch
        %908 = sbr.rel (%p906) target = $region40
      $region39: #{bottleneck_forward.6} parent=31 // pred_region
        _
      $region40: #{bottleneck_forward.6} parent=31 // pred_fallthru
        _
    $region32: #{bottleneck_forward.6} parent=5 // pred_fallthru
      _
    %p909 = scmp.le.s32.totalorder 2, %s11
    // Predicated region
    $region41: #{bottleneck_forward.6} parent=5 // pred_check
      %p910 = pneg %p909
    $region42: #{bottleneck_forward.6} parent=5 // pred_check_branch
      %912 = sbr.rel (%p910) target = $region44
    $region43: #{bottleneck_forward.6} parent=5 // pred_region
      %s913 = ssub.s32 %s11, 2
      // Predicated region
      $region45: #{bottleneck_forward.6} parent=43 // pred_check
        %p914 = pneg %p108
      $region46: #{bottleneck_forward.6} parent=43 // pred_check_branch
        %916 = sbr.rel (%p914) target = $region48
      $region47: #{bottleneck_forward.6} parent=43 // pred_region
        %s917 = smul.u32 32, %s17
        %p918 = scmp.lt.s32.totalorder %s917, 63
        %s919 = scalar_select %p918, %s917, 63
        %s920 = smul.addr %s919, 4
        %s921 = scalar_lea.vmem %s3, %s920
      $region48: #{bottleneck_forward.6} parent=43 // pred_fallthru
        _
      // Predicated region
      $region49: #{bottleneck_forward.6} parent=43 // pred_check
        %p922 = pneg %p134
      $region50: #{bottleneck_forward.6} parent=43 // pred_check_branch
        %924 = sbr.rel (%p922) target = $region52
      $region51: #{bottleneck_forward.6} parent=43 // pred_region
        %p925 = scmp.lt.s32.totalorder %s17, 1
        %s926 = scalar_select %p925, %s17, 1
        %s927 = smul.addr %s926, 2
        %s928 = scalar_lea.vmem %s4, %s927
      $region52: #{bottleneck_forward.6} parent=43 // pred_fallthru
        _
    $region44: #{bottleneck_forward.6} parent=5 // pred_fallthru
      _
  $region6: #{bottleneck_forward.6} parent=0 // loop_footer
    %s15 = sadd.s32 1, %s11
  $region7: #{bottleneck_forward.6} parent=0 // loop_footer_branch
    %10 = sbr.rel target = $region3
  $region8: #{bottleneck_forward.6} parent=0 // loop_exit
    _

// kernel: bottleneck_forward.5
$region0: #{bottleneck_forward.5}
  #allocation0 [shape = 'u32[]', space=smem, size = 0x4, offset = 0x4, fixed_abs, tag = 'smem constant byte address 0x4 - core index']
  #allocation1 [shape = 'u32[144,128]{1,0:T(1,128)}', space=vmem, size = 0x12000, scoped, tag = 'internal scratch']
  #allocation2 [shape = 'bf16[288,384]{1,0:T(16,128)(2,1)}', space=vmem, size = 0x36000, scoped, tag = 'scratch operand']
  %s0 = inlined_call_operand.vmem [shape: bf16[512,128], index: 0, kind: input, shape index: {}]
  %s1 = inlined_call_operand.vmem [shape: bf16[3,384,128], index: 1, kind: input, shape index: {}]
  %s2 = inlined_call_operand.vmem [shape: f32[2,128], index: 2, kind: input, shape index: {}]
  %s3 = inlined_call_operand.vmem [shape: bf16[512,128], index: 3, kind: output, shape index: {0}]
  %s4 = inlined_call_operand.vmem [shape: f32[2,2,128], index: 4, kind: output, shape index: {1}]
  %5 = xla_tuple %s3, %s4
  %s6 = sld [smem:[#allocation0]]
  $region53: #{bottleneck_forward.5} parent=0
    _
  %s8 = ssub.s32 1, %s6
  %s9 = scalar_select 0, %s8, %s6
  loop: start=0, step=1, limit=4
  $region2: #{bottleneck_forward.5} parent=0 // loop_pre_header
    _
  $region3: #{bottleneck_forward.5} parent=0 // loop_header
    %s11 = sphi 0, %s15
    %p12 = scmp.ge.s32.totalorder %s11, 4
    %s21 = sphi 0, %s23
    %s24 = sphi 0, %s21
    %s25 = sphi 0, %s24
    %s41 = sphi 0, %s25
    %s45 = sphi 0, %s45
    %s47 = sphi 0, %s45
    %s48 = sphi 0, %s47
    %s62 = sphi 0, %s48
    %s66 = sphi 0, %s66
    %s68 = sphi 0, %s66
    %s69 = sphi 0, %s68
    %s83 = sphi 0, %s69
    %s89 = sphi 0, %s91
    %s92 = sphi 0, %s89
    %s93 = sphi 0, %s92
    %s109 = sphi 0, %s93
    %s115 = sphi 0, %s117
    %s118 = sphi 0, %s115
    %s119 = sphi 0, %s118
    %s135 = sphi 0, %s119
  $region4: #{bottleneck_forward.5} parent=0 // loop_header_branch
    %14 = sbr.rel (%p12) target = $region8
  $region5: #{bottleneck_forward.5} parent=0 // loop_body
    %s16 = ssub.s32 %s11, 1
    %s17 = ssub.s32 %s11, 2
    %s18 = sadd.s32 %s11, 1
    %s19 = ssub.s32 %s11, %s18
    %p20 = scmp.eq.s32.totalorder %s19, 0
    %s22 = sadd.s32 %s21, 1
    %s23 = scalar_select %p20, %s21, %s22
    %p26 = pneg %p20
    %p27 = scmp.eq.s32.totalorder %s11, 1
    %p28 = por %p26, %p27
    %p29 = scmp.ne.s32.totalorder %s21, %s24
    %p30 = scmp.eq.s32.totalorder %s11, 0
    %p31 = por %p29, %p30
    %p32 = scmp.ne.s32.totalorder %s21, %s24
    %p33 = scmp.eq.s32.totalorder %s16, 1
    %p34 = por %p32, %p33
    %p35 = scmp.ne.s32.totalorder %s24, %s25
    %p36 = scmp.eq.s32.totalorder %s16, 0
    %p37 = por %p35, %p36
    %p38 = scmp.ne.s32.totalorder %s24, %s25
    %p39 = scmp.eq.s32.totalorder %s17, 1
    %p40 = por %p38, %p39
    %p42 = scmp.ne.s32.totalorder %s25, %s41
    %p43 = scmp.eq.s32.totalorder %s17, 0
    %p44 = por %p42, %p43
    %s46 = sadd.s32 %s45, 1
    %p49 = scmp.eq.s32.totalorder %s11, 1
    %p50 = scmp.ne.s32.totalorder %s45, %s47
    %p51 = scmp.eq.s32.totalorder %s11, 0
    %p52 = por %p50, %p51
    %p53 = scmp.ne.s32.totalorder %s45, %s47
    %p54 = scmp.eq.s32.totalorder %s16, 1
    %p55 = por %p53, %p54
    %p56 = scmp.ne.s32.totalorder %s47, %s48
    %p57 = scmp.eq.s32.totalorder %s16, 0
    %p58 = por %p56, %p57
    %p59 = scmp.ne.s32.totalorder %s47, %s48
    %p60 = scmp.eq.s32.totalorder %s17, 1
    %p61 = por %p59, %p60
    %p63 = scmp.ne.s32.totalorder %s48, %s62
    %p64 = scmp.eq.s32.totalorder %s17, 0
    %p65 = por %p63, %p64
    %s67 = sadd.s32 %s66, 1
    %p70 = scmp.eq.s32.totalorder %s11, 1
    %p71 = scmp.ne.s32.totalorder %s66, %s68
    %p72 = scmp.eq.s32.totalorder %s11, 0
    %p73 = por %p71, %p72
    %p74 = scmp.ne.s32.totalorder %s66, %s68
    %p75 = scmp.eq.s32.totalorder %s16, 1
    %p76 = por %p74, %p75
    %p77 = scmp.ne.s32.totalorder %s68, %s69
    %p78 = scmp.eq.s32.totalorder %s16, 0
    %p79 = por %p77, %p78
    %p80 = scmp.ne.s32.totalorder %s68, %s69
    %p81 = scmp.eq.s32.totalorder %s17, 1
    %p82 = por %p80, %p81
    %p84 = scmp.ne.s32.totalorder %s69, %s83
    %p85 = scmp.eq.s32.totalorder %s17, 0
    %p86 = por %p84, %p85
    %s87 = ssub.s32 %s11, %s18
    %p88 = scmp.eq.s32.totalorder %s87, 0
    %s90 = sadd.s32 %s89, 1
    %s91 = scalar_select %p88, %s89, %s90
    %p94 = pneg %p88
    %p95 = scmp.eq.s32.totalorder %s11, 1
    %p96 = por %p94, %p95
    %p97 = scmp.ne.s32.totalorder %s89, %s92
    %p98 = scmp.eq.s32.totalorder %s11, 0
    %p99 = por %p97, %p98
    %p100 = scmp.ne.s32.totalorder %s89, %s92
    %p101 = scmp.eq.s32.totalorder %s16, 1
    %p102 = por %p100, %p101
    %p103 = scmp.ne.s32.totalorder %s92, %s93
    %p104 = scmp.eq.s32.totalorder %s16, 0
    %p105 = por %p103, %p104
    %p106 = scmp.ne.s32.totalorder %s92, %s93
    %p107 = scmp.eq.s32.totalorder %s17, 1
    %p108 = por %p106, %p107
    %p110 = scmp.ne.s32.totalorder %s93, %s109
    %p111 = scmp.eq.s32.totalorder %s17, 0
    %p112 = por %p110, %p111
    %s113 = ssub.s32 %s11, %s18
    %p114 = scmp.eq.s32.totalorder %s113, 0
    %s116 = sadd.s32 %s115, 1
    %s117 = scalar_select %p114, %s115, %s116
    %p120 = pneg %p114
    %p121 = scmp.eq.s32.totalorder %s11, 1
    %p122 = por %p120, %p121
    %p123 = scmp.ne.s32.totalorder %s115, %s118
    %p124 = scmp.eq.s32.totalorder %s11, 0
    %p125 = por %p123, %p124
    %p126 = scmp.ne.s32.totalorder %s115, %s118
    %p127 = scmp.eq.s32.totalorder %s16, 1
    %p128 = por %p126, %p127
    %p129 = scmp.ne.s32.totalorder %s118, %s119
    %p130 = scmp.eq.s32.totalorder %s16, 0
    %p131 = por %p129, %p130
    %p132 = scmp.ne.s32.totalorder %s118, %s119
    %p133 = scmp.eq.s32.totalorder %s17, 1
    %p134 = por %p132, %p133
    %p136 = scmp.ne.s32.totalorder %s119, %s135
    %p137 = scmp.eq.s32.totalorder %s17, 0
    %p138 = por %p136, %p137
    %p139 = scmp.le.s32.totalorder 1, %s11
    %p140 = scmp.lt.s32.totalorder %s11, 3
    %p141 = pnand %p139, %p140
    %p142 = pneg %p141
    // Predicated region
    $region9: #{bottleneck_forward.5} parent=5 // pred_check
      _
    $region10: #{bottleneck_forward.5} parent=5 // pred_check_branch
      %144 = sbr.rel (%p141) target = $region12
    $region11: #{bottleneck_forward.5} parent=5 // pred_region
      %s145 = ssub.s32 %s11, 1
      // Predicated region
      $region13: #{bottleneck_forward.5} parent=11 // pred_check
        %p146 = pneg %p58
      $region14: #{bottleneck_forward.5} parent=11 // pred_check_branch
        %148 = sbr.rel (%p146) target = $region16
      $region15: #{bottleneck_forward.5} parent=11 // pred_region
        _
      $region16: #{bottleneck_forward.5} parent=11 // pred_fallthru
        _
      // Predicated region
      $region17: #{bottleneck_forward.5} parent=11 // pred_check
        %p149 = pneg %p79
      $region18: #{bottleneck_forward.5} parent=11 // pred_check_branch
        %151 = sbr.rel (%p149) target = $region20
      $region19: #{bottleneck_forward.5} parent=11 // pred_region
        _
      $region20: #{bottleneck_forward.5} parent=11 // pred_fallthru
        _
    $region12: #{bottleneck_forward.5} parent=5 // pred_fallthru
      _
    %p152 = scmp.lt.s32.totalorder %s11, 2
    // Predicated region
    $region21: #{bottleneck_forward.5} parent=5 // pred_check
      %p153 = pneg %p152
    $region22: #{bottleneck_forward.5} parent=5 // pred_check_branch
      %155 = sbr.rel (%p153) target = $region24
    $region23: #{bottleneck_forward.5} parent=5 // pred_region
      // Predicated region
      $region25: #{bottleneck_forward.5} parent=23 // pred_check
        %p156 = pneg %p31
      $region26: #{bottleneck_forward.5} parent=23 // pred_check_branch
        %158 = sbr.rel (%p156) target = $region28
      $region27: #{bottleneck_forward.5} parent=23 // pred_region
        %s159 = smul.u32 32, %s11
        %p160 = scmp.lt.s32.totalorder %s159, 63
        %s161 = scalar_select %p160, %s159, 63
        %s162 = smul.addr %s161, 4
        %s163 = scalar_lea.vmem %s0, %s162
        %s164 = smul.u32 32, %s11
      $region28: #{bottleneck_forward.5} parent=23 // pred_fallthru
        _
    $region24: #{bottleneck_forward.5} parent=5 // pred_fallthru
      _
    %p165 = scmp.le.s32.totalorder 1, %s11
    %p166 = scmp.lt.s32.totalorder %s11, 3
    %p167 = pnand %p165, %p166
    %p168 = pneg %p167
    // Predicated region
    $region29: #{bottleneck_forward.5} parent=5 // pred_check
      _
    $region30: #{bottleneck_forward.5} parent=5 // pred_check_branch
      %170 = sbr.rel (%p167) target = $region32
    $region31: #{bottleneck_forward.5} parent=5 // pred_region
      %s171 = ssub.s32 %s11, 1
      %s172 = smul.u32 32, %s16
      %p173 = scmp.lt.s32.totalorder %s172, 63
      %s174 = scalar_select %p173, %s172, 63
      %s175 = smul.addr %s174, 4
      %s176 = scalar_lea.vmem %s0, %s175
      %p177 = pneg %p37
      %p178 = pneg %p34
      %p179 = pneg %p58
      %p180 = pneg %p55
      %p181 = pneg %p79
      %p182 = pneg %p76
      %p183 = pneg %p105
      %p184 = pneg %p102
      %s185 = smul.u32 32, %s16
      %p186 = scmp.lt.s32.totalorder %s185, 63
      %s187 = scalar_select %p186, %s185, 63
      %s188 = smul.addr %s187, 4
      %s189 = scalar_lea.vmem %s3, %s188
      %p190 = pneg %p131
      %p191 = pneg %p128
      %p192 = scmp.lt.s32.totalorder %s16, 1
      %s193 = scalar_select %p192, %s16, 1
      %s194 = smul.addr %s193, 2
      %s195 = scalar_lea.vmem %s4, %s194
      %s196 = smul.u32 32, %s16
      %p197 = scmp.lt.s32.totalorder %s196, 63
      %s198 = scalar_select %p197, %s196, 63
      %s199 = smul.addr %s198, 4
      %s200 = scalar_lea.vmem %s0, %s199
      %s201 = smul.u32 32, %s16
      %s202 = smul.u32 32, %s16
      %p203 = scmp.lt.s32.totalorder %s202, 63
      %s204 = scalar_select %p203, %s202, 63
      %s205 = smul.addr %s204, 4
      %s206 = scalar_lea.vmem %s3, %s205
      %s207 = smul.u32 32, %s16
      %p208 = scmp.lt.s32.totalorder %s16, 1
      %s209 = scalar_select %p208, %s16, 1
      %s210 = smul.addr %s209, 2
      %s211 = scalar_lea.vmem %s4, %s210
      %v213 = vld [vmem:[%s200] sm:$0xf]
      %v214 = vld [vmem:[%s200 + $0x4] sm:$0xf]
      %v215 = vld [vmem:[%s200 + $0x8] sm:$0xf]
      %v216 = vld [vmem:[%s200 + $0xc] sm:$0xf]
      %v217 = vld [vmem:[%s200 + $0x10] sm:$0xf]
      %v218 = vld [vmem:[%s200 + $0x14] sm:$0xf]
      %v219 = vld [vmem:[%s200 + $0x18] sm:$0xf]
      %v220 = vld [vmem:[%s200 + $0x1c] sm:$0xf]
      %v221 = vld [vmem:[%s200 + $0x20] sm:$0xf]
      %v222 = vld [vmem:[%s200 + $0x24] sm:$0xf]
      %v223 = vld [vmem:[%s200 + $0x28] sm:$0xf]
      %v224 = vld [vmem:[%s200 + $0x2c] sm:$0xf]
      %v225 = vld [vmem:[%s200 + $0x30] sm:$0xf]
      %v226 = vld [vmem:[%s200 + $0x34] sm:$0xf]
      %v227 = vld [vmem:[%s200 + $0x38] sm:$0xf]
      %v228 = vld [vmem:[%s200 + $0x3c] sm:$0xf]
      %v229 = vld [vmem:[%s200 + $0x40] sm:$0xf]
      %v230 = vld [vmem:[%s200 + $0x44] sm:$0xf]
      %v231 = vld [vmem:[%s200 + $0x48] sm:$0xf]
      %v232 = vld [vmem:[%s200 + $0x4c] sm:$0xf]
      %v233 = vld [vmem:[%s200 + $0x50] sm:$0xf]
      %v234 = vld [vmem:[%s200 + $0x54] sm:$0xf]
      %v235 = vld [vmem:[%s200 + $0x58] sm:$0xf]
      %v236 = vld [vmem:[%s200 + $0x5c] sm:$0xf]
      %v237 = vld [vmem:[%s200 + $0x60] sm:$0xf]
      %v238 = vld [vmem:[%s200 + $0x64] sm:$0xf]
      %v239 = vld [vmem:[%s200 + $0x68] sm:$0xf]
      %v240 = vld [vmem:[%s200 + $0x6c] sm:$0xf]
      %v241 = vld [vmem:[%s200 + $0x70] sm:$0xf]
      %v242 = vld [vmem:[%s200 + $0x74] sm:$0xf]
      %v243 = vld [vmem:[%s200 + $0x78] sm:$0xf]
      %v244 = vld [vmem:[%s200 + $0x7c] sm:$0xf]
      %v245 = vunpack.c.l.bf16 %v213
      %v246 = vunpack.c.l.bf16 %v214
      %v247 = vunpack.c.l.bf16 %v215
      %v248 = vunpack.c.l.bf16 %v216
      %v249 = vunpack.c.l.bf16 %v217
      %v250 = vunpack.c.l.bf16 %v218
      %v251 = vunpack.c.l.bf16 %v219
      %v252 = vunpack.c.l.bf16 %v220
      %v253 = vunpack.c.l.bf16 %v221
      %v254 = vunpack.c.l.bf16 %v222
      %v255 = vunpack.c.l.bf16 %v223
      %v256 = vunpack.c.l.bf16 %v224
      %v257 = vunpack.c.l.bf16 %v225
      %v258 = vunpack.c.l.bf16 %v226
      %v259 = vunpack.c.l.bf16 %v227
      %v260 = vunpack.c.l.bf16 %v228
      %v261 = vunpack.c.l.bf16 %v229
      %v262 = vunpack.c.l.bf16 %v230
      %v263 = vunpack.c.l.bf16 %v231
      %v264 = vunpack.c.l.bf16 %v232
      %v265 = vunpack.c.l.bf16 %v233
      %v266 = vunpack.c.l.bf16 %v234
      %v267 = vunpack.c.l.bf16 %v235
      %v268 = vunpack.c.l.bf16 %v236
      %v269 = vunpack.c.l.bf16 %v237
      %v270 = vunpack.c.l.bf16 %v238
      %v271 = vunpack.c.l.bf16 %v239
      %v272 = vunpack.c.l.bf16 %v240
      %v273 = vunpack.c.l.bf16 %v241
      %v274 = vunpack.c.l.bf16 %v242
      %v275 = vunpack.c.l.bf16 %v243
      %v276 = vunpack.c.l.bf16 %v244
      %v277 = vld [vmem:[%s2] sm:$0x1]
      %v278 = vlaneseq
      %v279 = vshrl.u32 %v278, 7
      %v280 = vsub.s32 0, %v279
      %v281 = vrot.slane %v277, %v280
      %v282 = vmul.f32 %v245, %v281
      %v283 = vmul.f32 %v246, %v281
      %v284 = vmul.f32 %v247, %v281
      %v285 = vmul.f32 %v248, %v281
      %v286 = vmul.f32 %v249, %v281
      %v287 = vmul.f32 %v250, %v281
      %v288 = vmul.f32 %v251, %v281
      %v289 = vmul.f32 %v252, %v281
      %v290 = vmul.f32 %v253, %v281
      %v291 = vmul.f32 %v254, %v281
      %v292 = vmul.f32 %v255, %v281
      %v293 = vmul.f32 %v256, %v281
      %v294 = vmul.f32 %v257, %v281
      %v295 = vmul.f32 %v258, %v281
      %v296 = vmul.f32 %v259, %v281
      %v297 = vmul.f32 %v260, %v281
      %v298 = vmul.f32 %v261, %v281
      %v299 = vmul.f32 %v262, %v281
      %v300 = vmul.f32 %v263, %v281
      %v301 = vmul.f32 %v264, %v281
      %v302 = vmul.f32 %v265, %v281
      %v303 = vmul.f32 %v266, %v281
      %v304 = vmul.f32 %v267, %v281
      %v305 = vmul.f32 %v268, %v281
      %v306 = vmul.f32 %v269, %v281
      %v307 = vmul.f32 %v270, %v281
      %v308 = vmul.f32 %v271, %v281
      %v309 = vmul.f32 %v272, %v281
      %v310 = vmul.f32 %v273, %v281
      %v311 = vmul.f32 %v274, %v281
      %v312 = vmul.f32 %v275, %v281
      %v313 = vmul.f32 %v276, %v281
      %v314 = vld [vmem:[%s2 + $0x1] sm:$0x1]
      %v315 = vlaneseq
      %v316 = vshrl.u32 %v315, 7
      %v317 = vsub.s32 0, %v316
      %v318 = vrot.slane %v314, %v317
      %v319 = vadd.f32 %v282, %v318
      %v320 = vadd.f32 %v283, %v318
      %v321 = vadd.f32 %v284, %v318
      %v322 = vadd.f32 %v285, %v318
      %v323 = vadd.f32 %v286, %v318
      %v324 = vadd.f32 %v287, %v318
      %v325 = vadd.f32 %v288, %v318
      %v326 = vadd.f32 %v289, %v318
      %v327 = vadd.f32 %v290, %v318
      %v328 = vadd.f32 %v291, %v318
      %v329 = vadd.f32 %v292, %v318
      %v330 = vadd.f32 %v293, %v318
      %v331 = vadd.f32 %v294, %v318
      %v332 = vadd.f32 %v295, %v318
      %v333 = vadd.f32 %v296, %v318
      %v334 = vadd.f32 %v297, %v318
      %v335 = vadd.f32 %v298, %v318
      %v336 = vadd.f32 %v299, %v318
      %v337 = vadd.f32 %v300, %v318
      %v338 = vadd.f32 %v301, %v318
      %v339 = vadd.f32 %v302, %v318
      %v340 = vadd.f32 %v303, %v318
      %v341 = vadd.f32 %v304, %v318
      %v342 = vadd.f32 %v305, %v318
      %v343 = vadd.f32 %v306, %v318
      %v344 = vadd.f32 %v307, %v318
      %v345 = vadd.f32 %v308, %v318
      %v346 = vadd.f32 %v309, %v318
      %v347 = vadd.f32 %v310, %v318
      %v348 = vadd.f32 %v311, %v318
      %v349 = vadd.f32 %v312, %v318
      %v350 = vadd.f32 %v313, %v318
      %v351 = vmax.f32 %v319, 0.0
      %v352 = vmax.f32 %v320, 0.0
      %v353 = vmax.f32 %v321, 0.0
      %v354 = vmax.f32 %v322, 0.0
      %v355 = vmax.f32 %v323, 0.0
      %v356 = vmax.f32 %v324, 0.0
      %v357 = vmax.f32 %v325, 0.0
      %v358 = vmax.f32 %v326, 0.0
      %v359 = vmax.f32 %v327, 0.0
      %v360 = vmax.f32 %v328, 0.0
      %v361 = vmax.f32 %v329, 0.0
      %v362 = vmax.f32 %v330, 0.0
      %v363 = vmax.f32 %v331, 0.0
      %v364 = vmax.f32 %v332, 0.0
      %v365 = vmax.f32 %v333, 0.0
      %v366 = vmax.f32 %v334, 0.0
      %v367 = vmax.f32 %v335, 0.0
      %v368 = vmax.f32 %v336, 0.0
      %v369 = vmax.f32 %v337, 0.0
      %v370 = vmax.f32 %v338, 0.0
      %v371 = vmax.f32 %v339, 0.0
      %v372 = vmax.f32 %v340, 0.0
      %v373 = vmax.f32 %v341, 0.0
      %v374 = vmax.f32 %v342, 0.0
      %v375 = vmax.f32 %v343, 0.0
      %v376 = vmax.f32 %v344, 0.0
      %v377 = vmax.f32 %v345, 0.0
      %v378 = vmax.f32 %v346, 0.0
      %v379 = vmax.f32 %v347, 0.0
      %v380 = vmax.f32 %v348, 0.0
      %v381 = vmax.f32 %v349, 0.0
      %v382 = vmax.f32 %v350, 0.0
      %v383 = vlaneseq
      %v384 = vshrl.u32 %v383, 7
      %v385 = vadd.s32 %v384, 8
      %v386 = vadd.s32 %v384, 16
      %v387 = vadd.s32 %v384, 24
      %v388 = vadd.s32 %v384, 32
      %v389 = vadd.s32 %v384, 40
      %v390 = vadd.s32 %v384, 48
      %v391 = vadd.s32 %v384, 56
      %v392 = vadd.s32 %v384, 64
      %v393 = vadd.s32 %v384, 72
      %v394 = vadd.s32 %v384, 80
      %v395 = vadd.s32 %v384, 88
      %v396 = vadd.s32 %v384, 96
      %v397 = vadd.s32 %v384, 104
      %v398 = vadd.s32 %v384, 112
      %v399 = vadd.s32 %v384, 120
      %v400 = vadd.s32 %v384, 128
      %v401 = vadd.s32 %v384, 136
      %v402 = vadd.s32 %v384, 144
      %v403 = vadd.s32 %v384, 152
      %v404 = vadd.s32 %v384, 160
      %v405 = vadd.s32 %v384, 168
      %v406 = vadd.s32 %v384, 176
      %v407 = vadd.s32 %v384, 184
      %v408 = vadd.s32 %v384, 192
      %v409 = vadd.s32 %v384, 200
      %v410 = vadd.s32 %v384, 208
      %v411 = vadd.s32 %v384, 216
      %v412 = vadd.s32 %v384, 224
      %v413 = vadd.s32 %v384, 232
      %v414 = vadd.s32 %v384, 240
      %v415 = vadd.s32 %v384, 248
      %vm416 = vcmp.lt.s32.totalorder %v384, 0
      %v417 = vsub.s32 0, %v384
      %v418 = vsel %vm416, %v417, %v384
      %v419 = vshrl.u32 %v418, 4
      %v420 = vand.u32 %v418, 15
      %v421 = vsub.s32 0, %v420
      %v422 = vsel %vm416, %v421, %v420
      %vm423 = vcmp.lt.s32.totalorder %v385, 0
      %v424 = vsub.s32 0, %v385
      %v425 = vsel %vm423, %v424, %v385
      %v426 = vshrl.u32 %v425, 4
      %v427 = vand.u32 %v425, 15
      %v428 = vsub.s32 0, %v427
      %v429 = vsel %vm423, %v428, %v427
      %vm430 = vcmp.lt.s32.totalorder %v386, 0
      %v431 = vsub.s32 0, %v386
      %v432 = vsel %vm430, %v431, %v386
      %v433 = vshrl.u32 %v432, 4
      %v434 = vand.u32 %v432, 15
      %v435 = vsub.s32 0, %v434
      %v436 = vsel %vm430, %v435, %v434
      %vm437 = vcmp.lt.s32.totalorder %v387, 0
      %v438 = vsub.s32 0, %v387
      %v439 = vsel %vm437, %v438, %v387
      %v440 = vshrl.u32 %v439, 4
      %v441 = vand.u32 %v439, 15
      %v442 = vsub.s32 0, %v441
      %v443 = vsel %vm437, %v442, %v441
      %vm444 = vcmp.lt.s32.totalorder %v388, 0
      %v445 = vsub.s32 0, %v388
      %v446 = vsel %vm444, %v445, %v388
      %v447 = vshrl.u32 %v446, 4
      %v448 = vand.u32 %v446, 15
      %v449 = vsub.s32 0, %v448
      %v450 = vsel %vm444, %v449, %v448
      %vm451 = vcmp.lt.s32.totalorder %v389, 0
      %v452 = vsub.s32 0, %v389
      %v453 = vsel %vm451, %v452, %v389
      %v454 = vshrl.u32 %v453, 4
      %v455 = vand.u32 %v453, 15
      %v456 = vsub.s32 0, %v455
      %v457 = vsel %vm451, %v456, %v455
      %vm458 = vcmp.lt.s32.totalorder %v390, 0
      %v459 = vsub.s32 0, %v390
      %v460 = vsel %vm458, %v459, %v390
      %v461 = vshrl.u32 %v460, 4
      %v462 = vand.u32 %v460, 15
      %v463 = vsub.s32 0, %v462
      %v464 = vsel %vm458, %v463, %v462
      %vm465 = vcmp.lt.s32.totalorder %v391, 0
      %v466 = vsub.s32 0, %v391
      %v467 = vsel %vm465, %v466, %v391
      %v468 = vshrl.u32 %v467, 4
      %v469 = vand.u32 %v467, 15
      %v470 = vsub.s32 0, %v469
      %v471 = vsel %vm465, %v470, %v469
      %vm472 = vcmp.lt.s32.totalorder %v392, 0
      %v473 = vsub.s32 0, %v392
      %v474 = vsel %vm472, %v473, %v392
      %v475 = vshrl.u32 %v474, 4
      %v476 = vand.u32 %v474, 15
      %v477 = vsub.s32 0, %v476
      %v478 = vsel %vm472, %v477, %v476
      %vm479 = vcmp.lt.s32.totalorder %v393, 0
      %v480 = vsub.s32 0, %v393
      %v481 = vsel %vm479, %v480, %v393
      %v482 = vshrl.u32 %v481, 4
      %v483 = vand.u32 %v481, 15
      %v484 = vsub.s32 0, %v483
      %v485 = vsel %vm479, %v484, %v483
      %vm486 = vcmp.lt.s32.totalorder %v394, 0
      %v487 = vsub.s32 0, %v394
      %v488 = vsel %vm486, %v487, %v394
      %v489 = vshrl.u32 %v488, 4
      %v490 = vand.u32 %v488, 15
      %v491 = vsub.s32 0, %v490
      %v492 = vsel %vm486, %v491, %v490
      %vm493 = vcmp.lt.s32.totalorder %v395, 0
      %v494 = vsub.s32 0, %v395
      %v495 = vsel %vm493, %v494, %v395
      %v496 = vshrl.u32 %v495, 4
      %v497 = vand.u32 %v495, 15
      %v498 = vsub.s32 0, %v497
      %v499 = vsel %vm493, %v498, %v497
      %vm500 = vcmp.lt.s32.totalorder %v396, 0
      %v501 = vsub.s32 0, %v396
      %v502 = vsel %vm500, %v501, %v396
      %v503 = vshrl.u32 %v502, 4
      %v504 = vand.u32 %v502, 15
      %v505 = vsub.s32 0, %v504
      %v506 = vsel %vm500, %v505, %v504
      %vm507 = vcmp.lt.s32.totalorder %v397, 0
      %v508 = vsub.s32 0, %v397
      %v509 = vsel %vm507, %v508, %v397
      %v510 = vshrl.u32 %v509, 4
      %v511 = vand.u32 %v509, 15
      %v512 = vsub.s32 0, %v511
      %v513 = vsel %vm507, %v512, %v511
      %vm514 = vcmp.lt.s32.totalorder %v398, 0
      %v515 = vsub.s32 0, %v398
      %v516 = vsel %vm514, %v515, %v398
      %v517 = vshrl.u32 %v516, 4
      %v518 = vand.u32 %v516, 15
      %v519 = vsub.s32 0, %v518
      %v520 = vsel %vm514, %v519, %v518
      %vm521 = vcmp.lt.s32.totalorder %v399, 0
      %v522 = vsub.s32 0, %v399
      %v523 = vsel %vm521, %v522, %v399
      %v524 = vshrl.u32 %v523, 4
      %v525 = vand.u32 %v523, 15
      %v526 = vsub.s32 0, %v525
      %v527 = vsel %vm521, %v526, %v525
      %vm528 = vcmp.lt.s32.totalorder %v400, 0
      %v529 = vsub.s32 0, %v400
      %v530 = vsel %vm528, %v529, %v400
      %v531 = vshrl.u32 %v530, 4
      %v532 = vand.u32 %v530, 15
      %v533 = vsub.s32 0, %v532
      %v534 = vsel %vm528, %v533, %v532
      %vm535 = vcmp.lt.s32.totalorder %v401, 0
      %v536 = vsub.s32 0, %v401
      %v537 = vsel %vm535, %v536, %v401
      %v538 = vshrl.u32 %v537, 4
      %v539 = vand.u32 %v537, 15
      %v540 = vsub.s32 0, %v539
      %v541 = vsel %vm535, %v540, %v539
      %vm542 = vcmp.lt.s32.totalorder %v402, 0
      %v543 = vsub.s32 0, %v402
      %v544 = vsel %vm542, %v543, %v402
      %v545 = vshrl.u32 %v544, 4
      %v546 = vand.u32 %v544, 15
      %v547 = vsub.s32 0, %v546
      %v548 = vsel %vm542, %v547, %v546
      %vm549 = vcmp.lt.s32.totalorder %v403, 0
      %v550 = vsub.s32 0, %v403
      %v551 = vsel %vm549, %v550, %v403
      %v552 = vshrl.u32 %v551, 4
      %v553 = vand.u32 %v551, 15
      %v554 = vsub.s32 0, %v553
      %v555 = vsel %vm549, %v554, %v553
      %vm556 = vcmp.lt.s32.totalorder %v404, 0
      %v557 = vsub.s32 0, %v404
      %v558 = vsel %vm556, %v557, %v404
      %v559 = vshrl.u32 %v558, 4
      %v560 = vand.u32 %v558, 15
      %v561 = vsub.s32 0, %v560
      %v562 = vsel %vm556, %v561, %v560
      %vm563 = vcmp.lt.s32.totalorder %v405, 0
      %v564 = vsub.s32 0, %v405
      %v565 = vsel %vm563, %v564, %v405
      %v566 = vshrl.u32 %v565, 4
      %v567 = vand.u32 %v565, 15
      %v568 = vsub.s32 0, %v567
      %v569 = vsel %vm563, %v568, %v567
      %vm570 = vcmp.lt.s32.totalorder %v406, 0
      %v571 = vsub.s32 0, %v406
      %v572 = vsel %vm570, %v571, %v406
      %v573 = vshrl.u32 %v572, 4
      %v574 = vand.u32 %v572, 15
      %v575 = vsub.s32 0, %v574
      %v576 = vsel %vm570, %v575, %v574
      %vm577 = vcmp.lt.s32.totalorder %v407, 0
      %v578 = vsub.s32 0, %v407
      %v579 = vsel %vm577, %v578, %v407
      %v580 = vshrl.u32 %v579, 4
      %v581 = vand.u32 %v579, 15
      %v582 = vsub.s32 0, %v581
      %v583 = vsel %vm577, %v582, %v581
      %vm584 = vcmp.lt.s32.totalorder %v408, 0
      %v585 = vsub.s32 0, %v408
      %v586 = vsel %vm584, %v585, %v408
      %v587 = vshrl.u32 %v586, 4
      %v588 = vand.u32 %v586, 15
      %v589 = vsub.s32 0, %v588
      %v590 = vsel %vm584, %v589, %v588
      %vm591 = vcmp.lt.s32.totalorder %v409, 0
      %v592 = vsub.s32 0, %v409
      %v593 = vsel %vm591, %v592, %v409
      %v594 = vshrl.u32 %v593, 4
      %v595 = vand.u32 %v593, 15
      %v596 = vsub.s32 0, %v595
      %v597 = vsel %vm591, %v596, %v595
      %vm598 = vcmp.lt.s32.totalorder %v410, 0
      %v599 = vsub.s32 0, %v410
      %v600 = vsel %vm598, %v599, %v410
      %v601 = vshrl.u32 %v600, 4
      %v602 = vand.u32 %v600, 15
      %v603 = vsub.s32 0, %v602
      %v604 = vsel %vm598, %v603, %v602
      %vm605 = vcmp.lt.s32.totalorder %v411, 0
      %v606 = vsub.s32 0, %v411
      %v607 = vsel %vm605, %v606, %v411
      %v608 = vshrl.u32 %v607, 4
      %v609 = vand.u32 %v607, 15
      %v610 = vsub.s32 0, %v609
      %v611 = vsel %vm605, %v610, %v609
      %vm612 = vcmp.lt.s32.totalorder %v412, 0
      %v613 = vsub.s32 0, %v412
      %v614 = vsel %vm612, %v613, %v412
      %v615 = vshrl.u32 %v614, 4
      %v616 = vand.u32 %v614, 15
      %v617 = vsub.s32 0, %v616
      %v618 = vsel %vm612, %v617, %v616
      %vm619 = vcmp.lt.s32.totalorder %v413, 0
      %v620 = vsub.s32 0, %v413
      %v621 = vsel %vm619, %v620, %v413
      %v622 = vshrl.u32 %v621, 4
      %v623 = vand.u32 %v621, 15
      %v624 = vsub.s32 0, %v623
      %v625 = vsel %vm619, %v624, %v623
      %vm626 = vcmp.lt.s32.totalorder %v414, 0
      %v627 = vsub.s32 0, %v414
      %v628 = vsel %vm626, %v627, %v414
      %v629 = vshrl.u32 %v628, 4
      %v630 = vand.u32 %v628, 15
      %v631 = vsub.s32 0, %v630
      %v632 = vsel %vm626, %v631, %v630
      %vm633 = vcmp.lt.s32.totalorder %v415, 0
      %v634 = vsub.s32 0, %v415
      %v635 = vsel %vm633, %v634, %v415
      %v636 = vshrl.u32 %v635, 4
      %v637 = vand.u32 %v635, 15
      %v638 = vsub.s32 0, %v637
      %v639 = vsel %vm633, %v638, %v637
      %vm640 = vcmp.ne.s32.totalorder %v422, 0
      %vm641 = vcmp.ne.s32.totalorder %v429, 0
      %vm642 = vcmp.ne.s32.totalorder %v436, 0
      %vm643 = vcmp.ne.s32.totalorder %v443, 0
      %vm644 = vcmp.ne.s32.totalorder %v450, 0
      %vm645 = vcmp.ne.s32.totalorder %v457, 0
      %vm646 = vcmp.ne.s32.totalorder %v464, 0
      %vm647 = vcmp.ne.s32.totalorder %v471, 0
      %vm648 = vcmp.ne.s32.totalorder %v478, 0
      %vm649 = vcmp.ne.s32.totalorder %v485, 0
      %vm650 = vcmp.ne.s32.totalorder %v492, 0
      %vm651 = vcmp.ne.s32.totalorder %v499, 0
      %vm652 = vcmp.ne.s32.totalorder %v506, 0
      %vm653 = vcmp.ne.s32.totalorder %v513, 0
      %vm654 = vcmp.ne.s32.totalorder %v520, 0
      %vm655 = vcmp.ne.s32.totalorder %v527, 0
      %vm656 = vcmp.ne.s32.totalorder %v534, 0
      %vm657 = vcmp.ne.s32.totalorder %v541, 0
      %vm658 = vcmp.ne.s32.totalorder %v548, 0
      %vm659 = vcmp.ne.s32.totalorder %v555, 0
      %vm660 = vcmp.ne.s32.totalorder %v562, 0
      %vm661 = vcmp.ne.s32.totalorder %v569, 0
      %vm662 = vcmp.ne.s32.totalorder %v576, 0
      %vm663 = vcmp.ne.s32.totalorder %v583, 0
      %vm664 = vcmp.ne.s32.totalorder %v590, 0
      %vm665 = vcmp.ne.s32.totalorder %v597, 0
      %vm666 = vcmp.ne.s32.totalorder %v604, 0
      %vm667 = vcmp.ne.s32.totalorder %v611, 0
      %vm668 = vcmp.ne.s32.totalorder %v618, 0
      %vm669 = vcmp.ne.s32.totalorder %v625, 0
      %vm670 = vcmp.ne.s32.totalorder %v632, 0
      %vm671 = vcmp.ne.s32.totalorder %v639, 0
      %vm672 = vcmp.lt.s32.totalorder %v422, 0
      %vm673 = vcmp.lt.s32.totalorder %v429, 0
      %vm674 = vcmp.lt.s32.totalorder %v436, 0
      %vm675 = vcmp.lt.s32.totalorder %v443, 0
      %vm676 = vcmp.lt.s32.totalorder %v450, 0
      %vm677 = vcmp.lt.s32.totalorder %v457, 0
      %vm678 = vcmp.lt.s32.totalorder %v464, 0
      %vm679 = vcmp.lt.s32.totalorder %v471, 0
      %vm680 = vcmp.lt.s32.totalorder %v478, 0
      %vm681 = vcmp.lt.s32.totalorder %v485, 0
      %vm682 = vcmp.lt.s32.totalorder %v492, 0
      %vm683 = vcmp.lt.s32.totalorder %v499, 0
      %vm684 = vcmp.lt.s32.totalorder %v506, 0
      %vm685 = vcmp.lt.s32.totalorder %v513, 0
      %vm686 = vcmp.lt.s32.totalorder %v520, 0
      %vm687 = vcmp.lt.s32.totalorder %v527, 0
      %vm688 = vcmp.lt.s32.totalorder %v534, 0
      %vm689 = vcmp.lt.s32.totalorder %v541, 0
      %vm690 = vcmp.lt.s32.totalorder %v548, 0
      %vm691 = vcmp.lt.s32.totalorder %v555, 0
      %vm692 = vcmp.lt.s32.totalorder %v562, 0
      %vm693 = vcmp.lt.s32.totalorder %v569, 0
      %vm694 = vcmp.lt.s32.totalorder %v576, 0
      %vm695 = vcmp.lt.s32.totalorder %v583, 0
      %vm696 = vcmp.lt.s32.totalorder %v590, 0
      %vm697 = vcmp.lt.s32.totalorder %v597, 0
      %vm698 = vcmp.lt.s32.totalorder %v604, 0
      %vm699 = vcmp.lt.s32.totalorder %v611, 0
      %vm700 = vcmp.lt.s32.totalorder %v618, 0
      %vm701 = vcmp.lt.s32.totalorder %v625, 0
      %vm702 = vcmp.lt.s32.totalorder %v632, 0
      %vm703 = vcmp.lt.s32.totalorder %v639, 0
      %vm704 = vmand %vm672, %vm640
      %vm705 = vmand %vm673, %vm641
      %vm706 = vmand %vm674, %vm642
      %vm707 = vmand %vm675, %vm643
      %vm708 = vmand %vm676, %vm644
      %vm709 = vmand %vm677, %vm645
      %vm710 = vmand %vm678, %vm646
      %vm711 = vmand %vm679, %vm647
      %vm712 = vmand %vm680, %vm648
      %vm713 = vmand %vm681, %vm649
      %vm714 = vmand %vm682, %vm650
      %vm715 = vmand %vm683, %vm651
      %vm716 = vmand %vm684, %vm652
      %vm717 = vmand %vm685, %vm653
      %vm718 = vmand %vm686, %vm654
      %vm719 = vmand %vm687, %vm655
      %vm720 = vmand %vm688, %vm656
      %vm721 = vmand %vm689, %vm657
      %vm722 = vmand %vm690, %vm658
      %vm723 = vmand %vm691, %vm659
      %vm724 = vmand %vm692, %vm660
      %vm725 = vmand %vm693, %vm661
      %vm726 = vmand %vm694, %vm662
      %vm727 = vmand %vm695, %vm663
      %vm728 = vmand %vm696, %vm664
      %vm729 = vmand %vm697, %vm665
      %vm730 = vmand %vm698, %vm666
      %vm731 = vmand %vm699, %vm667
      %vm732 = vmand %vm700, %vm668
      %vm733 = vmand %vm701, %vm669
      %vm734 = vmand %vm702, %vm670
      %vm735 = vmand %vm703, %vm671
      %v736 = vadd.s32 %v422, 16
      %v737 = vadd.s32 %v429, 16
      %v738 = vadd.s32 %v436, 16
      %v739 = vadd.s32 %v443, 16
      %v740 = vadd.s32 %v450, 16
      %v741 = vadd.s32 %v457, 16
      %v742 = vadd.s32 %v464, 16
      %v743 = vadd.s32 %v471, 16
      %v744 = vadd.s32 %v478, 16
      %v745 = vadd.s32 %v485, 16
      %v746 = vadd.s32 %v492, 16
      %v747 = vadd.s32 %v499, 16
      %v748 = vadd.s32 %v506, 16
      %v749 = vadd.s32 %v513, 16
      %v750 = vadd.s32 %v520, 16
      %v751 = vadd.s32 %v527, 16
      %v752 = vadd.s32 %v534, 16
      %v753 = vadd.s32 %v541, 16
      %v754 = vadd.s32 %v548, 16
      %v755 = vadd.s32 %v555, 16
      %v756 = vadd.s32 %v562, 16
      %v757 = vadd.s32 %v569, 16
      %v758 = vadd.s32 %v576, 16
      %v759 = vadd.s32 %v583, 16
      %v760 = vadd.s32 %v590, 16
      %v761 = vadd.s32 %v597, 16
      %v762 = vadd.s32 %v604, 16
      %v763 = vadd.s32 %v611, 16
      %v764 = vadd.s32 %v618, 16
      %v765 = vadd.s32 %v625, 16
      %v766 = vadd.s32 %v632, 16
      %v767 = vadd.s32 %v639, 16
      %v768 = vsel %vm704, %v736, %v422
      %v769 = vsel %vm705, %v737, %v429
      %v770 = vsel %vm706, %v738, %v436
      %v771 = vsel %vm707, %v739, %v443
      %v772 = vsel %vm708, %v740, %v450
      %v773 = vsel %vm709, %v741, %v457
      %v774 = vsel %vm710, %v742, %v464
      %v775 = vsel %vm711, %v743, %v471
      %v776 = vsel %vm712, %v744, %v478
      %v777 = vsel %vm713, %v745, %v485
      %v778 = vsel %vm714, %v746, %v492
      %v779 = vsel %vm715, %v747, %v499
      %v780 = vsel %vm716, %v748, %v506
      %v781 = vsel %vm717, %v749, %v513
      %v782 = vsel %vm718, %v750, %v520
      %v783 = vsel %vm719, %v751, %v527
      %v784 = vsel %vm720, %v752, %v534
      %v785 = vsel %vm721, %v753, %v541
      %v786 = vsel %vm722, %v754, %v548
      %v787 = vsel %vm723, %v755, %v555
      %v788 = vsel %vm724, %v756, %v562
      %v789 = vsel %vm725, %v757, %v569
      %v790 = vsel %vm726, %v758, %v576
      %v791 = vsel %vm727, %v759, %v583
      %v792 = vsel %vm728, %v760, %v590
      %v793 = vsel %vm729, %v761, %v597
      %v794 = vsel %vm730, %v762, %v604
      %v795 = vsel %vm731, %v763, %v611
      %v796 = vsel %vm732, %v764, %v618
      %v797 = vsel %vm733, %v765, %v625
      %v798 = vsel %vm734, %v766, %v632
      %v799 = vsel %vm735, %v767, %v639
      %vm800 = vcmp.eq.s32.totalorder %v768, 0
      %vm801 = vcmp.eq.s32.totalorder %v769, 0
      %vm802 = vcmp.eq.s32.totalorder %v770, 0
      %vm803 = vcmp.eq.s32.totalorder %v771, 0
      %vm804 = vcmp.eq.s32.totalorder %v772, 0
      %vm805 = vcmp.eq.s32.totalorder %v773, 0
      %vm806 = vcmp.eq.s32.totalorder %v774, 0
      %vm807 = vcmp.eq.s32.totalorder %v775, 0
      %vm808 = vcmp.eq.s32.totalorder %v776, 0
      %vm809 = vcmp.eq.s32.totalorder %v777, 0
      %vm810 = vcmp.eq.s32.totalorder %v778, 0
      %vm811 = vcmp.eq.s32.totalorder %v779, 0
      %vm812 = vcmp.eq.s32.totalorder %v780, 0
      %vm813 = vcmp.eq.s32.totalorder %v781, 0
      %vm814 = vcmp.eq.s32.totalorder %v782, 0
      %vm815 = vcmp.eq.s32.totalorder %v783, 0
      %vm816 = vcmp.eq.s32.totalorder %v784, 0
      %vm817 = vcmp.eq.s32.totalorder %v785, 0
      %vm818 = vcmp.eq.s32.totalorder %v786, 0
      %vm819 = vcmp.eq.s32.totalorder %v787, 0
      %vm820 = vcmp.eq.s32.totalorder %v788, 0
      %vm821 = vcmp.eq.s32.totalorder %v789, 0
      %vm822 = vcmp.eq.s32.totalorder %v790, 0
      %vm823 = vcmp.eq.s32.totalorder %v791, 0
      %vm824 = vcmp.eq.s32.totalorder %v792, 0
      %vm825 = vcmp.eq.s32.totalorder %v793, 0
      %vm826 = vcmp.eq.s32.totalorder %v794, 0
      %vm827 = vcmp.eq.s32.totalorder %v795, 0
      %vm828 = vcmp.eq.s32.totalorder %v796, 0
      %vm829 = vcmp.eq.s32.totalorder %v797, 0
      %vm830 = vcmp.eq.s32.totalorder %v798, 0
      %vm831 = vcmp.eq.s32.totalorder %v799, 0
      %v832 = vrot.slane %v351, 7
      %v833 = vrot.slane %v352, 7
      %v834 = vrot.slane %v353, 7
      %v835 = vrot.slane %v354, 7
      %v836 = vrot.slane %v355, 7
      %v837 = vrot.slane %v356, 7
      %v838 = vrot.slane %v357, 7
      %v839 = vrot.slane %v358, 7
      %v840 = vrot.slane %v359, 7
      %v841 = vrot.slane %v360, 7
      %v842 = vrot.slane %v361, 7
      %v843 = vrot.slane %v362, 7
      %v844 = vrot.slane %v363, 7
      %v845 = vrot.slane %v364, 7
      %v846 = vrot.slane %v365, 7
      %v847 = vrot.slane %v366, 7
      %v848 = vrot.slane %v367, 7
      %v849 = vrot.slane %v368, 7
      %v850 = vrot.slane %v369, 7
      %v851 = vrot.slane %v370, 7
      %v852 = vrot.slane %v371, 7
      %v853 = vrot.slane %v372, 7
      %v854 = vrot.slane %v373, 7
      %v855 = vrot.slane %v374, 7
      %v856 = vrot.slane %v375, 7
      %v857 = vrot.slane %v376, 7
      %v858 = vrot.slane %v377, 7
      %v859 = vrot.slane %v378, 7
      %v860 = vrot.slane %v379, 7
      %v861 = vrot.slane %v380, 7
      %v862 = vrot.slane %v381, 7
      %v863 = vrot.slane %v382, 7
      %vm864 = vcmp.lt.s32.totalorder %v384, 1
      %v865 = vsel %vm864, %v862, %v863
      %v866 = vsel %vm864, %v861, %v862
      %v867 = vsel %vm864, %v860, %v861
      %v868 = vsel %vm864, %v859, %v860
      %v869 = vsel %vm864, %v858, %v859
      %v870 = vsel %vm864, %v857, %v858
      %v871 = vsel %vm864, %v856, %v857
      %v872 = vsel %vm864, %v855, %v856
      %v873 = vsel %vm864, %v854, %v855
      %v874 = vsel %vm864, %v853, %v854
      %v875 = vsel %vm864, %v852, %v853
      %v876 = vsel %vm864, %v851, %v852
      %v877 = vsel %vm864, %v850, %v851
      %v878 = vsel %vm864, %v849, %v850
      %v879 = vsel %vm864, %v848, %v849
      %v880 = vsel %vm864, %v847, %v848
      %v881 = vsel %vm864, %v846, %v847
      %v882 = vsel %vm864, %v845, %v846
      %v883 = vsel %vm864, %v844, %v845
      %v884 = vsel %vm864, %v843, %v844
      %v885 = vsel %vm864, %v842, %v843
      %v886 = vsel %vm864, %v841, %v842
      %v887 = vsel %vm864, %v840, %v841
      %v888 = vsel %vm864, %v839, %v840
      %v889 = vsel %vm864, %v838, %v839
      %v890 = vsel %vm864, %v837, %v838
      %v891 = vsel %vm864, %v836, %v837
      %v892 = vsel %vm864, %v835, %v836
      %v893 = vsel %vm864, %v834, %v835
      %v894 = vsel %vm864, %v833, %v834
      %v895 = vsel %vm864, %v832, %v833
      %v896 = vsel %vm864, %v863, %v832
      %v897 = vsel %vm800, 1, 0
      %v898 = vsel %vm801, 1, 0
      %v899 = vsel %vm802, 1, 0
      %v900 = vsel %vm803, 1, 0
      %v901 = vsel %vm804, 1, 0
      %v902 = vsel %vm805, 1, 0
      %v903 = vsel %vm806, 1, 0
      %v904 = vsel %vm807, 1, 0
      %v905 = vsel %vm808, 1, 0
      %v906 = vsel %vm809, 1, 0
      %v907 = vsel %vm810, 1, 0
      %v908 = vsel %vm811, 1, 0
      %v909 = vsel %vm812, 1, 0
      %v910 = vsel %vm813, 1, 0
      %v911 = vsel %vm814, 1, 0
      %v912 = vsel %vm815, 1, 0
      %v913 = vsel %vm816, 1, 0
      %v914 = vsel %vm817, 1, 0
      %v915 = vsel %vm818, 1, 0
      %v916 = vsel %vm819, 1, 0
      %v917 = vsel %vm820, 1, 0
      %v918 = vsel %vm821, 1, 0
      %v919 = vsel %vm822, 1, 0
      %v920 = vsel %vm823, 1, 0
      %v921 = vsel %vm824, 1, 0
      %v922 = vsel %vm825, 1, 0
      %v923 = vsel %vm826, 1, 0
      %v924 = vsel %vm827, 1, 0
      %v925 = vsel %vm828, 1, 0
      %v926 = vsel %vm829, 1, 0
      %v927 = vsel %vm830, 1, 0
      %v928 = vsel %vm831, 1, 0
      %vm929 = vcmp.eq.s32.totalorder %v897, 1
      %vm930 = vcmp.eq.s32.totalorder %v898, 1
      %vm931 = vcmp.eq.s32.totalorder %v899, 1
      %vm932 = vcmp.eq.s32.totalorder %v900, 1
      %vm933 = vcmp.eq.s32.totalorder %v901, 1
      %vm934 = vcmp.eq.s32.totalorder %v902, 1
      %vm935 = vcmp.eq.s32.totalorder %v903, 1
      %vm936 = vcmp.eq.s32.totalorder %v904, 1
      %vm937 = vcmp.eq.s32.totalorder %v905, 1
      %vm938 = vcmp.eq.s32.totalorder %v906, 1
      %vm939 = vcmp.eq.s32.totalorder %v907, 1
      %vm940 = vcmp.eq.s32.totalorder %v908, 1
      %vm941 = vcmp.eq.s32.totalorder %v909, 1
      %vm942 = vcmp.eq.s32.totalorder %v910, 1
      %vm943 = vcmp.eq.s32.totalorder %v911, 1
      %vm944 = vcmp.eq.s32.totalorder %v912, 1
      %vm945 = vcmp.eq.s32.totalorder %v913, 1
      %vm946 = vcmp.eq.s32.totalorder %v914, 1
      %vm947 = vcmp.eq.s32.totalorder %v915, 1
      %vm948 = vcmp.eq.s32.totalorder %v916, 1
      %vm949 = vcmp.eq.s32.totalorder %v917, 1
      %vm950 = vcmp.eq.s32.totalorder %v918, 1
      %vm951 = vcmp.eq.s32.totalorder %v919, 1
      %vm952 = vcmp.eq.s32.totalorder %v920, 1
      %vm953 = vcmp.eq.s32.totalorder %v921, 1
      %vm954 = vcmp.eq.s32.totalorder %v922, 1
      %vm955 = vcmp.eq.s32.totalorder %v923, 1
      %vm956 = vcmp.eq.s32.totalorder %v924, 1
      %vm957 = vcmp.eq.s32.totalorder %v925, 1
      %vm958 = vcmp.eq.s32.totalorder %v926, 1
      %vm959 = vcmp.eq.s32.totalorder %v927, 1
      %vm960 = vcmp.eq.s32.totalorder %v928, 1
      %v961 = vsel %vm929, 0.0, %v896
      %v962 = vsel %vm930, 0.0, %v895
      %v963 = vsel %vm931, 0.0, %v894
      %v964 = vsel %vm932, 0.0, %v893
      %v965 = vsel %vm933, 0.0, %v892
      %v966 = vsel %vm934, 0.0, %v891
      %v967 = vsel %vm935, 0.0, %v890
      %v968 = vsel %vm936, 0.0, %v889
      %v969 = vsel %vm937, 0.0, %v888
      %v970 = vsel %vm938, 0.0, %v887
      %v971 = vsel %vm939, 0.0, %v886
      %v972 = vsel %vm940, 0.0, %v885
      %v973 = vsel %vm941, 0.0, %v884
      %v974 = vsel %vm942, 0.0, %v883
      %v975 = vsel %vm943, 0.0, %v882
      %v976 = vsel %vm944, 0.0, %v881
      %v977 = vsel %vm945, 0.0, %v880
      %v978 = vsel %vm946, 0.0, %v879
      %v979 = vsel %vm947, 0.0, %v878
      %v980 = vsel %vm948, 0.0, %v877
      %v981 = vsel %vm949, 0.0, %v876
      %v982 = vsel %vm950, 0.0, %v875
      %v983 = vsel %vm951, 0.0, %v874
      %v984 = vsel %vm952, 0.0, %v873
      %v985 = vsel %vm953, 0.0, %v872
      %v986 = vsel %vm954, 0.0, %v871
      %v987 = vsel %vm955, 0.0, %v870
      %v988 = vsel %vm956, 0.0, %v869
      %v989 = vsel %vm957, 0.0, %v868
      %v990 = vsel %vm958, 0.0, %v867
      %v991 = vsel %vm959, 0.0, %v866
      %v992 = vsel %vm960, 0.0, %v865
      %vm993 = vcmp.eq.s32.totalorder %v768, 15
      %vm994 = vcmp.eq.s32.totalorder %v769, 15
      %vm995 = vcmp.eq.s32.totalorder %v770, 15
      %vm996 = vcmp.eq.s32.totalorder %v771, 15
      %vm997 = vcmp.eq.s32.totalorder %v772, 15
      %vm998 = vcmp.eq.s32.totalorder %v773, 15
      %vm999 = vcmp.eq.s32.totalorder %v774, 15
      %vm1000 = vcmp.eq.s32.totalorder %v775, 15
      %vm1001 = vcmp.eq.s32.totalorder %v776, 15
      %vm1002 = vcmp.eq.s32.totalorder %v777, 15
      %vm1003 = vcmp.eq.s32.totalorder %v778, 15
      %vm1004 = vcmp.eq.s32.totalorder %v779, 15
      %vm1005 = vcmp.eq.s32.totalorder %v780, 15
      %vm1006 = vcmp.eq.s32.totalorder %v781, 15
      %vm1007 = vcmp.eq.s32.totalorder %v782, 15
      %vm1008 = vcmp.eq.s32.totalorder %v783, 15
      %vm1009 = vcmp.eq.s32.totalorder %v784, 15
      %vm1010 = vcmp.eq.s32.totalorder %v785, 15
      %vm1011 = vcmp.eq.s32.totalorder %v786, 15
      %vm1012 = vcmp.eq.s32.totalorder %v787, 15
      %vm1013 = vcmp.eq.s32.totalorder %v788, 15
      %vm1014 = vcmp.eq.s32.totalorder %v789, 15
      %vm1015 = vcmp.eq.s32.totalorder %v790, 15
      %vm1016 = vcmp.eq.s32.totalorder %v791, 15
      %vm1017 = vcmp.eq.s32.totalorder %v792, 15
      %vm1018 = vcmp.eq.s32.totalorder %v793, 15
      %vm1019 = vcmp.eq.s32.totalorder %v794, 15
      %vm1020 = vcmp.eq.s32.totalorder %v795, 15
      %vm1021 = vcmp.eq.s32.totalorder %v796, 15
      %vm1022 = vcmp.eq.s32.totalorder %v797, 15
      %vm1023 = vcmp.eq.s32.totalorder %v798, 15
      %vm1024 = vcmp.eq.s32.totalorder %v799, 15
      %v1025 = vrot.slane %v351, 1
      %v1026 = vrot.slane %v352, 1
      %v1027 = vrot.slane %v353, 1
      %v1028 = vrot.slane %v354, 1
      %v1029 = vrot.slane %v355, 1
      %v1030 = vrot.slane %v356, 1
      %v1031 = vrot.slane %v357, 1
      %v1032 = vrot.slane %v358, 1
      %v1033 = vrot.slane %v359, 1
      %v1034 = vrot.slane %v360, 1
      %v1035 = vrot.slane %v361, 1
      %v1036 = vrot.slane %v362, 1
      %v1037 = vrot.slane %v363, 1
      %v1038 = vrot.slane %v364, 1
      %v1039 = vrot.slane %v365, 1
      %v1040 = vrot.slane %v366, 1
      %v1041 = vrot.slane %v367, 1
      %v1042 = vrot.slane %v368, 1
      %v1043 = vrot.slane %v369, 1
      %v1044 = vrot.slane %v370, 1
      %v1045 = vrot.slane %v371, 1
      %v1046 = vrot.slane %v372, 1
      %v1047 = vrot.slane %v373, 1
      %v1048 = vrot.slane %v374, 1
      %v1049 = vrot.slane %v375, 1
      %v1050 = vrot.slane %v376, 1
      %v1051 = vrot.slane %v377, 1
      %v1052 = vrot.slane %v378, 1
      %v1053 = vrot.slane %v379, 1
      %v1054 = vrot.slane %v380, 1
      %v1055 = vrot.slane %v381, 1
      %v1056 = vrot.slane %v382, 1
      %vm1057 = vcmp.lt.s32.totalorder %v384, 7
      %v1058 = vsel %vm1057, %v1055, %v1056
      %v1059 = vsel %vm1057, %v1054, %v1055
      %v1060 = vsel %vm1057, %v1053, %v1054
      %v1061 = vsel %vm1057, %v1052, %v1053
      %v1062 = vsel %vm1057, %v1051, %v1052
      %v1063 = vsel %vm1057, %v1050, %v1051
      %v1064 = vsel %vm1057, %v1049, %v1050
      %v1065 = vsel %vm1057, %v1048, %v1049
      %v1066 = vsel %vm1057, %v1047, %v1048
      %v1067 = vsel %vm1057, %v1046, %v1047
      %v1068 = vsel %vm1057, %v1045, %v1046
      %v1069 = vsel %vm1057, %v1044, %v1045
      %v1070 = vsel %vm1057, %v1043, %v1044
      %v1071 = vsel %vm1057, %v1042, %v1043
      %v1072 = vsel %vm1057, %v1041, %v1042
      %v1073 = vsel %vm1057, %v1040, %v1041
      %v1074 = vsel %vm1057, %v1039, %v1040
      %v1075 = vsel %vm1057, %v1038, %v1039
      %v1076 = vsel %vm1057, %v1037, %v1038
      %v1077 = vsel %vm1057, %v1036, %v1037
      %v1078 = vsel %vm1057, %v1035, %v1036
      %v1079 = vsel %vm1057, %v1034, %v1035
      %v1080 = vsel %vm1057, %v1033, %v1034
      %v1081 = vsel %vm1057, %v1032, %v1033
      %v1082 = vsel %vm1057, %v1031, %v1032
      %v1083 = vsel %vm1057, %v1030, %v1031
      %v1084 = vsel %vm1057, %v1029, %v1030
      %v1085 = vsel %vm1057, %v1028, %v1029
      %v1086 = vsel %vm1057, %v1027, %v1028
      %v1087 = vsel %vm1057, %v1026, %v1027
      %v1088 = vsel %vm1057, %v1025, %v1026
      %v1089 = vsel %vm1057, %v1056, %v1025
      %v1090 = vsel %vm993, 1, 0
      %v1091 = vsel %vm994, 1, 0
      %v1092 = vsel %vm995, 1, 0
      %v1093 = vsel %vm996, 1, 0
      %v1094 = vsel %vm997, 1, 0
      %v1095 = vsel %vm998, 1, 0
      %v1096 = vsel %vm999, 1, 0
      %v1097 = vsel %vm1000, 1, 0
      %v1098 = vsel %vm1001, 1, 0
      %v1099 = vsel %vm1002, 1, 0
      %v1100 = vsel %vm1003, 1, 0
      %v1101 = vsel %vm1004, 1, 0
      %v1102 = vsel %vm1005, 1, 0
      %v1103 = vsel %vm1006, 1, 0
      %v1104 = vsel %vm1007, 1, 0
      %v1105 = vsel %vm1008, 1, 0
      %v1106 = vsel %vm1009, 1, 0
      %v1107 = vsel %vm1010, 1, 0
      %v1108 = vsel %vm1011, 1, 0
      %v1109 = vsel %vm1012, 1, 0
      %v1110 = vsel %vm1013, 1, 0
      %v1111 = vsel %vm1014, 1, 0
      %v1112 = vsel %vm1015, 1, 0
      %v1113 = vsel %vm1016, 1, 0
      %v1114 = vsel %vm1017, 1, 0
      %v1115 = vsel %vm1018, 1, 0
      %v1116 = vsel %vm1019, 1, 0
      %v1117 = vsel %vm1020, 1, 0
      %v1118 = vsel %vm1021, 1, 0
      %v1119 = vsel %vm1022, 1, 0
      %v1120 = vsel %vm1023, 1, 0
      %v1121 = vsel %vm1024, 1, 0
      %vm1122 = vcmp.eq.s32.totalorder %v1090, 1
      %vm1123 = vcmp.eq.s32.totalorder %v1091, 1
      %vm1124 = vcmp.eq.s32.totalorder %v1092, 1
      %vm1125 = vcmp.eq.s32.totalorder %v1093, 1
      %vm1126 = vcmp.eq.s32.totalorder %v1094, 1
      %vm1127 = vcmp.eq.s32.totalorder %v1095, 1
      %vm1128 = vcmp.eq.s32.totalorder %v1096, 1
      %vm1129 = vcmp.eq.s32.totalorder %v1097, 1
      %vm1130 = vcmp.eq.s32.totalorder %v1098, 1
      %vm1131 = vcmp.eq.s32.totalorder %v1099, 1
      %vm1132 = vcmp.eq.s32.totalorder %v1100, 1
      %vm1133 = vcmp.eq.s32.totalorder %v1101, 1
      %vm1134 = vcmp.eq.s32.totalorder %v1102, 1
      %vm1135 = vcmp.eq.s32.totalorder %v1103, 1
      %vm1136 = vcmp.eq.s32.totalorder %v1104, 1
      %vm1137 = vcmp.eq.s32.totalorder %v1105, 1
      %vm1138 = vcmp.eq.s32.totalorder %v1106, 1
      %vm1139 = vcmp.eq.s32.totalorder %v1107, 1
      %vm1140 = vcmp.eq.s32.totalorder %v1108, 1
      %vm1141 = vcmp.eq.s32.totalorder %v1109, 1
      %vm1142 = vcmp.eq.s32.totalorder %v1110, 1
      %vm1143 = vcmp.eq.s32.totalorder %v1111, 1
      %vm1144 = vcmp.eq.s32.totalorder %v1112, 1
      %vm1145 = vcmp.eq.s32.totalorder %v1113, 1
      %vm1146 = vcmp.eq.s32.totalorder %v1114, 1
      %vm1147 = vcmp.eq.s32.totalorder %v1115, 1
      %vm1148 = vcmp.eq.s32.totalorder %v1116, 1
      %vm1149 = vcmp.eq.s32.totalorder %v1117, 1
      %vm1150 = vcmp.eq.s32.totalorder %v1118, 1
      %vm1151 = vcmp.eq.s32.totalorder %v1119, 1
      %vm1152 = vcmp.eq.s32.totalorder %v1120, 1
      %vm1153 = vcmp.eq.s32.totalorder %v1121, 1
      %v1154 = vsel %vm1122, 0.0, %v1088
      %v1155 = vsel %vm1123, 0.0, %v1087
      %v1156 = vsel %vm1124, 0.0, %v1086
      %v1157 = vsel %vm1125, 0.0, %v1085
      %v1158 = vsel %vm1126, 0.0, %v1084
      %v1159 = vsel %vm1127, 0.0, %v1083
      %v1160 = vsel %vm1128, 0.0, %v1082
      %v1161 = vsel %vm1129, 0.0, %v1081
      %v1162 = vsel %vm1130, 0.0, %v1080
      %v1163 = vsel %vm1131, 0.0, %v1079
      %v1164 = vsel %vm1132, 0.0, %v1078
      %v1165 = vsel %vm1133, 0.0, %v1077
      %v1166 = vsel %vm1134, 0.0, %v1076
      %v1167 = vsel %vm1135, 0.0, %v1075
      %v1168 = vsel %vm1136, 0.0, %v1074
      %v1169 = vsel %vm1137, 0.0, %v1073
      %v1170 = vsel %vm1138, 0.0, %v1072
      %v1171 = vsel %vm1139, 0.0, %v1071
      %v1172 = vsel %vm1140, 0.0, %v1070
      %v1173 = vsel %vm1141, 0.0, %v1069
      %v1174 = vsel %vm1142, 0.0, %v1068
      %v1175 = vsel %vm1143, 0.0, %v1067
      %v1176 = vsel %vm1144, 0.0, %v1066
      %v1177 = vsel %vm1145, 0.0, %v1065
      %v1178 = vsel %vm1146, 0.0, %v1064
      %v1179 = vsel %vm1147, 0.0, %v1063
      %v1180 = vsel %vm1148, 0.0, %v1062
      %v1181 = vsel %vm1149, 0.0, %v1061
      %v1182 = vsel %vm1150, 0.0, %v1060
      %v1183 = vsel %vm1151, 0.0, %v1059
      %v1184 = vsel %vm1152, 0.0, %v1058
      %v1185 = vsel %vm1153, 0.0, %v1089
      %1186 = vst [vmem:[#allocation2] sm:$0xff] 0
      %1187 = vst [vmem:[#allocation2 + $0x8] sm:$0xff] 0
      %1188 = vst [vmem:[#allocation2 + $0x10] sm:$0xff] 0
      %1189 = vst [vmem:[#allocation2 + $0x198] sm:$0xff] 0
      %1190 = vst [vmem:[#allocation2 + $0x1a0] sm:$0xff] 0
      %1191 = vst [vmem:[#allocation2 + $0x1a8] sm:$0xff] 0
      %v1192 = vpack.c.bf16 %v962, %v961
      %v1193 = vpack.c.bf16 %v964, %v963
      %v1194 = vpack.c.bf16 %v966, %v965
      %v1195 = vpack.c.bf16 %v968, %v967
      %v1196 = vpack.c.bf16 %v970, %v969
      %v1197 = vpack.c.bf16 %v972, %v971
      %v1198 = vpack.c.bf16 %v974, %v973
      %v1199 = vpack.c.bf16 %v976, %v975
      %v1200 = vpack.c.bf16 %v978, %v977
      %v1201 = vpack.c.bf16 %v980, %v979
      %v1202 = vpack.c.bf16 %v982, %v981
      %v1203 = vpack.c.bf16 %v984, %v983
      %v1204 = vpack.c.bf16 %v986, %v985
      %v1205 = vpack.c.bf16 %v988, %v987
      %v1206 = vpack.c.bf16 %v990, %v989
      %v1207 = vpack.c.bf16 %v992, %v991
      %1208 = vst [vmem:[#allocation2 + $0x18] sm:$0xff] %v1192
      %1209 = vst [vmem:[#allocation2 + $0x30] sm:$0xff] %v1193
      %1210 = vst [vmem:[#allocation2 + $0x48] sm:$0xff] %v1194
      %1211 = vst [vmem:[#allocation2 + $0x60] sm:$0xff] %v1195
      %1212 = vst [vmem:[#allocation2 + $0x78] sm:$0xff] %v1196
      %1213 = vst [vmem:[#allocation2 + $0x90] sm:$0xff] %v1197
      %1214 = vst [vmem:[#allocation2 + $0xa8] sm:$0xff] %v1198
      %1215 = vst [vmem:[#allocation2 + $0xc0] sm:$0xff] %v1199
      %1216 = vst [vmem:[#allocation2 + $0xd8] sm:$0xff] %v1200
      %1217 = vst [vmem:[#allocation2 + $0xf0] sm:$0xff] %v1201
      %1218 = vst [vmem:[#allocation2 + $0x108] sm:$0xff] %v1202
      %1219 = vst [vmem:[#allocation2 + $0x120] sm:$0xff] %v1203
      %1220 = vst [vmem:[#allocation2 + $0x138] sm:$0xff] %v1204
      %1221 = vst [vmem:[#allocation2 + $0x150] sm:$0xff] %v1205
      %1222 = vst [vmem:[#allocation2 + $0x168] sm:$0xff] %v1206
      %1223 = vst [vmem:[#allocation2 + $0x180] sm:$0xff] %v1207
      %v1224 = vpack.c.bf16 %v352, %v351
      %v1225 = vpack.c.bf16 %v354, %v353
      %v1226 = vpack.c.bf16 %v356, %v355
      %v1227 = vpack.c.bf16 %v358, %v357
      %v1228 = vpack.c.bf16 %v360, %v359
      %v1229 = vpack.c.bf16 %v362, %v361
      %v1230 = vpack.c.bf16 %v364, %v363
      %v1231 = vpack.c.bf16 %v366, %v365
      %v1232 = vpack.c.bf16 %v368, %v367
      %v1233 = vpack.c.bf16 %v370, %v369
      %v1234 = vpack.c.bf16 %v372, %v371
      %v1235 = vpack.c.bf16 %v374, %v373
      %v1236 = vpack.c.bf16 %v376, %v375
      %v1237 = vpack.c.bf16 %v378, %v377
      %v1238 = vpack.c.bf16 %v380, %v379
      %v1239 = vpack.c.bf16 %v382, %v381
      %1240 = vst [vmem:[#allocation2 + $0x20] sm:$0xff] %v1224
      %1241 = vst [vmem:[#allocation2 + $0x38] sm:$0xff] %v1225
      %1242 = vst [vmem:[#allocation2 + $0x50] sm:$0xff] %v1226
      %1243 = vst [vmem:[#allocation2 + $0x68] sm:$0xff] %v1227
      %1244 = vst [vmem:[#allocation2 + $0x80] sm:$0xff] %v1228
      %1245 = vst [vmem:[#allocation2 + $0x98] sm:$0xff] %v1229
      %1246 = vst [vmem:[#allocation2 + $0xb0] sm:$0xff] %v1230
      %1247 = vst [vmem:[#allocation2 + $0xc8] sm:$0xff] %v1231
      %1248 = vst [vmem:[#allocation2 + $0xe0] sm:$0xff] %v1232
      %1249 = vst [vmem:[#allocation2 + $0xf8] sm:$0xff] %v1233
      %1250 = vst [vmem:[#allocation2 + $0x110] sm:$0xff] %v1234
      %1251 = vst [vmem:[#allocation2 + $0x128] sm:$0xff] %v1235
      %1252 = vst [vmem:[#allocation2 + $0x140] sm:$0xff] %v1236
      %1253 = vst [vmem:[#allocation2 + $0x158] sm:$0xff] %v1237
      %1254 = vst [vmem:[#allocation2 + $0x170] sm:$0xff] %v1238
      %1255 = vst [vmem:[#allocation2 + $0x188] sm:$0xff] %v1239
      %v1256 = vpack.c.bf16 %v1155, %v1154
      %v1257 = vpack.c.bf16 %v1157, %v1156
      %v1258 = vpack.c.bf16 %v1159, %v1158
      %v1259 = vpack.c.bf16 %v1161, %v1160
      %v1260 = vpack.c.bf16 %v1163, %v1162
      %v1261 = vpack.c.bf16 %v1165, %v1164
      %v1262 = vpack.c.bf16 %v1167, %v1166
      %v1263 = vpack.c.bf16 %v1169, %v1168
      %v1264 = vpack.c.bf16 %v1171, %v1170
      %v1265 = vpack.c.bf16 %v1173, %v1172
      %v1266 = vpack.c.bf16 %v1175, %v1174
      %v1267 = vpack.c.bf16 %v1177, %v1176
      %v1268 = vpack.c.bf16 %v1179, %v1178
      %v1269 = vpack.c.bf16 %v1181, %v1180
      %v1270 = vpack.c.bf16 %v1183, %v1182
      %v1271 = vpack.c.bf16 %v1185, %v1184
      %1272 = vst [vmem:[#allocation2 + $0x28] sm:$0xff] %v1256
      %1273 = vst [vmem:[#allocation2 + $0x40] sm:$0xff] %v1257
      %1274 = vst [vmem:[#allocation2 + $0x58] sm:$0xff] %v1258
      %1275 = vst [vmem:[#allocation2 + $0x70] sm:$0xff] %v1259
      %1276 = vst [vmem:[#allocation2 + $0x88] sm:$0xff] %v1260
      %1277 = vst [vmem:[#allocation2 + $0xa0] sm:$0xff] %v1261
      %1278 = vst [vmem:[#allocation2 + $0xb8] sm:$0xff] %v1262
      %1279 = vst [vmem:[#allocation2 + $0xd0] sm:$0xff] %v1263
      %1280 = vst [vmem:[#allocation2 + $0xe8] sm:$0xff] %v1264
      %1281 = vst [vmem:[#allocation2 + $0x100] sm:$0xff] %v1265
      %1282 = vst [vmem:[#allocation2 + $0x118] sm:$0xff] %v1266
      %1283 = vst [vmem:[#allocation2 + $0x130] sm:$0xff] %v1267
      %1284 = vst [vmem:[#allocation2 + $0x148] sm:$0xff] %v1268
      %1285 = vst [vmem:[#allocation2 + $0x160] sm:$0xff] %v1269
      %1286 = vst [vmem:[#allocation2 + $0x178] sm:$0xff] %v1270
      %1287 = vst [vmem:[#allocation2 + $0x190] sm:$0xff] %v1271
      %v1288 = vld [vmem:[#allocation2] sm:$0xff]
      %v1289 = vld [vmem:[#allocation2 + $0x8] sm:$0xff]
      %v1290 = vld [vmem:[#allocation2 + $0x10] sm:$0xff]
      %v1291 = vld [vmem:[#allocation2 + $0x18] sm:$0xff]
      %v1292 = vld [vmem:[#allocation2 + $0x20] sm:$0xff]
      %v1293 = vld [vmem:[#allocation2 + $0x28] sm:$0xff]
      %v1294 = vld [vmem:[#allocation2 + $0x30] sm:$0xff]
      %v1295 = vld [vmem:[#allocation2 + $0x38] sm:$0xff]
      %v1296 = vld [vmem:[#allocation2 + $0x40] sm:$0xff]
      %v1297 = vld [vmem:[#allocation2 + $0x48] sm:$0xff]
      %v1298 = vld [vmem:[#allocation2 + $0x50] sm:$0xff]
      %v1299 = vld [vmem:[#allocation2 + $0x58] sm:$0xff]
      %v1300 = vld [vmem:[#allocation2 + $0x60] sm:$0xff]
      %v1301 = vld [vmem:[#allocation2 + $0x68] sm:$0xff]
      %v1302 = vld [vmem:[#allocation2 + $0x70] sm:$0xff]
      %v1303 = vld [vmem:[#allocation2 + $0x78] sm:$0xff]
      %v1304 = vld [vmem:[#allocation2 + $0x80] sm:$0xff]
      %v1305 = vld [vmem:[#allocation2 + $0x88] sm:$0xff]
      %v1306 = vld [vmem:[#allocation2 + $0x90] sm:$0xff]
      %v1307 = vld [vmem:[#allocation2 + $0x98] sm:$0xff]
      %v1308 = vld [vmem:[#allocation2 + $0xa0] sm:$0xff]
      %v1309 = vld [vmem:[#allocation2 + $0xa8] sm:$0xff]
      %v1310 = vld [vmem:[#allocation2 + $0xb0] sm:$0xff]
      %v1311 = vld [vmem:[#allocation2 + $0xb8] sm:$0xff]
      %v1312 = vld [vmem:[#allocation2 + $0xc0] sm:$0xff]
      %v1313 = vld [vmem:[#allocation2 + $0xc8] sm:$0xff]
      %v1314 = vld [vmem:[#allocation2 + $0xd0] sm:$0xff]
      %v1315 = vld [vmem:[#allocation2 + $0xd8] sm:$0xff]
      %v1316 = vld [vmem:[#allocation2 + $0xe0] sm:$0xff]
      %v1317 = vld [vmem:[#allocation2 + $0xe8] sm:$0xff]
      %v1318 = vld [vmem:[#allocation2 + $0xf0] sm:$0xff]
      %v1319 = vld [vmem:[#allocation2 + $0xf8] sm:$0xff]
      %v1320 = vld [vmem:[#allocation2 + $0x100] sm:$0xff]
      %v1321 = vld [vmem:[#allocation2 + $0x108] sm:$0xff]
      %v1322 = vld [vmem:[#allocation2 + $0x110] sm:$0xff]
      %v1323 = vld [vmem:[#allocation2 + $0x118] sm:$0xff]
      %v1324 = vld [vmem:[#allocation2 + $0x120] sm:$0xff]
      %v1325 = vld [vmem:[#allocation2 + $0x128] sm:$0xff]
      %v1326 = vld [vmem:[#allocation2 + $0x130] sm:$0xff]
      %v1327 = vld [vmem:[#allocation2 + $0x138] sm:$0xff]
      %v1328 = vld [vmem:[#allocation2 + $0x140] sm:$0xff]
      %v1329 = vld [vmem:[#allocation2 + $0x148] sm:$0xff]
      %v1330 = vld [vmem:[#allocation2 + $0x150] sm:$0xff]
      %v1331 = vld [vmem:[#allocation2 + $0x158] sm:$0xff]
      %v1332 = vld [vmem:[#allocation2 + $0x160] sm:$0xff]
      %v1333 = vld [vmem:[#allocation2 + $0x168] sm:$0xff]
      %v1334 = vld [vmem:[#allocation2 + $0x170] sm:$0xff]
      %v1335 = vld [vmem:[#allocation2 + $0x178] sm:$0xff]
      %v1336 = vld [vmem:[%s1] sm:$0xf]
      %v1337 = vld [vmem:[%s1 + $0x4] sm:$0xf]
      %v1338 = vld [vmem:[%s1 + $0x8] sm:$0xf]
      %v1339 = vld [vmem:[%s1 + $0xc] sm:$0xf]
      %v1340 = vld [vmem:[%s1 + $0x10] sm:$0xf]
      %v1341 = vld [vmem:[%s1 + $0x14] sm:$0xf]
      %v1342 = vld [vmem:[%s1 + $0x18] sm:$0xf]
      %v1343 = vld [vmem:[%s1 + $0x1c] sm:$0xf]
      %v1344 = vld [vmem:[%s1 + $0x20] sm:$0xf]
      %v1345 = vld [vmem:[%s1 + $0x24] sm:$0xf]
      %v1346 = vld [vmem:[%s1 + $0x28] sm:$0xf]
      %v1347 = vld [vmem:[%s1 + $0x2c] sm:$0xf]
      %v1348 = vld [vmem:[%s1 + $0x30] sm:$0xf]
      %v1349 = vld [vmem:[%s1 + $0x34] sm:$0xf]
      %v1350 = vld [vmem:[%s1 + $0x38] sm:$0xf]
      %v1351 = vld [vmem:[%s1 + $0x3c] sm:$0xf]
      %v1352 = vld [vmem:[%s1 + $0x40] sm:$0xf]
      %v1353 = vld [vmem:[%s1 + $0x44] sm:$0xf]
      %v1354 = vld [vmem:[%s1 + $0x48] sm:$0xf]
      %v1355 = vld [vmem:[%s1 + $0x4c] sm:$0xf]
      %v1356 = vld [vmem:[%s1 + $0x50] sm:$0xf]
      %v1357 = vld [vmem:[%s1 + $0x54] sm:$0xf]
      %v1358 = vld [vmem:[%s1 + $0x58] sm:$0xf]
      %v1359 = vld [vmem:[%s1 + $0x5c] sm:$0xf]
      %v1360 = vld [vmem:[%s1 + $0x60] sm:$0xf]
      %v1361 = vld [vmem:[%s1 + $0x64] sm:$0xf]
      %v1362 = vld [vmem:[%s1 + $0x68] sm:$0xf]
      %v1363 = vld [vmem:[%s1 + $0x6c] sm:$0xf]
      %v1364 = vld [vmem:[%s1 + $0x70] sm:$0xf]
      %v1365 = vld [vmem:[%s1 + $0x74] sm:$0xf]
      %v1366 = vld [vmem:[%s1 + $0x78] sm:$0xf]
      %v1367 = vld [vmem:[%s1 + $0x7c] sm:$0xf]
      %v1368 = vld [vmem:[%s1 + $0x80] sm:$0xf]
      %v1369 = vld [vmem:[%s1 + $0x84] sm:$0xf]
      %v1370 = vld [vmem:[%s1 + $0x88] sm:$0xf]
      %v1371 = vld [vmem:[%s1 + $0x8c] sm:$0xf]
      %v1372 = vld [vmem:[%s1 + $0x90] sm:$0xf]
      %v1373 = vld [vmem:[%s1 + $0x94] sm:$0xf]
      %v1374 = vld [vmem:[%s1 + $0x98] sm:$0xf]
      %v1375 = vld [vmem:[%s1 + $0x9c] sm:$0xf]
      %v1376 = vld [vmem:[%s1 + $0xa0] sm:$0xf]
      %v1377 = vld [vmem:[%s1 + $0xa4] sm:$0xf]
      %v1378 = vld [vmem:[%s1 + $0xa8] sm:$0xf]
      %v1379 = vld [vmem:[%s1 + $0xac] sm:$0xf]
      %v1380 = vld [vmem:[%s1 + $0xb0] sm:$0xf]
      %v1381 = vld [vmem:[%s1 + $0xb4] sm:$0xf]
      %v1382 = vld [vmem:[%s1 + $0xb8] sm:$0xf]
      %v1383 = vld [vmem:[%s1 + $0xbc] sm:$0xf]
      %v1384 = vld [vmem:[#allocation2 + $0x180] sm:$0xff]
      %v1385 = vld [vmem:[#allocation2 + $0x188] sm:$0xff]
      %v1386 = vld [vmem:[#allocation2 + $0x190] sm:$0xff]
      %s1387 = scalar_lea.vmem %s1, 192
      %v1388 = vld [vmem:[%s1387] sm:$0xf]
      %v1389 = vld [vmem:[%s1387 + $0x4] sm:$0xf]
      %v1390 = vld [vmem:[%s1387 + $0x8] sm:$0xf]
      %v1391 = vld [vmem:[%s1387 + $0xc] sm:$0xf]
      %v1392 = vld [vmem:[%s1387 + $0x10] sm:$0xf]
      %v1393 = vld [vmem:[%s1387 + $0x14] sm:$0xf]
      %v1394 = vld [vmem:[%s1387 + $0x18] sm:$0xf]
      %v1395 = vld [vmem:[%s1387 + $0x1c] sm:$0xf]
      %v1396 = vld [vmem:[%s1387 + $0x20] sm:$0xf]
      %v1397 = vld [vmem:[%s1387 + $0x24] sm:$0xf]
      %v1398 = vld [vmem:[%s1387 + $0x28] sm:$0xf]
      %v1399 = vld [vmem:[%s1387 + $0x2c] sm:$0xf]
      %v1400 = vld [vmem:[%s1387 + $0x30] sm:$0xf]
      %v1401 = vld [vmem:[%s1387 + $0x34] sm:$0xf]
      %v1402 = vld [vmem:[%s1387 + $0x38] sm:$0xf]
      %v1403 = vld [vmem:[%s1387 + $0x3c] sm:$0xf]
      %v1404 = vld [vmem:[%s1387 + $0x40] sm:$0xf]
      %v1405 = vld [vmem:[%s1387 + $0x44] sm:$0xf]
      %v1406 = vld [vmem:[%s1387 + $0x48] sm:$0xf]
      %v1407 = vld [vmem:[%s1387 + $0x4c] sm:$0xf]
      %v1408 = vld [vmem:[%s1387 + $0x50] sm:$0xf]
      %v1409 = vld [vmem:[%s1387 + $0x54] sm:$0xf]
      %v1410 = vld [vmem:[%s1387 + $0x58] sm:$0xf]
      %v1411 = vld [vmem:[%s1387 + $0x5c] sm:$0xf]
      %v1412 = vld [vmem:[%s1387 + $0x60] sm:$0xf]
      %v1413 = vld [vmem:[%s1387 + $0x64] sm:$0xf]
      %v1414 = vld [vmem:[%s1387 + $0x68] sm:$0xf]
      %v1415 = vld [vmem:[%s1387 + $0x6c] sm:$0xf]
      %v1416 = vld [vmem:[%s1387 + $0x70] sm:$0xf]
      %v1417 = vld [vmem:[%s1387 + $0x74] sm:$0xf]
      %v1418 = vld [vmem:[%s1387 + $0x78] sm:$0xf]
      %v1419 = vld [vmem:[%s1387 + $0x7c] sm:$0xf]
      %v1420 = vld [vmem:[%s1387 + $0x80] sm:$0xf]
      %v1421 = vld [vmem:[%s1387 + $0x84] sm:$0xf]
      %v1422 = vld [vmem:[%s1387 + $0x88] sm:$0xf]
      %v1423 = vld [vmem:[%s1387 + $0x8c] sm:$0xf]
      %v1424 = vld [vmem:[%s1387 + $0x90] sm:$0xf]
      %v1425 = vld [vmem:[%s1387 + $0x94] sm:$0xf]
      %v1426 = vld [vmem:[%s1387 + $0x98] sm:$0xf]
      %v1427 = vld [vmem:[%s1387 + $0x9c] sm:$0xf]
      %v1428 = vld [vmem:[%s1387 + $0xa0] sm:$0xf]
      %v1429 = vld [vmem:[%s1387 + $0xa4] sm:$0xf]
      %v1430 = vld [vmem:[%s1387 + $0xa8] sm:$0xf]
      %v1431 = vld [vmem:[%s1387 + $0xac] sm:$0xf]
      %v1432 = vld [vmem:[%s1387 + $0xb0] sm:$0xf]
      %v1433 = vld [vmem:[%s1387 + $0xb4] sm:$0xf]
      %v1434 = vld [vmem:[%s1387 + $0xb8] sm:$0xf]
      %v1435 = vld [vmem:[%s1387 + $0xbc] sm:$0xf]
      %v1484 = vunpack.c.l.b16 %v1388
      %v1485 = vunpack.c.l.b16 %v1389
      %v1486 = vunpack.c.l.b16 %v1390
      %v1487 = vunpack.c.l.b16 %v1391
      %v1488 = vunpack.c.l.b16 %v1392
      %v1489 = vunpack.c.l.b16 %v1393
      %v1490 = vunpack.c.l.b16 %v1394
      %v1491 = vunpack.c.l.b16 %v1395
      %v1492 = vunpack.c.l.b16 %v1396
      %v1493 = vunpack.c.l.b16 %v1397
      %v1494 = vunpack.c.l.b16 %v1398
      %v1495 = vunpack.c.l.b16 %v1399
      %v1496 = vunpack.c.l.b16 %v1400
      %v1497 = vunpack.c.l.b16 %v1401
      %v1498 = vunpack.c.l.b16 %v1402
      %v1499 = vunpack.c.l.b16 %v1403
      %v1500 = vunpack.c.l.b16 %v1404
      %v1501 = vunpack.c.l.b16 %v1405
      %v1502 = vunpack.c.l.b16 %v1406
      %v1503 = vunpack.c.l.b16 %v1407
      %v1504 = vunpack.c.l.b16 %v1408
      %v1505 = vunpack.c.l.b16 %v1409
      %v1506 = vunpack.c.l.b16 %v1410
      %v1507 = vunpack.c.l.b16 %v1411
      %v1508 = vunpack.c.l.b16 %v1412
      %v1509 = vunpack.c.l.b16 %v1413
      %v1510 = vunpack.c.l.b16 %v1414
      %v1511 = vunpack.c.l.b16 %v1415
      %v1512 = vunpack.c.l.b16 %v1416
      %v1513 = vunpack.c.l.b16 %v1417
      %v1514 = vunpack.c.l.b16 %v1418
      %v1515 = vunpack.c.l.b16 %v1419
      %v1516 = vunpack.c.l.b16 %v1420
      %v1517 = vunpack.c.l.b16 %v1421
      %v1518 = vunpack.c.l.b16 %v1422
      %v1519 = vunpack.c.l.b16 %v1423
      %v1520 = vunpack.c.l.b16 %v1424
      %v1521 = vunpack.c.l.b16 %v1425
      %v1522 = vunpack.c.l.b16 %v1426
      %v1523 = vunpack.c.l.b16 %v1427
      %v1524 = vunpack.c.l.b16 %v1428
      %v1525 = vunpack.c.l.b16 %v1429
      %v1526 = vunpack.c.l.b16 %v1430
      %v1527 = vunpack.c.l.b16 %v1431
      %v1528 = vunpack.c.l.b16 %v1432
      %v1529 = vunpack.c.l.b16 %v1433
      %v1530 = vunpack.c.l.b16 %v1434
      %v1531 = vunpack.c.l.b16 %v1435
      %v1532 = vpack.c.b16 %v1485, %v1484
      %v1533 = vpack.c.b16 %v1487, %v1486
      %v1534 = vpack.c.b16 %v1489, %v1488
      %v1535 = vpack.c.b16 %v1491, %v1490
      %v1536 = vpack.c.b16 %v1493, %v1492
      %v1537 = vpack.c.b16 %v1495, %v1494
      %v1538 = vpack.c.b16 %v1497, %v1496
      %v1539 = vpack.c.b16 %v1499, %v1498
      %v1540 = vpack.c.b16 %v1501, %v1500
      %v1541 = vpack.c.b16 %v1503, %v1502
      %v1542 = vpack.c.b16 %v1505, %v1504
      %v1543 = vpack.c.b16 %v1507, %v1506
      %v1544 = vpack.c.b16 %v1509, %v1508
      %v1545 = vpack.c.b16 %v1511, %v1510
      %v1546 = vpack.c.b16 %v1513, %v1512
      %v1547 = vpack.c.b16 %v1515, %v1514
      %v1548 = vpack.c.b16 %v1517, %v1516
      %v1549 = vpack.c.b16 %v1519, %v1518
      %v1550 = vpack.c.b16 %v1521, %v1520
      %v1551 = vpack.c.b16 %v1523, %v1522
      %v1552 = vpack.c.b16 %v1525, %v1524
      %v1553 = vpack.c.b16 %v1527, %v1526
      %v1554 = vpack.c.b16 %v1529, %v1528
      %v1555 = vpack.c.b16 %v1531, %v1530
      %1580 = vmatprep.subr.bf16.mxu0 0
      %1581 = vmatpush1.bf16.msra.mxu0 %v1532
      %1582 = vmatprep.subr.bf16.mxu0 0
      %1583 = vmatpush1.bf16.msra.mxu0 %v1533
      %1584 = vmatprep.subr.bf16.mxu0 0
      %1585 = vmatpush1.bf16.msra.mxu0 %v1534
      %1586 = vmatprep.subr.bf16.mxu0 0
      %1587 = vmatpush1.bf16.msra.mxu0 %v1535
      %1588 = vmatprep.subr.bf16.mxu0 0
      %1589 = vmatpush1.bf16.msra.mxu0 %v1536
      %1590 = vmatprep.subr.bf16.mxu0 0
      %1591 = vmatpush1.bf16.msra.mxu0 %v1537
      %1592 = vmatprep.subr.bf16.mxu0 0
      %1593 = vmatpush1.bf16.msra.mxu0 %v1538
      %1594 = vmatprep.subr.bf16.mxu0 0
      %1595 = vmatpush1.bf16.msra.mxu0 %v1539
      %1596 = vmatprep.subr.bf16.mxu0 0
      %1597 = vmatpush1.bf16.msra.mxu0 %v1540
      %1598 = vmatprep.subr.bf16.mxu0 0
      %1599 = vmatpush1.bf16.msra.mxu0 %v1541
      %1600 = vmatprep.subr.bf16.mxu0 0
      %1601 = vmatpush1.bf16.msra.mxu0 %v1542
      %1602 = vmatprep.subr.bf16.mxu0 0
      %1603 = vmatpush1.bf16.msra.mxu0 %v1543
      %1604 = vmatprep.subr.bf16.mxu0 0
      %1605 = vmatpush1.bf16.msra.mxu0 %v1544
      %1606 = vmatprep.subr.bf16.mxu0 0
      %1607 = vmatpush1.bf16.msra.mxu0 %v1545
      %1608 = vmatprep.subr.bf16.mxu0 0
      %1609 = vmatpush1.bf16.msra.mxu0 %v1546
      %1610 = vmatprep.subr.bf16.mxu0 0
      %1611 = vmatpush1.bf16.msra.mxu0 %v1547
      %1612 = vmatprep.mubr.bf16.mxu0 %v1292
      %1613 = vmatmul.mubr.bf16.gmra.mrb[0].mxu0 %v1291
      %v1614 = vpop.f32.mrb[0].mxu0
      %v1615 = vadd.f32 0.0, %v1614
      %v1616 = vpop.f32.mrb[0].mxu0
      %v1617 = vpop.f32.mrb[0].mxu0
      %v1618 = vadd.f32 0.0, %v1617
      %v1619 = vpop.f32.mrb[0].mxu0
      %1620 = vmatprep.mubr.bf16.mxu0 %v1295
      %1621 = vmatmul.mubr.bf16.gmra.mrb[0].mxu0 %v1294
      %v1622 = vpop.f32.mrb[0].mxu0
      %v1623 = vadd.f32 0.0, %v1622
      %v1624 = vpop.f32.mrb[0].mxu0
      %v1625 = vpop.f32.mrb[0].mxu0
      %v1626 = vadd.f32 0.0, %v1625
      %v1627 = vpop.f32.mrb[0].mxu0
      %1628 = vmatprep.mubr.bf16.mxu0 %v1298
      %1629 = vmatmul.mubr.bf16.gmra.mrb[0].mxu0 %v1297
      %v1630 = vpop.f32.mrb[0].mxu0
      %v1631 = vadd.f32 0.0, %v1630
      %v1632 = vpop.f32.mrb[0].mxu0
      %v1633 = vpop.f32.mrb[0].mxu0
      %v1634 = vadd.f32 0.0, %v1633
      %v1635 = vpop.f32.mrb[0].mxu0
      %1636 = vmatprep.mubr.bf16.mxu0 %v1301
      %1637 = vmatmul.mubr.bf16.gmra.mrb[0].mxu0 %v1300
      %v1638 = vpop.f32.mrb[0].mxu0
      %v1639 = vadd.f32 0.0, %v1638
      %v1640 = vpop.f32.mrb[0].mxu0
      %v1641 = vpop.f32.mrb[0].mxu0
      %v1642 = vadd.f32 0.0, %v1641
      %v1643 = vpop.f32.mrb[0].mxu0
      %1644 = vmatprep.mubr.bf16.mxu0 %v1304
      %1645 = vmatmul.mubr.bf16.gmra.mrb[0].mxu0 %v1303
      %v1646 = vpop.f32.mrb[0].mxu0
      %v1647 = vadd.f32 0.0, %v1646
      %v1648 = vpop.f32.mrb[0].mxu0
      %v1649 = vpop.f32.mrb[0].mxu0
      %v1650 = vadd.f32 0.0, %v1649
      %v1651 = vpop.f32.mrb[0].mxu0
      %1652 = vmatprep.mubr.bf16.mxu0 %v1307
      %1653 = vmatmul.mubr.bf16.gmra.mrb[0].mxu0 %v1306
      %v1654 = vpop.f32.mrb[0].mxu0
      %v1655 = vadd.f32 0.0, %v1654
      %v1656 = vpop.f32.mrb[0].mxu0
      %v1657 = vpop.f32.mrb[0].mxu0
      %v1658 = vadd.f32 0.0, %v1657
      %v1659 = vpop.f32.mrb[0].mxu0
      %1660 = vmatprep.mubr.bf16.mxu0 %v1310
      %1661 = vmatmul.mubr.bf16.gmra.mrb[0].mxu0 %v1309
      %v1662 = vpop.f32.mrb[0].mxu0
      %v1663 = vadd.f32 0.0, %v1662
      %v1664 = vpop.f32.mrb[0].mxu0
      %v1665 = vpop.f32.mrb[0].mxu0
      %v1666 = vadd.f32 0.0, %v1665
      %v1667 = vpop.f32.mrb[0].mxu0
      %1668 = vmatprep.mubr.bf16.mxu0 %v1313
      %1669 = vmatmul.mubr.bf16.gmra.mrb[0].mxu0 %v1312
      %v1670 = vpop.f32.mrb[0].mxu0
      %v1671 = vadd.f32 0.0, %v1670
      %v1672 = vpop.f32.mrb[0].mxu0
      %v1673 = vpop.f32.mrb[0].mxu0
      %v1674 = vadd.f32 0.0, %v1673
      %v1675 = vpop.f32.mrb[0].mxu0
      %1676 = vmatprep.mubr.bf16.mxu0 %v1316
      %1677 = vmatmul.mubr.bf16.gmra.mrb[0].mxu0 %v1315
      %v1678 = vpop.f32.mrb[0].mxu0
      %v1679 = vadd.f32 0.0, %v1678
      %v1680 = vpop.f32.mrb[0].mxu0
      %v1681 = vpop.f32.mrb[0].mxu0
      %v1682 = vadd.f32 0.0, %v1681
      %v1683 = vpop.f32.mrb[0].mxu0
      %1684 = vmatprep.mubr.bf16.mxu0 %v1319
      %1685 = vmatmul.mubr.bf16.gmra.mrb[0].mxu0 %v1318
      %v1686 = vpop.f32.mrb[0].mxu0
      %v1687 = vadd.f32 0.0, %v1686
      %v1688 = vpop.f32.mrb[0].mxu0
      %v1689 = vpop.f32.mrb[0].mxu0
      %v1690 = vadd.f32 0.0, %v1689
      %v1691 = vpop.f32.mrb[0].mxu0
      %1692 = vmatprep.mubr.bf16.mxu0 %v1322
      %1693 = vmatmul.mubr.bf16.gmra.mrb[0].mxu0 %v1321
      %v1694 = vpop.f32.mrb[0].mxu0
      %v1695 = vadd.f32 0.0, %v1694
      %v1696 = vpop.f32.mrb[0].mxu0
      %v1697 = vpop.f32.mrb[0].mxu0
      %v1698 = vadd.f32 0.0, %v1697
      %v1699 = vpop.f32.mrb[0].mxu0
      %1700 = vmatprep.mubr.bf16.mxu0 %v1325
      %1701 = vmatmul.mubr.bf16.gmra.mrb[0].mxu0 %v1324
      %v1702 = vpop.f32.mrb[0].mxu0
      %v1703 = vadd.f32 0.0, %v1702
      %v1704 = vpop.f32.mrb[0].mxu0
      %v1705 = vpop.f32.mrb[0].mxu0
      %v1706 = vadd.f32 0.0, %v1705
      %v1707 = vpop.f32.mrb[0].mxu0
      %1708 = vmatprep.mubr.bf16.mxu0 %v1328
      %1709 = vmatmul.mubr.bf16.gmra.mrb[0].mxu0 %v1327
      %v1710 = vpop.f32.mrb[0].mxu0
      %v1711 = vadd.f32 0.0, %v1710
      %v1712 = vpop.f32.mrb[0].mxu0
      %v1713 = vpop.f32.mrb[0].mxu0
      %v1714 = vadd.f32 0.0, %v1713
      %v1715 = vpop.f32.mrb[0].mxu0
      %1716 = vmatprep.mubr.bf16.mxu0 %v1331
      %1717 = vmatmul.mubr.bf16.gmra.mrb[0].mxu0 %v1330
      %v1718 = vpop.f32.mrb[0].mxu0
      %v1719 = vadd.f32 0.0, %v1718
      %v1720 = vpop.f32.mrb[0].mxu0
      %v1721 = vpop.f32.mrb[0].mxu0
      %v1722 = vadd.f32 0.0, %v1721
      %v1723 = vpop.f32.mrb[0].mxu0
      %1724 = vmatprep.mubr.bf16.mxu0 %v1334
      %1725 = vmatmul.mubr.bf16.gmra.mrb[0].mxu0 %v1333
      %v1726 = vpop.f32.mrb[0].mxu0
      %v1727 = vadd.f32 0.0, %v1726
      %v1728 = vpop.f32.mrb[0].mxu0
      %v1729 = vpop.f32.mrb[0].mxu0
      %v1730 = vadd.f32 0.0, %v1729
      %v1731 = vpop.f32.mrb[0].mxu0
      %1732 = vmatprep.mubr.bf16.mxu0 %v1385
      %1733 = vmatmul.mubr.bf16.gmra.mrb[0].mxu0 %v1384
      %v1734 = vpop.f32.mrb[0].mxu0
      %v1735 = vadd.f32 0.0, %v1734
      %v1736 = vpop.f32.mrb[0].mxu0
      %v1737 = vpop.f32.mrb[0].mxu0
      %v1738 = vadd.f32 0.0, %v1737
      %v1739 = vpop.f32.mrb[0].mxu0
      %1740 = vdwg.mxu0
      %1741 = vmatprep.subr.bf16.mxu0 0
      %1742 = vmatpush1.bf16.msra.mxu0 %v1548
      %1743 = vmatprep.subr.bf16.mxu0 0
      %1744 = vmatpush1.bf16.msra.mxu0 %v1549
      %1745 = vmatprep.subr.bf16.mxu0 0
      %1746 = vmatpush1.bf16.msra.mxu0 %v1550
      %1747 = vmatprep.subr.bf16.mxu0 0
      %1748 = vmatpush1.bf16.msra.mxu0 %v1551
      %1749 = vmatprep.subr.bf16.mxu0 0
      %1750 = vmatpush1.bf16.msra.mxu0 %v1552
      %1751 = vmatprep.subr.bf16.mxu0 0
      %1752 = vmatpush1.bf16.msra.mxu0 %v1553
      %1753 = vmatprep.subr.bf16.mxu0 0
      %1754 = vmatpush1.bf16.msra.mxu0 %v1554
      %1755 = vmatprep.subr.bf16.mxu0 0
      %1756 = vmatpush1.bf16.msra.mxu0 %v1555
      %1757 = vmatprep.subr.bf16.mxu0 0
      %1758 = vmatpush1.bf16.msra.mxu0 0
      %1759 = vmatprep.subr.bf16.mxu0 0
      %1760 = vmatpush1.bf16.msra.mxu0 0
      %1761 = vmatprep.subr.bf16.mxu0 0
      %1762 = vmatpush1.bf16.msra.mxu0 0
      %1763 = vmatprep.subr.bf16.mxu0 0
      %1764 = vmatpush1.bf16.msra.mxu0 0
      %1765 = vmatprep.subr.bf16.mxu0 0
      %1766 = vmatpush1.bf16.msra.mxu0 0
      %1767 = vmatprep.subr.bf16.mxu0 0
      %1768 = vmatpush1.bf16.msra.mxu0 0
      %1769 = vmatprep.subr.bf16.mxu0 0
      %1770 = vmatpush1.bf16.msra.mxu0 0
      %1771 = vmatprep.subr.bf16.mxu0 0
      %1772 = vmatpush1.bf16.msra.mxu0 0
      %1773 = vmatprep.mubr.bf16.mxu0 0
      %1774 = vmatmul.mubr.bf16.gmra.mrb[0].mxu0 %v1293
      %v1775 = vpop.f32.mrb[0].mxu0
      %v1776 = vadd.f32 %v1615, %v1775
      %v1777 = vpop.f32.mrb[0].mxu0
      %v1778 = vpop.f32.mrb[0].mxu0
      %v1779 = vadd.f32 %v1618, %v1778
      %v1780 = vpop.f32.mrb[0].mxu0
      %1781 = vmatprep.mubr.bf16.mxu0 0
      %1782 = vmatmul.mubr.bf16.gmra.mrb[0].mxu0 %v1296
      %v1783 = vpop.f32.mrb[0].mxu0
      %v1784 = vadd.f32 %v1623, %v1783
      %v1785 = vpop.f32.mrb[0].mxu0
      %v1786 = vpop.f32.mrb[0].mxu0
      %v1787 = vadd.f32 %v1626, %v1786
      %v1788 = vpop.f32.mrb[0].mxu0
      %1789 = vmatprep.mubr.bf16.mxu0 0
      %1790 = vmatmul.mubr.bf16.gmra.mrb[0].mxu0 %v1299
      %v1791 = vpop.f32.mrb[0].mxu0
      %v1792 = vadd.f32 %v1631, %v1791
      %v1793 = vpop.f32.mrb[0].mxu0
      %v1794 = vpop.f32.mrb[0].mxu0
      %v1795 = vadd.f32 %v1634, %v1794
      %v1796 = vpop.f32.mrb[0].mxu0
      %1797 = vmatprep.mubr.bf16.mxu0 0
      %1798 = vmatmul.mubr.bf16.gmra.mrb[0].mxu0 %v1302
      %v1799 = vpop.f32.mrb[0].mxu0
      %v1800 = vadd.f32 %v1639, %v1799
      %v1801 = vpop.f32.mrb[0].mxu0
      %v1802 = vpop.f32.mrb[0].mxu0
      %v1803 = vadd.f32 %v1642, %v1802
      %v1804 = vpop.f32.mrb[0].mxu0
      %1805 = vmatprep.mubr.bf16.mxu0 0
      %1806 = vmatmul.mubr.bf16.gmra.mrb[0].mxu0 %v1305
      %v1807 = vpop.f32.mrb[0].mxu0
      %v1808 = vadd.f32 %v1647, %v1807
      %v1809 = vpop.f32.mrb[0].mxu0
      %v1810 = vpop.f32.mrb[0].mxu0
      %v1811 = vadd.f32 %v1650, %v1810
      %v1812 = vpop.f32.mrb[0].mxu0
      %1813 = vmatprep.mubr.bf16.mxu0 0
      %1814 = vmatmul.mubr.bf16.gmra.mrb[0].mxu0 %v1308
      %v1815 = vpop.f32.mrb[0].mxu0
      %v1816 = vadd.f32 %v1655, %v1815
      %v1817 = vpop.f32.mrb[0].mxu0
      %v1818 = vpop.f32.mrb[0].mxu0
      %v1819 = vadd.f32 %v1658, %v1818
      %v1820 = vpop.f32.mrb[0].mxu0
      %1821 = vmatprep.mubr.bf16.mxu0 0
      %1822 = vmatmul.mubr.bf16.gmra.mrb[0].mxu0 %v1311
      %v1823 = vpop.f32.mrb[0].mxu0
      %v1824 = vadd.f32 %v1663, %v1823
      %v1825 = vpop.f32.mrb[0].mxu0
      %v1826 = vpop.f32.mrb[0].mxu0
      %v1827 = vadd.f32 %v1666, %v1826
      %v1828 = vpop.f32.mrb[0].mxu0
      %1829 = vmatprep.mubr.bf16.mxu0 0
      %1830 = vmatmul.mubr.bf16.gmra.mrb[0].mxu0 %v1314
      %v1831 = vpop.f32.mrb[0].mxu0
      %v1832 = vadd.f32 %v1671, %v1831
      %v1833 = vpop.f32.mrb[0].mxu0
      %v1834 = vpop.f32.mrb[0].mxu0
      %v1835 = vadd.f32 %v1674, %v1834
      %v1836 = vpop.f32.mrb[0].mxu0
      %1837 = vmatprep.mubr.bf16.mxu0 0
      %1838 = vmatmul.mubr.bf16.gmra.mrb[0].mxu0 %v1317
      %v1839 = vpop.f32.mrb[0].mxu0
      %v1840 = vadd.f32 %v1679, %v1839
      %v1841 = vpop.f32.mrb[0].mxu0
      %v1842 = vpop.f32.mrb[0].mxu0
      %v1843 = vadd.f32 %v1682, %v1842
      %v1844 = vpop.f32.mrb[0].mxu0
      %1845 = vmatprep.mubr.bf16.mxu0 0
      %1846 = vmatmul.mubr.bf16.gmra.mrb[0].mxu0 %v1320
      %v1847 = vpop.f32.mrb[0].mxu0
      %v1848 = vadd.f32 %v1687, %v1847
      %v1849 = vpop.f32.mrb[0].mxu0
      %v1850 = vpop.f32.mrb[0].mxu0
      %v1851 = vadd.f32 %v1690, %v1850
      %v1852 = vpop.f32.mrb[0].mxu0
      %1853 = vmatprep.mubr.bf16.mxu0 0
      %1854 = vmatmul.mubr.bf16.gmra.mrb[0].mxu0 %v1323
      %v1855 = vpop.f32.mrb[0].mxu0
      %v1856 = vadd.f32 %v1695, %v1855
      %v1857 = vpop.f32.mrb[0].mxu0
      %v1858 = vpop.f32.mrb[0].mxu0
      %v1859 = vadd.f32 %v1698, %v1858
      %v1860 = vpop.f32.mrb[0].mxu0
      %1861 = vmatprep.mubr.bf16.mxu0 0
      %1862 = vmatmul.mubr.bf16.gmra.mrb[0].mxu0 %v1326
      %v1863 = vpop.f32.mrb[0].mxu0
      %v1864 = vadd.f32 %v1703, %v1863
      %v1865 = vpop.f32.mrb[0].mxu0
      %v1866 = vpop.f32.mrb[0].mxu0
      %v1867 = vadd.f32 %v1706, %v1866
      %v1868 = vpop.f32.mrb[0].mxu0
      %1869 = vmatprep.mubr.bf16.mxu0 0
      %1870 = vmatmul.mubr.bf16.gmra.mrb[0].mxu0 %v1329
      %v1871 = vpop.f32.mrb[0].mxu0
      %v1872 = vadd.f32 %v1711, %v1871
      %v1873 = vpop.f32.mrb[0].mxu0
      %v1874 = vpop.f32.mrb[0].mxu0
      %v1875 = vadd.f32 %v1714, %v1874
      %v1876 = vpop.f32.mrb[0].mxu0
      %1877 = vmatprep.mubr.bf16.mxu0 0
      %1878 = vmatmul.mubr.bf16.gmra.mrb[0].mxu0 %v1332
      %v1879 = vpop.f32.mrb[0].mxu0
      %v1880 = vadd.f32 %v1719, %v1879
      %v1881 = vpop.f32.mrb[0].mxu0
      %v1882 = vpop.f32.mrb[0].mxu0
      %v1883 = vadd.f32 %v1722, %v1882
      %v1884 = vpop.f32.mrb[0].mxu0
      %1885 = vmatprep.mubr.bf16.mxu0 0
      %1886 = vmatmul.mubr.bf16.gmra.mrb[0].mxu0 %v1335
      %v1887 = vpop.f32.mrb[0].mxu0
      %v1888 = vadd.f32 %v1727, %v1887
      %v1889 = vpop.f32.mrb[0].mxu0
      %v1890 = vpop.f32.mrb[0].mxu0
      %v1891 = vadd.f32 %v1730, %v1890
      %v1892 = vpop.f32.mrb[0].mxu0
      %1893 = vmatprep.mubr.bf16.mxu0 0
      %1894 = vmatmul.mubr.bf16.gmra.mrb[0].mxu0 %v1386
      %v1895 = vpop.f32.mrb[0].mxu0
      %v1896 = vadd.f32 %v1735, %v1895
      %v1897 = vpop.f32.mrb[0].mxu0
      %v1898 = vpop.f32.mrb[0].mxu0
      %v1899 = vadd.f32 %v1738, %v1898
      %v1900 = vpop.f32.mrb[0].mxu0
      %1901 = vdwg.mxu0
      %v1950 = vunpack.c.l.b16 %v1336
      %v1951 = vunpack.c.l.b16 %v1337
      %v1952 = vunpack.c.l.b16 %v1338
      %v1953 = vunpack.c.l.b16 %v1339
      %v1954 = vunpack.c.l.b16 %v1340
      %v1955 = vunpack.c.l.b16 %v1341
      %v1956 = vunpack.c.l.b16 %v1342
      %v1957 = vunpack.c.l.b16 %v1343
      %v1958 = vunpack.c.l.b16 %v1344
      %v1959 = vunpack.c.l.b16 %v1345
      %v1960 = vunpack.c.l.b16 %v1346
      %v1961 = vunpack.c.l.b16 %v1347
      %v1962 = vunpack.c.l.b16 %v1348
      %v1963 = vunpack.c.l.b16 %v1349
      %v1964 = vunpack.c.l.b16 %v1350
      %v1965 = vunpack.c.l.b16 %v1351
      %v1966 = vunpack.c.l.b16 %v1352
      %v1967 = vunpack.c.l.b16 %v1353
      %v1968 = vunpack.c.l.b16 %v1354
      %v1969 = vunpack.c.l.b16 %v1355
      %v1970 = vunpack.c.l.b16 %v1356
      %v1971 = vunpack.c.l.b16 %v1357
      %v1972 = vunpack.c.l.b16 %v1358
      %v1973 = vunpack.c.l.b16 %v1359
      %v1974 = vunpack.c.l.b16 %v1360
      %v1975 = vunpack.c.l.b16 %v1361
      %v1976 = vunpack.c.l.b16 %v1362
      %v1977 = vunpack.c.l.b16 %v1363
      %v1978 = vunpack.c.l.b16 %v1364
      %v1979 = vunpack.c.l.b16 %v1365
      %v1980 = vunpack.c.l.b16 %v1366
      %v1981 = vunpack.c.l.b16 %v1367
      %v1982 = vunpack.c.l.b16 %v1368
      %v1983 = vunpack.c.l.b16 %v1369
      %v1984 = vunpack.c.l.b16 %v1370
      %v1985 = vunpack.c.l.b16 %v1371
      %v1986 = vunpack.c.l.b16 %v1372
      %v1987 = vunpack.c.l.b16 %v1373
      %v1988 = vunpack.c.l.b16 %v1374
      %v1989 = vunpack.c.l.b16 %v1375
      %v1990 = vunpack.c.l.b16 %v1376
      %v1991 = vunpack.c.l.b16 %v1377
      %v1992 = vunpack.c.l.b16 %v1378
      %v1993 = vunpack.c.l.b16 %v1379
      %v1994 = vunpack.c.l.b16 %v1380
      %v1995 = vunpack.c.l.b16 %v1381
      %v1996 = vunpack.c.l.b16 %v1382
      %v1997 = vunpack.c.l.b16 %v1383
      %v1998 = vpack.c.b16 %v1951, %v1950
      %v1999 = vpack.c.b16 %v1953, %v1952
      %v2000 = vpack.c.b16 %v1955, %v1954
      %v2001 = vpack.c.b16 %v1957, %v1956
      %v2002 = vpack.c.b16 %v1959, %v1958
      %v2003 = vpack.c.b16 %v1961, %v1960
      %v2004 = vpack.c.b16 %v1963, %v1962
      %v2005 = vpack.c.b16 %v1965, %v1964
      %v2006 = vpack.c.b16 %v1967, %v1966
      %v2007 = vpack.c.b16 %v1969, %v1968
      %v2008 = vpack.c.b16 %v1971, %v1970
      %v2009 = vpack.c.b16 %v1973, %v1972
      %v2010 = vpack.c.b16 %v1975, %v1974
      %v2011 = vpack.c.b16 %v1977, %v1976
      %v2012 = vpack.c.b16 %v1979, %v1978
      %v2013 = vpack.c.b16 %v1981, %v1980
      %v2014 = vpack.c.b16 %v1983, %v1982
      %v2015 = vpack.c.b16 %v1985, %v1984
      %v2016 = vpack.c.b16 %v1987, %v1986
      %v2017 = vpack.c.b16 %v1989, %v1988
      %v2018 = vpack.c.b16 %v1991, %v1990
      %v2019 = vpack.c.b16 %v1993, %v1992
      %v2020 = vpack.c.b16 %v1995, %v1994
      %v2021 = vpack.c.b16 %v1997, %v1996
      %2046 = vmatprep.subr.bf16.mxu0 0
      %2047 = vmatpush1.bf16.msra.mxu0 %v1998
      %2048 = vmatprep.subr.bf16.mxu0 0
      %2049 = vmatpush1.bf16.msra.mxu0 %v1999
      %2050 = vmatprep.subr.bf16.mxu0 0
      %2051 = vmatpush1.bf16.msra.mxu0 %v2000
      %2052 = vmatprep.subr.bf16.mxu0 0
      %2053 = vmatpush1.bf16.msra.mxu0 %v2001
      %2054 = vmatprep.subr.bf16.mxu0 0
      %2055 = vmatpush1.bf16.msra.mxu0 %v2002
      %2056 = vmatprep.subr.bf16.mxu0 0
      %2057 = vmatpush1.bf16.msra.mxu0 %v2003
      %2058 = vmatprep.subr.bf16.mxu0 0
      %2059 = vmatpush1.bf16.msra.mxu0 %v2004
      %2060 = vmatprep.subr.bf16.mxu0 0
      %2061 = vmatpush1.bf16.msra.mxu0 %v2005
      %2062 = vmatprep.subr.bf16.mxu0 0
      %2063 = vmatpush1.bf16.msra.mxu0 %v2006
      %2064 = vmatprep.subr.bf16.mxu0 0
      %2065 = vmatpush1.bf16.msra.mxu0 %v2007
      %2066 = vmatprep.subr.bf16.mxu0 0
      %2067 = vmatpush1.bf16.msra.mxu0 %v2008
      %2068 = vmatprep.subr.bf16.mxu0 0
      %2069 = vmatpush1.bf16.msra.mxu0 %v2009
      %2070 = vmatprep.subr.bf16.mxu0 0
      %2071 = vmatpush1.bf16.msra.mxu0 %v2010
      %2072 = vmatprep.subr.bf16.mxu0 0
      %2073 = vmatpush1.bf16.msra.mxu0 %v2011
      %2074 = vmatprep.subr.bf16.mxu0 0
      %2075 = vmatpush1.bf16.msra.mxu0 %v2012
      %2076 = vmatprep.subr.bf16.mxu0 0
      %2077 = vmatpush1.bf16.msra.mxu0 %v2013
      %2078 = vmatprep.mubr.bf16.mxu0 %v1289
      %2079 = vmatmul.mubr.bf16.gmra.mrb[0].mxu0 %v1288
      %v2080 = vpop.f32.mrb[0].mxu0
      %v2081 = vadd.f32 %v1776, %v2080
      %v2082 = vpop.f32.mrb[0].mxu0
      %v2083 = vpop.f32.mrb[0].mxu0
      %v2084 = vadd.f32 %v1779, %v2083
      %v2085 = vpop.f32.mrb[0].mxu0
      %2086 = vmatprep.mubr.bf16.mxu0 %v1292
      %2087 = vmatmul.mubr.bf16.gmra.mrb[0].mxu0 %v1291
      %v2088 = vpop.f32.mrb[0].mxu0
      %v2089 = vadd.f32 %v1784, %v2088
      %v2090 = vpop.f32.mrb[0].mxu0
      %v2091 = vpop.f32.mrb[0].mxu0
      %v2092 = vadd.f32 %v1787, %v2091
      %v2093 = vpop.f32.mrb[0].mxu0
      %2094 = vmatprep.mubr.bf16.mxu0 %v1295
      %2095 = vmatmul.mubr.bf16.gmra.mrb[0].mxu0 %v1294
      %v2096 = vpop.f32.mrb[0].mxu0
      %v2097 = vadd.f32 %v1792, %v2096
      %v2098 = vpop.f32.mrb[0].mxu0
      %v2099 = vpop.f32.mrb[0].mxu0
      %v2100 = vadd.f32 %v1795, %v2099
      %v2101 = vpop.f32.mrb[0].mxu0
      %2102 = vmatprep.mubr.bf16.mxu0 %v1298
      %2103 = vmatmul.mubr.bf16.gmra.mrb[0].mxu0 %v1297
      %v2104 = vpop.f32.mrb[0].mxu0
      %v2105 = vadd.f32 %v1800, %v2104
      %v2106 = vpop.f32.mrb[0].mxu0
      %v2107 = vpop.f32.mrb[0].mxu0
      %v2108 = vadd.f32 %v1803, %v2107
      %v2109 = vpop.f32.mrb[0].mxu0
      %2110 = vmatprep.mubr.bf16.mxu0 %v1301
      %2111 = vmatmul.mubr.bf16.gmra.mrb[0].mxu0 %v1300
      %v2112 = vpop.f32.mrb[0].mxu0
      %v2113 = vadd.f32 %v1808, %v2112
      %v2114 = vpop.f32.mrb[0].mxu0
      %v2115 = vpop.f32.mrb[0].mxu0
      %v2116 = vadd.f32 %v1811, %v2115
      %v2117 = vpop.f32.mrb[0].mxu0
      %2118 = vmatprep.mubr.bf16.mxu0 %v1304
      %2119 = vmatmul.mubr.bf16.gmra.mrb[0].mxu0 %v1303
      %v2120 = vpop.f32.mrb[0].mxu0
      %v2121 = vadd.f32 %v1816, %v2120
      %v2122 = vpop.f32.mrb[0].mxu0
      %v2123 = vpop.f32.mrb[0].mxu0
      %v2124 = vadd.f32 %v1819, %v2123
      %v2125 = vpop.f32.mrb[0].mxu0
      %2126 = vmatprep.mubr.bf16.mxu0 %v1307
      %2127 = vmatmul.mubr.bf16.gmra.mrb[0].mxu0 %v1306
      %v2128 = vpop.f32.mrb[0].mxu0
      %v2129 = vadd.f32 %v1824, %v2128
      %v2130 = vpop.f32.mrb[0].mxu0
      %v2131 = vpop.f32.mrb[0].mxu0
      %v2132 = vadd.f32 %v1827, %v2131
      %v2133 = vpop.f32.mrb[0].mxu0
      %2134 = vmatprep.mubr.bf16.mxu0 %v1310
      %2135 = vmatmul.mubr.bf16.gmra.mrb[0].mxu0 %v1309
      %v2136 = vpop.f32.mrb[0].mxu0
      %v2137 = vadd.f32 %v1832, %v2136
      %v2138 = vpop.f32.mrb[0].mxu0
      %v2139 = vpop.f32.mrb[0].mxu0
      %v2140 = vadd.f32 %v1835, %v2139
      %v2141 = vpop.f32.mrb[0].mxu0
      %2142 = vmatprep.mubr.bf16.mxu0 %v1313
      %2143 = vmatmul.mubr.bf16.gmra.mrb[0].mxu0 %v1312
      %v2144 = vpop.f32.mrb[0].mxu0
      %v2145 = vadd.f32 %v1840, %v2144
      %v2146 = vpop.f32.mrb[0].mxu0
      %v2147 = vpop.f32.mrb[0].mxu0
      %v2148 = vadd.f32 %v1843, %v2147
      %v2149 = vpop.f32.mrb[0].mxu0
      %2150 = vmatprep.mubr.bf16.mxu0 %v1316
      %2151 = vmatmul.mubr.bf16.gmra.mrb[0].mxu0 %v1315
      %v2152 = vpop.f32.mrb[0].mxu0
      %v2153 = vadd.f32 %v1848, %v2152
      %v2154 = vpop.f32.mrb[0].mxu0
      %v2155 = vpop.f32.mrb[0].mxu0
      %v2156 = vadd.f32 %v1851, %v2155
      %v2157 = vpop.f32.mrb[0].mxu0
      %2158 = vmatprep.mubr.bf16.mxu0 %v1319
      %2159 = vmatmul.mubr.bf16.gmra.mrb[0].mxu0 %v1318
      %v2160 = vpop.f32.mrb[0].mxu0
      %v2161 = vadd.f32 %v1856, %v2160
      %v2162 = vpop.f32.mrb[0].mxu0
      %v2163 = vpop.f32.mrb[0].mxu0
      %v2164 = vadd.f32 %v1859, %v2163
      %v2165 = vpop.f32.mrb[0].mxu0
      %2166 = vmatprep.mubr.bf16.mxu0 %v1322
      %2167 = vmatmul.mubr.bf16.gmra.mrb[0].mxu0 %v1321
      %v2168 = vpop.f32.mrb[0].mxu0
      %v2169 = vadd.f32 %v1864, %v2168
      %v2170 = vpop.f32.mrb[0].mxu0
      %v2171 = vpop.f32.mrb[0].mxu0
      %v2172 = vadd.f32 %v1867, %v2171
      %v2173 = vpop.f32.mrb[0].mxu0
      %2174 = vmatprep.mubr.bf16.mxu0 %v1325
      %2175 = vmatmul.mubr.bf16.gmra.mrb[0].mxu0 %v1324
      %v2176 = vpop.f32.mrb[0].mxu0
      %v2177 = vadd.f32 %v1872, %v2176
      %v2178 = vpop.f32.mrb[0].mxu0
      %v2179 = vpop.f32.mrb[0].mxu0
      %v2180 = vadd.f32 %v1875, %v2179
      %v2181 = vpop.f32.mrb[0].mxu0
      %2182 = vmatprep.mubr.bf16.mxu0 %v1328
      %2183 = vmatmul.mubr.bf16.gmra.mrb[0].mxu0 %v1327
      %v2184 = vpop.f32.mrb[0].mxu0
      %v2185 = vadd.f32 %v1880, %v2184
      %v2186 = vpop.f32.mrb[0].mxu0
      %v2187 = vpop.f32.mrb[0].mxu0
      %v2188 = vadd.f32 %v1883, %v2187
      %v2189 = vpop.f32.mrb[0].mxu0
      %2190 = vmatprep.mubr.bf16.mxu0 %v1331
      %2191 = vmatmul.mubr.bf16.gmra.mrb[0].mxu0 %v1330
      %v2192 = vpop.f32.mrb[0].mxu0
      %v2193 = vadd.f32 %v1888, %v2192
      %v2194 = vpop.f32.mrb[0].mxu0
      %v2195 = vpop.f32.mrb[0].mxu0
      %v2196 = vadd.f32 %v1891, %v2195
      %v2197 = vpop.f32.mrb[0].mxu0
      %2198 = vmatprep.mubr.bf16.mxu0 %v1334
      %2199 = vmatmul.mubr.bf16.gmra.mrb[0].mxu0 %v1333
      %v2200 = vpop.f32.mrb[0].mxu0
      %v2201 = vadd.f32 %v1896, %v2200
      %v2202 = vpop.f32.mrb[0].mxu0
      %v2203 = vpop.f32.mrb[0].mxu0
      %v2204 = vadd.f32 %v1899, %v2203
      %v2205 = vpop.f32.mrb[0].mxu0
      %2206 = vdwg.mxu0
      %2207 = vmatprep.subr.bf16.mxu0 0
      %2208 = vmatpush1.bf16.msra.mxu0 %v2014
      %2209 = vmatprep.subr.bf16.mxu0 0
      %2210 = vmatpush1.bf16.msra.mxu0 %v2015
      %2211 = vmatprep.subr.bf16.mxu0 0
      %2212 = vmatpush1.bf16.msra.mxu0 %v2016
      %2213 = vmatprep.subr.bf16.mxu0 0
      %2214 = vmatpush1.bf16.msra.mxu0 %v2017
      %2215 = vmatprep.subr.bf16.mxu0 0
      %2216 = vmatpush1.bf16.msra.mxu0 %v2018
      %2217 = vmatprep.subr.bf16.mxu0 0
      %2218 = vmatpush1.bf16.msra.mxu0 %v2019
      %2219 = vmatprep.subr.bf16.mxu0 0
      %2220 = vmatpush1.bf16.msra.mxu0 %v2020
      %2221 = vmatprep.subr.bf16.mxu0 0
      %2222 = vmatpush1.bf16.msra.mxu0 %v2021
      %2223 = vmatprep.subr.bf16.mxu0 0
      %2224 = vmatpush1.bf16.msra.mxu0 0
      %2225 = vmatprep.subr.bf16.mxu0 0
      %2226 = vmatpush1.bf16.msra.mxu0 0
      %2227 = vmatprep.subr.bf16.mxu0 0
      %2228 = vmatpush1.bf16.msra.mxu0 0
      %2229 = vmatprep.subr.bf16.mxu0 0
      %2230 = vmatpush1.bf16.msra.mxu0 0
      %2231 = vmatprep.subr.bf16.mxu0 0
      %2232 = vmatpush1.bf16.msra.mxu0 0
      %2233 = vmatprep.subr.bf16.mxu0 0
      %2234 = vmatpush1.bf16.msra.mxu0 0
      %2235 = vmatprep.subr.bf16.mxu0 0
      %2236 = vmatpush1.bf16.msra.mxu0 0
      %2237 = vmatprep.subr.bf16.mxu0 0
      %2238 = vmatpush1.bf16.msra.mxu0 0
      %2239 = vmatprep.mubr.bf16.mxu0 0
      %2240 = vmatmul.mubr.bf16.gmra.mrb[0].mxu0 %v1290
      %v2241 = vpop.f32.mrb[0].mxu0
      %v2242 = vadd.f32 %v2081, %v2241
      %v2243 = vpop.f32.mrb[0].mxu0
      %v2244 = vpop.f32.mrb[0].mxu0
      %v2245 = vadd.f32 %v2084, %v2244
      %v2246 = vpop.f32.mrb[0].mxu0
      %2247 = vmatprep.mubr.bf16.mxu0 0
      %2248 = vmatmul.mubr.bf16.gmra.mrb[0].mxu0 %v1293
      %v2249 = vpop.f32.mrb[0].mxu0
      %v2250 = vadd.f32 %v2089, %v2249
      %v2251 = vpop.f32.mrb[0].mxu0
      %v2252 = vpop.f32.mrb[0].mxu0
      %v2253 = vadd.f32 %v2092, %v2252
      %v2254 = vpop.f32.mrb[0].mxu0
      %2255 = vmatprep.mubr.bf16.mxu0 0
      %2256 = vmatmul.mubr.bf16.gmra.mrb[0].mxu0 %v1296
      %v2257 = vpop.f32.mrb[0].mxu0
      %v2258 = vadd.f32 %v2097, %v2257
      %v2259 = vpop.f32.mrb[0].mxu0
      %v2260 = vpop.f32.mrb[0].mxu0
      %v2261 = vadd.f32 %v2100, %v2260
      %v2262 = vpop.f32.mrb[0].mxu0
      %2263 = vmatprep.mubr.bf16.mxu0 0
      %2264 = vmatmul.mubr.bf16.gmra.mrb[0].mxu0 %v1299
      %v2265 = vpop.f32.mrb[0].mxu0
      %v2266 = vadd.f32 %v2105, %v2265
      %v2267 = vpop.f32.mrb[0].mxu0
      %v2268 = vpop.f32.mrb[0].mxu0
      %v2269 = vadd.f32 %v2108, %v2268
      %v2270 = vpop.f32.mrb[0].mxu0
      %2271 = vmatprep.mubr.bf16.mxu0 0
      %2272 = vmatmul.mubr.bf16.gmra.mrb[0].mxu0 %v1302
      %v2273 = vpop.f32.mrb[0].mxu0
      %v2274 = vadd.f32 %v2113, %v2273
      %v2275 = vpop.f32.mrb[0].mxu0
      %v2276 = vpop.f32.mrb[0].mxu0
      %v2277 = vadd.f32 %v2116, %v2276
      %v2278 = vpop.f32.mrb[0].mxu0
      %2279 = vmatprep.mubr.bf16.mxu0 0
      %2280 = vmatmul.mubr.bf16.gmra.mrb[0].mxu0 %v1305
      %v2281 = vpop.f32.mrb[0].mxu0
      %v2282 = vadd.f32 %v2121, %v2281
      %v2283 = vpop.f32.mrb[0].mxu0
      %v2284 = vpop.f32.mrb[0].mxu0
      %v2285 = vadd.f32 %v2124, %v2284
      %v2286 = vpop.f32.mrb[0].mxu0
      %2287 = vmatprep.mubr.bf16.mxu0 0
      %2288 = vmatmul.mubr.bf16.gmra.mrb[0].mxu0 %v1308
      %v2289 = vpop.f32.mrb[0].mxu0
      %v2290 = vadd.f32 %v2129, %v2289
      %v2291 = vpop.f32.mrb[0].mxu0
      %v2292 = vpop.f32.mrb[0].mxu0
      %v2293 = vadd.f32 %v2132, %v2292
      %v2294 = vpop.f32.mrb[0].mxu0
      %2295 = vmatprep.mubr.bf16.mxu0 0
      %2296 = vmatmul.mubr.bf16.gmra.mrb[0].mxu0 %v1311
      %v2297 = vpop.f32.mrb[0].mxu0
      %v2298 = vadd.f32 %v2137, %v2297
      %v2299 = vpop.f32.mrb[0].mxu0
      %v2300 = vpop.f32.mrb[0].mxu0
      %v2301 = vadd.f32 %v2140, %v2300
      %v2302 = vpop.f32.mrb[0].mxu0
      %2303 = vmatprep.mubr.bf16.mxu0 0
      %2304 = vmatmul.mubr.bf16.gmra.mrb[0].mxu0 %v1314
      %v2305 = vpop.f32.mrb[0].mxu0
      %v2306 = vadd.f32 %v2145, %v2305
      %v2307 = vpop.f32.mrb[0].mxu0
      %v2308 = vpop.f32.mrb[0].mxu0
      %v2309 = vadd.f32 %v2148, %v2308
      %v2310 = vpop.f32.mrb[0].mxu0
      %2311 = vmatprep.mubr.bf16.mxu0 0
      %2312 = vmatmul.mubr.bf16.gmra.mrb[0].mxu0 %v1317
      %v2313 = vpop.f32.mrb[0].mxu0
      %v2314 = vadd.f32 %v2153, %v2313
      %v2315 = vpop.f32.mrb[0].mxu0
      %v2316 = vpop.f32.mrb[0].mxu0
      %v2317 = vadd.f32 %v2156, %v2316
      %v2318 = vpop.f32.mrb[0].mxu0
      %2319 = vmatprep.mubr.bf16.mxu0 0
      %2320 = vmatmul.mubr.bf16.gmra.mrb[0].mxu0 %v1320
      %v2321 = vpop.f32.mrb[0].mxu0
      %v2322 = vadd.f32 %v2161, %v2321
      %v2323 = vpop.f32.mrb[0].mxu0
      %v2324 = vpop.f32.mrb[0].mxu0
      %v2325 = vadd.f32 %v2164, %v2324
      %v2326 = vpop.f32.mrb[0].mxu0
      %2327 = vmatprep.mubr.bf16.mxu0 0
      %2328 = vmatmul.mubr.bf16.gmra.mrb[0].mxu0 %v1323
      %v2329 = vpop.f32.mrb[0].mxu0
      %v2330 = vadd.f32 %v2169, %v2329
      %v2331 = vpop.f32.mrb[0].mxu0
      %v2332 = vpop.f32.mrb[0].mxu0
      %v2333 = vadd.f32 %v2172, %v2332
      %v2334 = vpop.f32.mrb[0].mxu0
      %2335 = vmatprep.mubr.bf16.mxu0 0
      %2336 = vmatmul.mubr.bf16.gmra.mrb[0].mxu0 %v1326
      %v2337 = vpop.f32.mrb[0].mxu0
      %v2338 = vadd.f32 %v2177, %v2337
      %v2339 = vpop.f32.mrb[0].mxu0
      %v2340 = vpop.f32.mrb[0].mxu0
      %v2341 = vadd.f32 %v2180, %v2340
      %v2342 = vpop.f32.mrb[0].mxu0
      %2343 = vmatprep.mubr.bf16.mxu0 0
      %2344 = vmatmul.mubr.bf16.gmra.mrb[0].mxu0 %v1329
      %v2345 = vpop.f32.mrb[0].mxu0
      %v2346 = vadd.f32 %v2185, %v2345
      %v2347 = vpop.f32.mrb[0].mxu0
      %v2348 = vpop.f32.mrb[0].mxu0
      %v2349 = vadd.f32 %v2188, %v2348
      %v2350 = vpop.f32.mrb[0].mxu0
      %2351 = vmatprep.mubr.bf16.mxu0 0
      %2352 = vmatmul.mubr.bf16.gmra.mrb[0].mxu0 %v1332
      %v2353 = vpop.f32.mrb[0].mxu0
      %v2354 = vadd.f32 %v2193, %v2353
      %v2355 = vpop.f32.mrb[0].mxu0
      %v2356 = vpop.f32.mrb[0].mxu0
      %v2357 = vadd.f32 %v2196, %v2356
      %v2358 = vpop.f32.mrb[0].mxu0
      %2359 = vmatprep.mubr.bf16.mxu0 0
      %2360 = vmatmul.mubr.bf16.gmra.mrb[0].mxu0 %v1335
      %v2361 = vpop.f32.mrb[0].mxu0
      %v2362 = vadd.f32 %v2201, %v2361
      %v2363 = vpop.f32.mrb[0].mxu0
      %v2364 = vpop.f32.mrb[0].mxu0
      %v2365 = vadd.f32 %v2204, %v2364
      %v2366 = vpop.f32.mrb[0].mxu0
      %2367 = vdwg.mxu0
      %v2368 = vld [vmem:[#allocation2 + $0x30] sm:$0xff]
      %v2369 = vld [vmem:[#allocation2 + $0x38] sm:$0xff]
      %v2370 = vld [vmem:[#allocation2 + $0x40] sm:$0xff]
      %v2371 = vld [vmem:[#allocation2 + $0x48] sm:$0xff]
      %v2372 = vld [vmem:[#allocation2 + $0x50] sm:$0xff]
      %v2373 = vld [vmem:[#allocation2 + $0x58] sm:$0xff]
      %v2374 = vld [vmem:[#allocation2 + $0x60] sm:$0xff]
      %v2375 = vld [vmem:[#allocation2 + $0x68] sm:$0xff]
      %v2376 = vld [vmem:[#allocation2 + $0x70] sm:$0xff]
      %v2377 = vld [vmem:[#allocation2 + $0x78] sm:$0xff]
      %v2378 = vld [vmem:[#allocation2 + $0x80] sm:$0xff]
      %v2379 = vld [vmem:[#allocation2 + $0x88] sm:$0xff]
      %v2380 = vld [vmem:[#allocation2 + $0x90] sm:$0xff]
      %v2381 = vld [vmem:[#allocation2 + $0x98] sm:$0xff]
      %v2382 = vld [vmem:[#allocation2 + $0xa0] sm:$0xff]
      %v2383 = vld [vmem:[#allocation2 + $0xa8] sm:$0xff]
      %v2384 = vld [vmem:[#allocation2 + $0xb0] sm:$0xff]
      %v2385 = vld [vmem:[#allocation2 + $0xb8] sm:$0xff]
      %v2386 = vld [vmem:[#allocation2 + $0xc0] sm:$0xff]
      %v2387 = vld [vmem:[#allocation2 + $0xc8] sm:$0xff]
      %v2388 = vld [vmem:[#allocation2 + $0xd0] sm:$0xff]
      %v2389 = vld [vmem:[#allocation2 + $0xd8] sm:$0xff]
      %v2390 = vld [vmem:[#allocation2 + $0xe0] sm:$0xff]
      %v2391 = vld [vmem:[#allocation2 + $0xe8] sm:$0xff]
      %v2392 = vld [vmem:[#allocation2 + $0xf0] sm:$0xff]
      %v2393 = vld [vmem:[#allocation2 + $0xf8] sm:$0xff]
      %v2394 = vld [vmem:[#allocation2 + $0x100] sm:$0xff]
      %v2395 = vld [vmem:[#allocation2 + $0x108] sm:$0xff]
      %v2396 = vld [vmem:[#allocation2 + $0x110] sm:$0xff]
      %v2397 = vld [vmem:[#allocation2 + $0x118] sm:$0xff]
      %v2398 = vld [vmem:[#allocation2 + $0x120] sm:$0xff]
      %v2399 = vld [vmem:[#allocation2 + $0x128] sm:$0xff]
      %v2400 = vld [vmem:[#allocation2 + $0x130] sm:$0xff]
      %v2401 = vld [vmem:[#allocation2 + $0x138] sm:$0xff]
      %v2402 = vld [vmem:[#allocation2 + $0x140] sm:$0xff]
      %v2403 = vld [vmem:[#allocation2 + $0x148] sm:$0xff]
      %v2404 = vld [vmem:[#allocation2 + $0x150] sm:$0xff]
      %v2405 = vld [vmem:[#allocation2 + $0x158] sm:$0xff]
      %v2406 = vld [vmem:[#allocation2 + $0x160] sm:$0xff]
      %v2407 = vld [vmem:[#allocation2 + $0x168] sm:$0xff]
      %v2408 = vld [vmem:[#allocation2 + $0x170] sm:$0xff]
      %v2409 = vld [vmem:[#allocation2 + $0x178] sm:$0xff]
      %v2410 = vld [vmem:[#allocation2 + $0x180] sm:$0xff]
      %v2411 = vld [vmem:[#allocation2 + $0x188] sm:$0xff]
      %v2412 = vld [vmem:[#allocation2 + $0x190] sm:$0xff]
      %v2413 = vld [vmem:[#allocation2 + $0x198] sm:$0xff]
      %v2414 = vld [vmem:[#allocation2 + $0x1a0] sm:$0xff]
      %v2415 = vld [vmem:[#allocation2 + $0x1a8] sm:$0xff]
      %s2416 = scalar_lea.vmem %s1, 384
      %v2417 = vld [vmem:[%s2416] sm:$0xf]
      %v2418 = vld [vmem:[%s2416 + $0x4] sm:$0xf]
      %v2419 = vld [vmem:[%s2416 + $0x8] sm:$0xf]
      %v2420 = vld [vmem:[%s2416 + $0xc] sm:$0xf]
      %v2421 = vld [vmem:[%s2416 + $0x10] sm:$0xf]
      %v2422 = vld [vmem:[%s2416 + $0x14] sm:$0xf]
      %v2423 = vld [vmem:[%s2416 + $0x18] sm:$0xf]
      %v2424 = vld [vmem:[%s2416 + $0x1c] sm:$0xf]
      %v2425 = vld [vmem:[%s2416 + $0x20] sm:$0xf]
      %v2426 = vld [vmem:[%s2416 + $0x24] sm:$0xf]
      %v2427 = vld [vmem:[%s2416 + $0x28] sm:$0xf]
      %v2428 = vld [vmem:[%s2416 + $0x2c] sm:$0xf]
      %v2429 = vld [vmem:[%s2416 + $0x30] sm:$0xf]
      %v2430 = vld [vmem:[%s2416 + $0x34] sm:$0xf]
      %v2431 = vld [vmem:[%s2416 + $0x38] sm:$0xf]
      %v2432 = vld [vmem:[%s2416 + $0x3c] sm:$0xf]
      %v2433 = vld [vmem:[%s2416 + $0x40] sm:$0xf]
      %v2434 = vld [vmem:[%s2416 + $0x44] sm:$0xf]
      %v2435 = vld [vmem:[%s2416 + $0x48] sm:$0xf]
      %v2436 = vld [vmem:[%s2416 + $0x4c] sm:$0xf]
      %v2437 = vld [vmem:[%s2416 + $0x50] sm:$0xf]
      %v2438 = vld [vmem:[%s2416 + $0x54] sm:$0xf]
      %v2439 = vld [vmem:[%s2416 + $0x58] sm:$0xf]
      %v2440 = vld [vmem:[%s2416 + $0x5c] sm:$0xf]
      %v2441 = vld [vmem:[%s2416 + $0x60] sm:$0xf]
      %v2442 = vld [vmem:[%s2416 + $0x64] sm:$0xf]
      %v2443 = vld [vmem:[%s2416 + $0x68] sm:$0xf]
      %v2444 = vld [vmem:[%s2416 + $0x6c] sm:$0xf]
      %v2445 = vld [vmem:[%s2416 + $0x70] sm:$0xf]
      %v2446 = vld [vmem:[%s2416 + $0x74] sm:$0xf]
      %v2447 = vld [vmem:[%s2416 + $0x78] sm:$0xf]
      %v2448 = vld [vmem:[%s2416 + $0x7c] sm:$0xf]
      %v2449 = vld [vmem:[%s2416 + $0x80] sm:$0xf]
      %v2450 = vld [vmem:[%s2416 + $0x84] sm:$0xf]
      %v2451 = vld [vmem:[%s2416 + $0x88] sm:$0xf]
      %v2452 = vld [vmem:[%s2416 + $0x8c] sm:$0xf]
      %v2453 = vld [vmem:[%s2416 + $0x90] sm:$0xf]
      %v2454 = vld [vmem:[%s2416 + $0x94] sm:$0xf]
      %v2455 = vld [vmem:[%s2416 + $0x98] sm:$0xf]
      %v2456 = vld [vmem:[%s2416 + $0x9c] sm:$0xf]
      %v2457 = vld [vmem:[%s2416 + $0xa0] sm:$0xf]
      %v2458 = vld [vmem:[%s2416 + $0xa4] sm:$0xf]
      %v2459 = vld [vmem:[%s2416 + $0xa8] sm:$0xf]
      %v2460 = vld [vmem:[%s2416 + $0xac] sm:$0xf]
      %v2461 = vld [vmem:[%s2416 + $0xb0] sm:$0xf]
      %v2462 = vld [vmem:[%s2416 + $0xb4] sm:$0xf]
      %v2463 = vld [vmem:[%s2416 + $0xb8] sm:$0xf]
      %v2464 = vld [vmem:[%s2416 + $0xbc] sm:$0xf]
      %v2513 = vunpack.c.l.b16 %v2417
      %v2514 = vunpack.c.l.b16 %v2418
      %v2515 = vunpack.c.l.b16 %v2419
      %v2516 = vunpack.c.l.b16 %v2420
      %v2517 = vunpack.c.l.b16 %v2421
      %v2518 = vunpack.c.l.b16 %v2422
      %v2519 = vunpack.c.l.b16 %v2423
      %v2520 = vunpack.c.l.b16 %v2424
      %v2521 = vunpack.c.l.b16 %v2425
      %v2522 = vunpack.c.l.b16 %v2426
      %v2523 = vunpack.c.l.b16 %v2427
      %v2524 = vunpack.c.l.b16 %v2428
      %v2525 = vunpack.c.l.b16 %v2429
      %v2526 = vunpack.c.l.b16 %v2430
      %v2527 = vunpack.c.l.b16 %v2431
      %v2528 = vunpack.c.l.b16 %v2432
      %v2529 = vunpack.c.l.b16 %v2433
      %v2530 = vunpack.c.l.b16 %v2434
      %v2531 = vunpack.c.l.b16 %v2435
      %v2532 = vunpack.c.l.b16 %v2436
      %v2533 = vunpack.c.l.b16 %v2437
      %v2534 = vunpack.c.l.b16 %v2438
      %v2535 = vunpack.c.l.b16 %v2439
      %v2536 = vunpack.c.l.b16 %v2440
      %v2537 = vunpack.c.l.b16 %v2441
      %v2538 = vunpack.c.l.b16 %v2442
      %v2539 = vunpack.c.l.b16 %v2443
      %v2540 = vunpack.c.l.b16 %v2444
      %v2541 = vunpack.c.l.b16 %v2445
      %v2542 = vunpack.c.l.b16 %v2446
      %v2543 = vunpack.c.l.b16 %v2447
      %v2544 = vunpack.c.l.b16 %v2448
      %v2545 = vunpack.c.l.b16 %v2449
      %v2546 = vunpack.c.l.b16 %v2450
      %v2547 = vunpack.c.l.b16 %v2451
      %v2548 = vunpack.c.l.b16 %v2452
      %v2549 = vunpack.c.l.b16 %v2453
      %v2550 = vunpack.c.l.b16 %v2454
      %v2551 = vunpack.c.l.b16 %v2455
      %v2552 = vunpack.c.l.b16 %v2456
      %v2553 = vunpack.c.l.b16 %v2457
      %v2554 = vunpack.c.l.b16 %v2458
      %v2555 = vunpack.c.l.b16 %v2459
      %v2556 = vunpack.c.l.b16 %v2460
      %v2557 = vunpack.c.l.b16 %v2461
      %v2558 = vunpack.c.l.b16 %v2462
      %v2559 = vunpack.c.l.b16 %v2463
      %v2560 = vunpack.c.l.b16 %v2464
      %v2561 = vpack.c.b16 %v2514, %v2513
      %v2562 = vpack.c.b16 %v2516, %v2515
      %v2563 = vpack.c.b16 %v2518, %v2517
      %v2564 = vpack.c.b16 %v2520, %v2519
      %v2565 = vpack.c.b16 %v2522, %v2521
      %v2566 = vpack.c.b16 %v2524, %v2523
      %v2567 = vpack.c.b16 %v2526, %v2525
      %v2568 = vpack.c.b16 %v2528, %v2527
      %v2569 = vpack.c.b16 %v2530, %v2529
      %v2570 = vpack.c.b16 %v2532, %v2531
      %v2571 = vpack.c.b16 %v2534, %v2533
      %v2572 = vpack.c.b16 %v2536, %v2535
      %v2573 = vpack.c.b16 %v2538, %v2537
      %v2574 = vpack.c.b16 %v2540, %v2539
      %v2575 = vpack.c.b16 %v2542, %v2541
      %v2576 = vpack.c.b16 %v2544, %v2543
      %v2577 = vpack.c.b16 %v2546, %v2545
      %v2578 = vpack.c.b16 %v2548, %v2547
      %v2579 = vpack.c.b16 %v2550, %v2549
      %v2580 = vpack.c.b16 %v2552, %v2551
      %v2581 = vpack.c.b16 %v2554, %v2553
      %v2582 = vpack.c.b16 %v2556, %v2555
      %v2583 = vpack.c.b16 %v2558, %v2557
      %v2584 = vpack.c.b16 %v2560, %v2559
      %2609 = vmatprep.subr.bf16.mxu0 0
      %2610 = vmatpush1.bf16.msra.mxu0 %v2561
      %2611 = vmatprep.subr.bf16.mxu0 0
      %2612 = vmatpush1.bf16.msra.mxu0 %v2562
      %2613 = vmatprep.subr.bf16.mxu0 0
      %2614 = vmatpush1.bf16.msra.mxu0 %v2563
      %2615 = vmatprep.subr.bf16.mxu0 0
      %2616 = vmatpush1.bf16.msra.mxu0 %v2564
      %2617 = vmatprep.subr.bf16.mxu0 0
      %2618 = vmatpush1.bf16.msra.mxu0 %v2565
      %2619 = vmatprep.subr.bf16.mxu0 0
      %2620 = vmatpush1.bf16.msra.mxu0 %v2566
      %2621 = vmatprep.subr.bf16.mxu0 0
      %2622 = vmatpush1.bf16.msra.mxu0 %v2567
      %2623 = vmatprep.subr.bf16.mxu0 0
      %2624 = vmatpush1.bf16.msra.mxu0 %v2568
      %2625 = vmatprep.subr.bf16.mxu0 0
      %2626 = vmatpush1.bf16.msra.mxu0 %v2569
      %2627 = vmatprep.subr.bf16.mxu0 0
      %2628 = vmatpush1.bf16.msra.mxu0 %v2570
      %2629 = vmatprep.subr.bf16.mxu0 0
      %2630 = vmatpush1.bf16.msra.mxu0 %v2571
      %2631 = vmatprep.subr.bf16.mxu0 0
      %2632 = vmatpush1.bf16.msra.mxu0 %v2572
      %2633 = vmatprep.subr.bf16.mxu0 0
      %2634 = vmatpush1.bf16.msra.mxu0 %v2573
      %2635 = vmatprep.subr.bf16.mxu0 0
      %2636 = vmatpush1.bf16.msra.mxu0 %v2574
      %2637 = vmatprep.subr.bf16.mxu0 0
      %2638 = vmatpush1.bf16.msra.mxu0 %v2575
      %2639 = vmatprep.subr.bf16.mxu0 0
      %2640 = vmatpush1.bf16.msra.mxu0 %v2576
      %2641 = vmatprep.mubr.bf16.mxu0 %v2369
      %2642 = vmatmul.mubr.bf16.gmra.mrb[0].mxu0 %v2368
      %v2643 = vpop.f32.mrb[0].mxu0
      %v2644 = vadd.f32 0.0, %v2643
      %v2645 = vpop.f32.mrb[0].mxu0
      %v2646 = vpop.f32.mrb[0].mxu0
      %v2647 = vadd.f32 0.0, %v2646
      %v2648 = vpop.f32.mrb[0].mxu0
      %2649 = vmatprep.mubr.bf16.mxu0 %v2372
      %2650 = vmatmul.mubr.bf16.gmra.mrb[0].mxu0 %v2371
      %v2651 = vpop.f32.mrb[0].mxu0
      %v2652 = vadd.f32 0.0, %v2651
      %v2653 = vpop.f32.mrb[0].mxu0
      %v2654 = vpop.f32.mrb[0].mxu0
      %v2655 = vadd.f32 0.0, %v2654
      %v2656 = vpop.f32.mrb[0].mxu0
      %2657 = vmatprep.mubr.bf16.mxu0 %v2375
      %2658 = vmatmul.mubr.bf16.gmra.mrb[0].mxu0 %v2374
      %v2659 = vpop.f32.mrb[0].mxu0
      %v2660 = vadd.f32 0.0, %v2659
      %v2661 = vpop.f32.mrb[0].mxu0
      %v2662 = vpop.f32.mrb[0].mxu0
      %v2663 = vadd.f32 0.0, %v2662
      %v2664 = vpop.f32.mrb[0].mxu0
      %2665 = vmatprep.mubr.bf16.mxu0 %v2378
      %2666 = vmatmul.mubr.bf16.gmra.mrb[0].mxu0 %v2377
      %v2667 = vpop.f32.mrb[0].mxu0
      %v2668 = vadd.f32 0.0, %v2667
      %v2669 = vpop.f32.mrb[0].mxu0
      %v2670 = vpop.f32.mrb[0].mxu0
      %v2671 = vadd.f32 0.0, %v2670
      %v2672 = vpop.f32.mrb[0].mxu0
      %2673 = vmatprep.mubr.bf16.mxu0 %v2381
      %2674 = vmatmul.mubr.bf16.gmra.mrb[0].mxu0 %v2380
      %v2675 = vpop.f32.mrb[0].mxu0
      %v2676 = vadd.f32 0.0, %v2675
      %v2677 = vpop.f32.mrb[0].mxu0
      %v2678 = vpop.f32.mrb[0].mxu0
      %v2679 = vadd.f32 0.0, %v2678
      %v2680 = vpop.f32.mrb[0].mxu0
      %2681 = vmatprep.mubr.bf16.mxu0 %v2384
      %2682 = vmatmul.mubr.bf16.gmra.mrb[0].mxu0 %v2383
      %v2683 = vpop.f32.mrb[0].mxu0
      %v2684 = vadd.f32 0.0, %v2683
      %v2685 = vpop.f32.mrb[0].mxu0
      %v2686 = vpop.f32.mrb[0].mxu0
      %v2687 = vadd.f32 0.0, %v2686
      %v2688 = vpop.f32.mrb[0].mxu0
      %2689 = vmatprep.mubr.bf16.mxu0 %v2387
      %2690 = vmatmul.mubr.bf16.gmra.mrb[0].mxu0 %v2386
      %v2691 = vpop.f32.mrb[0].mxu0
      %v2692 = vadd.f32 0.0, %v2691
      %v2693 = vpop.f32.mrb[0].mxu0
      %v2694 = vpop.f32.mrb[0].mxu0
      %v2695 = vadd.f32 0.0, %v2694
      %v2696 = vpop.f32.mrb[0].mxu0
      %2697 = vmatprep.mubr.bf16.mxu0 %v2390
      %2698 = vmatmul.mubr.bf16.gmra.mrb[0].mxu0 %v2389
      %v2699 = vpop.f32.mrb[0].mxu0
      %v2700 = vadd.f32 0.0, %v2699
      %v2701 = vpop.f32.mrb[0].mxu0
      %v2702 = vpop.f32.mrb[0].mxu0
      %v2703 = vadd.f32 0.0, %v2702
      %v2704 = vpop.f32.mrb[0].mxu0
      %2705 = vmatprep.mubr.bf16.mxu0 %v2393
      %2706 = vmatmul.mubr.bf16.gmra.mrb[0].mxu0 %v2392
      %v2707 = vpop.f32.mrb[0].mxu0
      %v2708 = vadd.f32 0.0, %v2707
      %v2709 = vpop.f32.mrb[0].mxu0
      %v2710 = vpop.f32.mrb[0].mxu0
      %v2711 = vadd.f32 0.0, %v2710
      %v2712 = vpop.f32.mrb[0].mxu0
      %2713 = vmatprep.mubr.bf16.mxu0 %v2396
      %2714 = vmatmul.mubr.bf16.gmra.mrb[0].mxu0 %v2395
      %v2715 = vpop.f32.mrb[0].mxu0
      %v2716 = vadd.f32 0.0, %v2715
      %v2717 = vpop.f32.mrb[0].mxu0
      %v2718 = vpop.f32.mrb[0].mxu0
      %v2719 = vadd.f32 0.0, %v2718
      %v2720 = vpop.f32.mrb[0].mxu0
      %2721 = vmatprep.mubr.bf16.mxu0 %v2399
      %2722 = vmatmul.mubr.bf16.gmra.mrb[0].mxu0 %v2398
      %v2723 = vpop.f32.mrb[0].mxu0
      %v2724 = vadd.f32 0.0, %v2723
      %v2725 = vpop.f32.mrb[0].mxu0
      %v2726 = vpop.f32.mrb[0].mxu0
      %v2727 = vadd.f32 0.0, %v2726
      %v2728 = vpop.f32.mrb[0].mxu0
      %2729 = vmatprep.mubr.bf16.mxu0 %v2402
      %2730 = vmatmul.mubr.bf16.gmra.mrb[0].mxu0 %v2401
      %v2731 = vpop.f32.mrb[0].mxu0
      %v2732 = vadd.f32 0.0, %v2731
      %v2733 = vpop.f32.mrb[0].mxu0
      %v2734 = vpop.f32.mrb[0].mxu0
      %v2735 = vadd.f32 0.0, %v2734
      %v2736 = vpop.f32.mrb[0].mxu0
      %2737 = vmatprep.mubr.bf16.mxu0 %v2405
      %2738 = vmatmul.mubr.bf16.gmra.mrb[0].mxu0 %v2404
      %v2739 = vpop.f32.mrb[0].mxu0
      %v2740 = vadd.f32 0.0, %v2739
      %v2741 = vpop.f32.mrb[0].mxu0
      %v2742 = vpop.f32.mrb[0].mxu0
      %v2743 = vadd.f32 0.0, %v2742
      %v2744 = vpop.f32.mrb[0].mxu0
      %2745 = vmatprep.mubr.bf16.mxu0 %v2408
      %2746 = vmatmul.mubr.bf16.gmra.mrb[0].mxu0 %v2407
      %v2747 = vpop.f32.mrb[0].mxu0
      %v2748 = vadd.f32 0.0, %v2747
      %v2749 = vpop.f32.mrb[0].mxu0
      %v2750 = vpop.f32.mrb[0].mxu0
      %v2751 = vadd.f32 0.0, %v2750
      %v2752 = vpop.f32.mrb[0].mxu0
      %2753 = vmatprep.mubr.bf16.mxu0 %v2411
      %2754 = vmatmul.mubr.bf16.gmra.mrb[0].mxu0 %v2410
      %v2755 = vpop.f32.mrb[0].mxu0
      %v2756 = vadd.f32 0.0, %v2755
      %v2757 = vpop.f32.mrb[0].mxu0
      %v2758 = vpop.f32.mrb[0].mxu0
      %v2759 = vadd.f32 0.0, %v2758
      %v2760 = vpop.f32.mrb[0].mxu0
      %2761 = vmatprep.mubr.bf16.mxu0 %v2414
      %2762 = vmatmul.mubr.bf16.gmra.mrb[0].mxu0 %v2413
      %v2763 = vpop.f32.mrb[0].mxu0
      %v2764 = vadd.f32 0.0, %v2763
      %v2765 = vpop.f32.mrb[0].mxu0
      %v2766 = vpop.f32.mrb[0].mxu0
      %v2767 = vadd.f32 0.0, %v2766
      %v2768 = vpop.f32.mrb[0].mxu0
      %2769 = vdwg.mxu0
      %2770 = vmatprep.subr.bf16.mxu0 0
      %2771 = vmatpush1.bf16.msra.mxu0 %v2577
      %2772 = vmatprep.subr.bf16.mxu0 0
      %2773 = vmatpush1.bf16.msra.mxu0 %v2578
      %2774 = vmatprep.subr.bf16.mxu0 0
      %2775 = vmatpush1.bf16.msra.mxu0 %v2579
      %2776 = vmatprep.subr.bf16.mxu0 0
      %2777 = vmatpush1.bf16.msra.mxu0 %v2580
      %2778 = vmatprep.subr.bf16.mxu0 0
      %2779 = vmatpush1.bf16.msra.mxu0 %v2581
      %2780 = vmatprep.subr.bf16.mxu0 0
      %2781 = vmatpush1.bf16.msra.mxu0 %v2582
      %2782 = vmatprep.subr.bf16.mxu0 0
      %2783 = vmatpush1.bf16.msra.mxu0 %v2583
      %2784 = vmatprep.subr.bf16.mxu0 0
      %2785 = vmatpush1.bf16.msra.mxu0 %v2584
      %2786 = vmatprep.subr.bf16.mxu0 0
      %2787 = vmatpush1.bf16.msra.mxu0 0
      %2788 = vmatprep.subr.bf16.mxu0 0
      %2789 = vmatpush1.bf16.msra.mxu0 0
      %2790 = vmatprep.subr.bf16.mxu0 0
      %2791 = vmatpush1.bf16.msra.mxu0 0
      %2792 = vmatprep.subr.bf16.mxu0 0
      %2793 = vmatpush1.bf16.msra.mxu0 0
      %2794 = vmatprep.subr.bf16.mxu0 0
      %2795 = vmatpush1.bf16.msra.mxu0 0
      %2796 = vmatprep.subr.bf16.mxu0 0
      %2797 = vmatpush1.bf16.msra.mxu0 0
      %2798 = vmatprep.subr.bf16.mxu0 0
      %2799 = vmatpush1.bf16.msra.mxu0 0
      %2800 = vmatprep.subr.bf16.mxu0 0
      %2801 = vmatpush1.bf16.msra.mxu0 0
      %2802 = vmatprep.mubr.bf16.mxu0 0
      %2803 = vmatmul.mubr.bf16.gmra.mrb[0].mxu0 %v2370
      %v2804 = vpop.f32.mrb[0].mxu0
      %v2805 = vadd.f32 %v2644, %v2804
      %v2806 = vpop.f32.mrb[0].mxu0
      %v2807 = vpop.f32.mrb[0].mxu0
      %v2808 = vadd.f32 %v2647, %v2807
      %v2809 = vpop.f32.mrb[0].mxu0
      %2810 = vmatprep.mubr.bf16.mxu0 0
      %2811 = vmatmul.mubr.bf16.gmra.mrb[0].mxu0 %v2373
      %v2812 = vpop.f32.mrb[0].mxu0
      %v2813 = vadd.f32 %v2652, %v2812
      %v2814 = vpop.f32.mrb[0].mxu0
      %v2815 = vpop.f32.mrb[0].mxu0
      %v2816 = vadd.f32 %v2655, %v2815
      %v2817 = vpop.f32.mrb[0].mxu0
      %2818 = vmatprep.mubr.bf16.mxu0 0
      %2819 = vmatmul.mubr.bf16.gmra.mrb[0].mxu0 %v2376
      %v2820 = vpop.f32.mrb[0].mxu0
      %v2821 = vadd.f32 %v2660, %v2820
      %v2822 = vpop.f32.mrb[0].mxu0
      %v2823 = vpop.f32.mrb[0].mxu0
      %v2824 = vadd.f32 %v2663, %v2823
      %v2825 = vpop.f32.mrb[0].mxu0
      %2826 = vmatprep.mubr.bf16.mxu0 0
      %2827 = vmatmul.mubr.bf16.gmra.mrb[0].mxu0 %v2379
      %v2828 = vpop.f32.mrb[0].mxu0
      %v2829 = vadd.f32 %v2668, %v2828
      %v2830 = vpop.f32.mrb[0].mxu0
      %v2831 = vpop.f32.mrb[0].mxu0
      %v2832 = vadd.f32 %v2671, %v2831
      %v2833 = vpop.f32.mrb[0].mxu0
      %2834 = vmatprep.mubr.bf16.mxu0 0
      %2835 = vmatmul.mubr.bf16.gmra.mrb[0].mxu0 %v2382
      %v2836 = vpop.f32.mrb[0].mxu0
      %v2837 = vadd.f32 %v2676, %v2836
      %v2838 = vpop.f32.mrb[0].mxu0
      %v2839 = vpop.f32.mrb[0].mxu0
      %v2840 = vadd.f32 %v2679, %v2839
      %v2841 = vpop.f32.mrb[0].mxu0
      %2842 = vmatprep.mubr.bf16.mxu0 0
      %2843 = vmatmul.mubr.bf16.gmra.mrb[0].mxu0 %v2385
      %v2844 = vpop.f32.mrb[0].mxu0
      %v2845 = vadd.f32 %v2684, %v2844
      %v2846 = vpop.f32.mrb[0].mxu0
      %v2847 = vpop.f32.mrb[0].mxu0
      %v2848 = vadd.f32 %v2687, %v2847
      %v2849 = vpop.f32.mrb[0].mxu0
      %2850 = vmatprep.mubr.bf16.mxu0 0
      %2851 = vmatmul.mubr.bf16.gmra.mrb[0].mxu0 %v2388
      %v2852 = vpop.f32.mrb[0].mxu0
      %v2853 = vadd.f32 %v2692, %v2852
      %v2854 = vpop.f32.mrb[0].mxu0
      %v2855 = vpop.f32.mrb[0].mxu0
      %v2856 = vadd.f32 %v2695, %v2855
      %v2857 = vpop.f32.mrb[0].mxu0
      %2858 = vmatprep.mubr.bf16.mxu0 0
      %2859 = vmatmul.mubr.bf16.gmra.mrb[0].mxu0 %v2391
      %v2860 = vpop.f32.mrb[0].mxu0
      %v2861 = vadd.f32 %v2700, %v2860
      %v2862 = vpop.f32.mrb[0].mxu0
      %v2863 = vpop.f32.mrb[0].mxu0
      %v2864 = vadd.f32 %v2703, %v2863
      %v2865 = vpop.f32.mrb[0].mxu0
      %2866 = vmatprep.mubr.bf16.mxu0 0
      %2867 = vmatmul.mubr.bf16.gmra.mrb[0].mxu0 %v2394
      %v2868 = vpop.f32.mrb[0].mxu0
      %v2869 = vadd.f32 %v2708, %v2868
      %v2870 = vpop.f32.mrb[0].mxu0
      %v2871 = vpop.f32.mrb[0].mxu0
      %v2872 = vadd.f32 %v2711, %v2871
      %v2873 = vpop.f32.mrb[0].mxu0
      %2874 = vmatprep.mubr.bf16.mxu0 0
      %2875 = vmatmul.mubr.bf16.gmra.mrb[0].mxu0 %v2397
      %v2876 = vpop.f32.mrb[0].mxu0
      %v2877 = vadd.f32 %v2716, %v2876
      %v2878 = vpop.f32.mrb[0].mxu0
      %v2879 = vpop.f32.mrb[0].mxu0
      %v2880 = vadd.f32 %v2719, %v2879
      %v2881 = vpop.f32.mrb[0].mxu0
      %2882 = vmatprep.mubr.bf16.mxu0 0
      %2883 = vmatmul.mubr.bf16.gmra.mrb[0].mxu0 %v2400
      %v2884 = vpop.f32.mrb[0].mxu0
      %v2885 = vadd.f32 %v2724, %v2884
      %v2886 = vpop.f32.mrb[0].mxu0
      %v2887 = vpop.f32.mrb[0].mxu0
      %v2888 = vadd.f32 %v2727, %v2887
      %v2889 = vpop.f32.mrb[0].mxu0
      %2890 = vmatprep.mubr.bf16.mxu0 0
      %2891 = vmatmul.mubr.bf16.gmra.mrb[0].mxu0 %v2403
      %v2892 = vpop.f32.mrb[0].mxu0
      %v2893 = vadd.f32 %v2732, %v2892
      %v2894 = vpop.f32.mrb[0].mxu0
      %v2895 = vpop.f32.mrb[0].mxu0
      %v2896 = vadd.f32 %v2735, %v2895
      %v2897 = vpop.f32.mrb[0].mxu0
      %2898 = vmatprep.mubr.bf16.mxu0 0
      %2899 = vmatmul.mubr.bf16.gmra.mrb[0].mxu0 %v2406
      %v2900 = vpop.f32.mrb[0].mxu0
      %v2901 = vadd.f32 %v2740, %v2900
      %v2902 = vpop.f32.mrb[0].mxu0
      %v2903 = vpop.f32.mrb[0].mxu0
      %v2904 = vadd.f32 %v2743, %v2903
      %v2905 = vpop.f32.mrb[0].mxu0
      %2906 = vmatprep.mubr.bf16.mxu0 0
      %2907 = vmatmul.mubr.bf16.gmra.mrb[0].mxu0 %v2409
      %v2908 = vpop.f32.mrb[0].mxu0
      %v2909 = vadd.f32 %v2748, %v2908
      %v2910 = vpop.f32.mrb[0].mxu0
      %v2911 = vpop.f32.mrb[0].mxu0
      %v2912 = vadd.f32 %v2751, %v2911
      %v2913 = vpop.f32.mrb[0].mxu0
      %2914 = vmatprep.mubr.bf16.mxu0 0
      %2915 = vmatmul.mubr.bf16.gmra.mrb[0].mxu0 %v2412
      %v2916 = vpop.f32.mrb[0].mxu0
      %v2917 = vadd.f32 %v2756, %v2916
      %v2918 = vpop.f32.mrb[0].mxu0
      %v2919 = vpop.f32.mrb[0].mxu0
      %v2920 = vadd.f32 %v2759, %v2919
      %v2921 = vpop.f32.mrb[0].mxu0
      %2922 = vmatprep.mubr.bf16.mxu0 0
      %2923 = vmatmul.mubr.bf16.gmra.mrb[0].mxu0 %v2415
      %v2924 = vpop.f32.mrb[0].mxu0
      %v2925 = vadd.f32 %v2764, %v2924
      %v2926 = vpop.f32.mrb[0].mxu0
      %v2927 = vpop.f32.mrb[0].mxu0
      %v2928 = vadd.f32 %v2767, %v2927
      %v2929 = vpop.f32.mrb[0].mxu0
      %2930 = vdwg.mxu0
      %v2931 = vadd.f32 %v2242, %v2805
      %v2932 = vadd.f32 %v2245, %v2808
      %v2933 = vadd.f32 %v2250, %v2813
      %v2934 = vadd.f32 %v2253, %v2816
      %v2935 = vadd.f32 %v2258, %v2821
      %v2936 = vadd.f32 %v2261, %v2824
      %v2937 = vadd.f32 %v2266, %v2829
      %v2938 = vadd.f32 %v2269, %v2832
      %v2939 = vadd.f32 %v2274, %v2837
      %v2940 = vadd.f32 %v2277, %v2840
      %v2941 = vadd.f32 %v2282, %v2845
      %v2942 = vadd.f32 %v2285, %v2848
      %v2943 = vadd.f32 %v2290, %v2853
      %v2944 = vadd.f32 %v2293, %v2856
      %v2945 = vadd.f32 %v2298, %v2861
      %v2946 = vadd.f32 %v2301, %v2864
      %v2947 = vadd.f32 %v2306, %v2869
      %v2948 = vadd.f32 %v2309, %v2872
      %v2949 = vadd.f32 %v2314, %v2877
      %v2950 = vadd.f32 %v2317, %v2880
      %v2951 = vadd.f32 %v2322, %v2885
      %v2952 = vadd.f32 %v2325, %v2888
      %v2953 = vadd.f32 %v2330, %v2893
      %v2954 = vadd.f32 %v2333, %v2896
      %v2955 = vadd.f32 %v2338, %v2901
      %v2956 = vadd.f32 %v2341, %v2904
      %v2957 = vadd.f32 %v2346, %v2909
      %v2958 = vadd.f32 %v2349, %v2912
      %v2959 = vadd.f32 %v2354, %v2917
      %v2960 = vadd.f32 %v2357, %v2920
      %v2961 = vadd.f32 %v2362, %v2925
      %v2962 = vadd.f32 %v2365, %v2928
      %v2963 = vpack.c.bf16 %v2932, %v2931
      %v2964 = vpack.c.bf16 %v2934, %v2933
      %v2965 = vpack.c.bf16 %v2936, %v2935
      %v2966 = vpack.c.bf16 %v2938, %v2937
      %v2967 = vpack.c.bf16 %v2940, %v2939
      %v2968 = vpack.c.bf16 %v2942, %v2941
      %v2969 = vpack.c.bf16 %v2944, %v2943
      %v2970 = vpack.c.bf16 %v2946, %v2945
      %v2971 = vpack.c.bf16 %v2948, %v2947
      %v2972 = vpack.c.bf16 %v2950, %v2949
      %v2973 = vpack.c.bf16 %v2952, %v2951
      %v2974 = vpack.c.bf16 %v2954, %v2953
      %v2975 = vpack.c.bf16 %v2956, %v2955
      %v2976 = vpack.c.bf16 %v2958, %v2957
      %v2977 = vpack.c.bf16 %v2960, %v2959
      %v2978 = vpack.c.bf16 %v2962, %v2961
      %v2995 = vunpack.c.l.b16 %v2963
      %v2996 = vunpack.c.h.b16 %v2963
      %v2997 = vunpack.c.l.b16 %v2964
      %v2998 = vunpack.c.h.b16 %v2964
      %v2999 = vunpack.c.l.b16 %v2965
      %v3000 = vunpack.c.h.b16 %v2965
      %v3001 = vunpack.c.l.b16 %v2966
      %v3002 = vunpack.c.h.b16 %v2966
      %v3003 = vunpack.c.l.b16 %v2967
      %v3004 = vunpack.c.h.b16 %v2967
      %v3005 = vunpack.c.l.b16 %v2968
      %v3006 = vunpack.c.h.b16 %v2968
      %v3007 = vunpack.c.l.b16 %v2969
      %v3008 = vunpack.c.h.b16 %v2969
      %v3009 = vunpack.c.l.b16 %v2970
      %v3010 = vunpack.c.h.b16 %v2970
      %v3011 = vunpack.c.l.b16 %v2971
      %v3012 = vunpack.c.h.b16 %v2971
      %v3013 = vunpack.c.l.b16 %v2972
      %v3014 = vunpack.c.h.b16 %v2972
      %v3015 = vunpack.c.l.b16 %v2973
      %v3016 = vunpack.c.h.b16 %v2973
      %v3017 = vunpack.c.l.b16 %v2974
      %v3018 = vunpack.c.h.b16 %v2974
      %v3019 = vunpack.c.l.b16 %v2975
      %v3020 = vunpack.c.h.b16 %v2975
      %v3021 = vunpack.c.l.b16 %v2976
      %v3022 = vunpack.c.h.b16 %v2976
      %v3023 = vunpack.c.l.b16 %v2977
      %v3024 = vunpack.c.h.b16 %v2977
      %v3025 = vunpack.c.l.b16 %v2978
      %v3026 = vunpack.c.h.b16 %v2978
      %v3027 = vpack.c.b16 %v2995, %v2995
      %v3028 = vpack.c.b16 %v2996, %v2996
      %v3029 = vpack.c.b16 %v2997, %v2997
      %v3030 = vpack.c.b16 %v2998, %v2998
      %v3031 = vpack.c.b16 %v2999, %v2999
      %v3032 = vpack.c.b16 %v3000, %v3000
      %v3033 = vpack.c.b16 %v3001, %v3001
      %v3034 = vpack.c.b16 %v3002, %v3002
      %v3035 = vpack.c.b16 %v3003, %v3003
      %v3036 = vpack.c.b16 %v3004, %v3004
      %v3037 = vpack.c.b16 %v3005, %v3005
      %v3038 = vpack.c.b16 %v3006, %v3006
      %v3039 = vpack.c.b16 %v3007, %v3007
      %v3040 = vpack.c.b16 %v3008, %v3008
      %v3041 = vpack.c.b16 %v3009, %v3009
      %v3042 = vpack.c.b16 %v3010, %v3010
      %v3043 = vpack.c.b16 %v3011, %v3011
      %v3044 = vpack.c.b16 %v3012, %v3012
      %v3045 = vpack.c.b16 %v3013, %v3013
      %v3046 = vpack.c.b16 %v3014, %v3014
      %v3047 = vpack.c.b16 %v3015, %v3015
      %v3048 = vpack.c.b16 %v3016, %v3016
      %v3049 = vpack.c.b16 %v3017, %v3017
      %v3050 = vpack.c.b16 %v3018, %v3018
      %v3051 = vpack.c.b16 %v3019, %v3019
      %v3052 = vpack.c.b16 %v3020, %v3020
      %v3053 = vpack.c.b16 %v3021, %v3021
      %v3054 = vpack.c.b16 %v3022, %v3022
      %v3055 = vpack.c.b16 %v3023, %v3023
      %v3056 = vpack.c.b16 %v3024, %v3024
      %v3057 = vpack.c.b16 %v3025, %v3025
      %v3058 = vpack.c.b16 %v3026, %v3026
      %3091 = vst [vmem:[%s206] sm:$0xf] %v3027
      %3092 = vst [vmem:[%s206 + $0x4] sm:$0xf] %v3028
      %3093 = vst [vmem:[%s206 + $0x8] sm:$0xf] %v3029
      %3094 = vst [vmem:[%s206 + $0xc] sm:$0xf] %v3030
      %3095 = vst [vmem:[%s206 + $0x10] sm:$0xf] %v3031
      %3096 = vst [vmem:[%s206 + $0x14] sm:$0xf] %v3032
      %3097 = vst [vmem:[%s206 + $0x18] sm:$0xf] %v3033
      %3098 = vst [vmem:[%s206 + $0x1c] sm:$0xf] %v3034
      %3099 = vst [vmem:[%s206 + $0x20] sm:$0xf] %v3035
      %3100 = vst [vmem:[%s206 + $0x24] sm:$0xf] %v3036
      %3101 = vst [vmem:[%s206 + $0x28] sm:$0xf] %v3037
      %3102 = vst [vmem:[%s206 + $0x2c] sm:$0xf] %v3038
      %3103 = vst [vmem:[%s206 + $0x30] sm:$0xf] %v3039
      %3104 = vst [vmem:[%s206 + $0x34] sm:$0xf] %v3040
      %3105 = vst [vmem:[%s206 + $0x38] sm:$0xf] %v3041
      %3106 = vst [vmem:[%s206 + $0x3c] sm:$0xf] %v3042
      %3107 = vst [vmem:[%s206 + $0x40] sm:$0xf] %v3043
      %3108 = vst [vmem:[%s206 + $0x44] sm:$0xf] %v3044
      %3109 = vst [vmem:[%s206 + $0x48] sm:$0xf] %v3045
      %3110 = vst [vmem:[%s206 + $0x4c] sm:$0xf] %v3046
      %3111 = vst [vmem:[%s206 + $0x50] sm:$0xf] %v3047
      %3112 = vst [vmem:[%s206 + $0x54] sm:$0xf] %v3048
      %3113 = vst [vmem:[%s206 + $0x58] sm:$0xf] %v3049
      %3114 = vst [vmem:[%s206 + $0x5c] sm:$0xf] %v3050
      %3115 = vst [vmem:[%s206 + $0x60] sm:$0xf] %v3051
      %3116 = vst [vmem:[%s206 + $0x64] sm:$0xf] %v3052
      %3117 = vst [vmem:[%s206 + $0x68] sm:$0xf] %v3053
      %3118 = vst [vmem:[%s206 + $0x6c] sm:$0xf] %v3054
      %3119 = vst [vmem:[%s206 + $0x70] sm:$0xf] %v3055
      %3120 = vst [vmem:[%s206 + $0x74] sm:$0xf] %v3056
      %3121 = vst [vmem:[%s206 + $0x78] sm:$0xf] %v3057
      %3122 = vst [vmem:[%s206 + $0x7c] sm:$0xf] %v3058
      %v3123 = vadd.f32 %v2931, %v2932
      %v3124 = vadd.f32 %v3123, %v2933
      %v3125 = vadd.f32 %v3124, %v2934
      %v3126 = vadd.f32 %v3125, %v2935
      %v3127 = vadd.f32 %v3126, %v2936
      %v3128 = vadd.f32 %v3127, %v2937
      %v3129 = vadd.f32 %v3128, %v2938
      %v3130 = vadd.f32 %v3129, %v2939
      %v3131 = vadd.f32 %v3130, %v2940
      %v3132 = vadd.f32 %v3131, %v2941
      %v3133 = vadd.f32 %v3132, %v2942
      %v3134 = vadd.f32 %v3133, %v2943
      %v3135 = vadd.f32 %v3134, %v2944
      %v3136 = vadd.f32 %v3135, %v2945
      %v3137 = vadd.f32 %v3136, %v2946
      %v3138 = vadd.f32 %v3137, %v2947
      %v3139 = vadd.f32 %v3138, %v2948
      %v3140 = vadd.f32 %v3139, %v2949
      %v3141 = vadd.f32 %v3140, %v2950
      %v3142 = vadd.f32 %v3141, %v2951
      %v3143 = vadd.f32 %v3142, %v2952
      %v3144 = vadd.f32 %v3143, %v2953
      %v3145 = vadd.f32 %v3144, %v2954
      %v3146 = vadd.f32 %v3145, %v2955
      %v3147 = vadd.f32 %v3146, %v2956
      %v3148 = vadd.f32 %v3147, %v2957
      %v3149 = vadd.f32 %v3148, %v2958
      %v3150 = vadd.f32 %v3149, %v2959
      %v3151 = vadd.f32 %v3150, %v2960
      %v3152 = vadd.f32 %v3151, %v2961
      %v3153 = vadd.f32 %v3152, %v2962
      %v3154 = vrot.slane %v3153, 4
      %v3155 = vadd.f32 %v3153, %v3154
      %v3156 = vrot.slane %v3155, 2
      %v3157 = vadd.f32 %v3155, %v3156
      %v3158 = vrot.slane %v3157, 1
      %v3159 = vadd.f32 %v3157, %v3158
      %v3160 = vmul.f32 %v2931, %v2931
      %v3161 = vmul.f32 %v2932, %v2932
      %v3162 = vmul.f32 %v2933, %v2933
      %v3163 = vmul.f32 %v2934, %v2934
      %v3164 = vmul.f32 %v2935, %v2935
      %v3165 = vmul.f32 %v2936, %v2936
      %v3166 = vmul.f32 %v2937, %v2937
      %v3167 = vmul.f32 %v2938, %v2938
      %v3168 = vmul.f32 %v2939, %v2939
      %v3169 = vmul.f32 %v2940, %v2940
      %v3170 = vmul.f32 %v2941, %v2941
      %v3171 = vmul.f32 %v2942, %v2942
      %v3172 = vmul.f32 %v2943, %v2943
      %v3173 = vmul.f32 %v2944, %v2944
      %v3174 = vmul.f32 %v2945, %v2945
      %v3175 = vmul.f32 %v2946, %v2946
      %v3176 = vmul.f32 %v2947, %v2947
      %v3177 = vmul.f32 %v2948, %v2948
      %v3178 = vmul.f32 %v2949, %v2949
      %v3179 = vmul.f32 %v2950, %v2950
      %v3180 = vmul.f32 %v2951, %v2951
      %v3181 = vmul.f32 %v2952, %v2952
      %v3182 = vmul.f32 %v2953, %v2953
      %v3183 = vmul.f32 %v2954, %v2954
      %v3184 = vmul.f32 %v2955, %v2955
      %v3185 = vmul.f32 %v2956, %v2956
      %v3186 = vmul.f32 %v2957, %v2957
      %v3187 = vmul.f32 %v2958, %v2958
      %v3188 = vmul.f32 %v2959, %v2959
      %v3189 = vmul.f32 %v2960, %v2960
      %v3190 = vmul.f32 %v2961, %v2961
      %v3191 = vmul.f32 %v2962, %v2962
      %v3192 = vadd.f32 %v3160, %v3161
      %v3193 = vadd.f32 %v3192, %v3162
      %v3194 = vadd.f32 %v3193, %v3163
      %v3195 = vadd.f32 %v3194, %v3164
      %v3196 = vadd.f32 %v3195, %v3165
      %v3197 = vadd.f32 %v3196, %v3166
      %v3198 = vadd.f32 %v3197, %v3167
      %v3199 = vadd.f32 %v3198, %v3168
      %v3200 = vadd.f32 %v3199, %v3169
      %v3201 = vadd.f32 %v3200, %v3170
      %v3202 = vadd.f32 %v3201, %v3171
      %v3203 = vadd.f32 %v3202, %v3172
      %v3204 = vadd.f32 %v3203, %v3173
      %v3205 = vadd.f32 %v3204, %v3174
      %v3206 = vadd.f32 %v3205, %v3175
      %v3207 = vadd.f32 %v3206, %v3176
      %v3208 = vadd.f32 %v3207, %v3177
      %v3209 = vadd.f32 %v3208, %v3178
      %v3210 = vadd.f32 %v3209, %v3179
      %v3211 = vadd.f32 %v3210, %v3180
      %v3212 = vadd.f32 %v3211, %v3181
      %v3213 = vadd.f32 %v3212, %v3182
      %v3214 = vadd.f32 %v3213, %v3183
      %v3215 = vadd.f32 %v3214, %v3184
      %v3216 = vadd.f32 %v3215, %v3185
      %v3217 = vadd.f32 %v3216, %v3186
      %v3218 = vadd.f32 %v3217, %v3187
      %v3219 = vadd.f32 %v3218, %v3188
      %v3220 = vadd.f32 %v3219, %v3189
      %v3221 = vadd.f32 %v3220, %v3190
      %v3222 = vadd.f32 %v3221, %v3191
      %v3223 = vrot.slane %v3222, 4
      %v3224 = vadd.f32 %v3222, %v3223
      %v3225 = vrot.slane %v3224, 2
      %v3226 = vadd.f32 %v3224, %v3225
      %v3227 = vrot.slane %v3226, 1
      %v3228 = vadd.f32 %v3226, %v3227
      %vm3229 = vcmask 1040384
      %v3230 = vsel %vm3229, %v3159, %v3228
      %3231 = vst [vmem:[%s211] sm:$0x3] %v3230
      %s3232 = smul.u32 32, %s16
      %p3233 = scmp.lt.s32.totalorder %s3232, 63
      %s3234 = scalar_select %p3233, %s3232, 63
      %s3235 = smul.addr %s3234, 4
      %s3236 = scalar_lea.vmem %s3, %s3235
      %p3237 = scmp.lt.s32.totalorder %s16, 1
      %s3238 = scalar_select %p3237, %s16, 1
      %s3239 = smul.addr %s3238, 2
      %s3240 = scalar_lea.vmem %s4, %s3239
      // Predicated region
      $region33: #{bottleneck_forward.5} parent=31 // pred_check
        %p3241 = pneg %p102
      $region34: #{bottleneck_forward.5} parent=31 // pred_check_branch
        %3243 = sbr.rel (%p3241) target = $region36
      $region35: #{bottleneck_forward.5} parent=31 // pred_region
        %s3244 = smul.u32 32, %s16
      $region36: #{bottleneck_forward.5} parent=31 // pred_fallthru
        _
      // Predicated region
      $region37: #{bottleneck_forward.5} parent=31 // pred_check
        %p3245 = pneg %p128
      $region38: #{bottleneck_forward.5} parent=31 // pred_check_branch
        %3247 = sbr.rel (%p3245) target = $region40
      $region39: #{bottleneck_forward.5} parent=31 // pred_region
        _
      $region40: #{bottleneck_forward.5} parent=31 // pred_fallthru
        _
    $region32: #{bottleneck_forward.5} parent=5 // pred_fallthru
      _
    %p3248 = scmp.le.s32.totalorder 2, %s11
    // Predicated region
    $region41: #{bottleneck_forward.5} parent=5 // pred_check
      %p3249 = pneg %p3248
    $region42: #{bottleneck_forward.5} parent=5 // pred_check_branch
      %3251 = sbr.rel (%p3249) target = $region44
    $region43: #{bottleneck_forward.5} parent=5 // pred_region
      %s3252 = ssub.s32 %s11, 2
      // Predicated region
      $region45: #{bottleneck_forward.5} parent=43 // pred_check
        %p3253 = pneg %p108
      $region46: #{bottleneck_forward.5} parent=43 // pred_check_branch
        %3255 = sbr.rel (%p3253) target = $region48
      $region47: #{bottleneck_forward.5} parent=43 // pred_region
        %s3256 = smul.u32 32, %s17
        %p3257 = scmp.lt.s32.totalorder %s3256, 63
        %s3258 = scalar_select %p3257, %s3256, 63
        %s3259 = smul.addr %s3258, 4
        %s3260 = scalar_lea.vmem %s3, %s3259
      $region48: #{bottleneck_forward.5} parent=43 // pred_fallthru
        _
      // Predicated region
      $region49: #{bottleneck_forward.5} parent=43 // pred_check
        %p3261 = pneg %p134
      $region50: #{bottleneck_forward.5} parent=43 // pred_check_branch
        %3263 = sbr.rel (%p3261) target = $region52
      $region51: #{bottleneck_forward.5} parent=43 // pred_region
        %p3264 = scmp.lt.s32.totalorder %s17, 1
        %s3265 = scalar_select %p3264, %s17, 1
        %s3266 = smul.addr %s3265, 2
        %s3267 = scalar_lea.vmem %s4, %s3266
      $region52: #{bottleneck_forward.5} parent=43 // pred_fallthru
        _
    $region44: #{bottleneck_forward.5} parent=5 // pred_fallthru
      _
  $region6: #{bottleneck_forward.5} parent=0 // loop_footer
    %s15 = sadd.s32 1, %s11
  $region7: #{bottleneck_forward.5} parent=0 // loop_footer_branch
    %10 = sbr.rel target = $region3
  $region8: #{bottleneck_forward.5} parent=0 // loop_exit
    _

</llo_original>
